<compile_context>
chip_gen: v7x
topology: tpu7x:2x2x1
jax: 0.10.0
libtpu: 0.0.40
codegen_flags: <defaults>
</compile_context>

<pallas_src>
import functools
import math

import jax
import jax.numpy as jnp
from jax.experimental import pallas as pl
from jax.experimental.pallas import tpu as pltpu


def _layernorm(x, w, b, eps=1e-5):
    mu = jnp.mean(x, axis=-1, keepdims=True)
    var = jnp.mean(jnp.square(x - mu), axis=-1, keepdims=True)
    return (x - mu) * jax.lax.rsqrt(var + eps) * w + b


def _gelu_exact(x):
    # nn.GELU() default = exact erf-based GELU
    return 0.5 * x * (1.0 + jax.lax.erf(x * (1.0 / math.sqrt(2.0))))


def gpt2_block_kernel(
    xq_ref, xkv_ref,
    wq_ref, bq_ref, wkv_ref, bkv_ref, wo_ref, bo_ref,
    ln1w_ref, ln1b_ref, ln2w_ref, ln2b_ref,
    w1_ref, b1_ref, w2_ref, b2_ref,
    o_ref,
    k_scr, v_scr,
    *, num_heads, kv_chunk, f_chunk,
):
    f32 = jnp.float32
    bf16 = jnp.bfloat16

    H = num_heads
    _, S, hd = k_scr.shape
    xq = xq_ref[0]                                   # (TQ, E) f32: query rows of this tile
    TQ, E = xq.shape

    ln1w = ln1w_ref[...]
    ln1b = ln1b_ref[...]

    # --- K/V cache: LN1 + K/V projection over the full sequence, once per batch row ----------
    @pl.when(pl.program_id(1) == 0)
    def _():
        xkv = xkv_ref[0]                                                        # (S, E)
        hkv = _layernorm(xkv, ln1w, ln1b).astype(bf16)
        kv = jnp.dot(hkv, wkv_ref[...], preferred_element_type=f32) + bkv_ref[...]   # (S, 2E)
        k = jnp.transpose(kv[:, :E].reshape(S, H, hd), (1, 0, 2))               # (H, S, hd)
        v = jnp.transpose(kv[:, E:].reshape(S, H, hd), (1, 0, 2))               # (H, S, hd)
        k_scr[...] = k.astype(bf16)
        v_scr[...] = v.astype(bf16)

    # --- per-tile: LayerNorm1 + Q projection (1/sqrt(hd) folded into wq/bq by the wrapper) ----
    hq = _layernorm(xq, ln1w, ln1b)                                              # (TQ, E) f32
    q = jnp.dot(hq.astype(bf16), wq_ref[...], preferred_element_type=f32) + bq_ref[...]
    qh = jnp.transpose(q.reshape(TQ, H, hd), (1, 0, 2)).astype(bf16)             # (H, TQ, hd)

    # --- flash-style attention over KV chunks read from the VMEM cache ------------------------
    n_kc = S // kv_chunk
    if n_kc == 1:
        s = jnp.einsum("htd,hsd->hts", qh, k_scr[...], preferred_element_type=f32)
        s = s - jnp.max(s, axis=-1, keepdims=True)
        p = jnp.exp(s)
        l = jnp.sum(p, axis=-1, keepdims=True)                                   # (H, TQ, 1)
        acc = jnp.einsum("hts,hsd->htd", p.astype(bf16), v_scr[...],
                         preferred_element_type=f32)                             # (H, TQ, hd)
    else:
        def kv_step(c, carry):
            m_prev, l_prev, acc_prev = carry
            start = pl.multiple_of(c * kv_chunk, kv_chunk)
            kc = k_scr[:, pl.ds(start, kv_chunk), :]                             # (H, C, hd)
            vc = v_scr[:, pl.ds(start, kv_chunk), :]
            s = jnp.einsum("htd,hsd->hts", qh, kc, preferred_element_type=f32)   # (H, TQ, C)
            m_new = jnp.maximum(m_prev, jnp.max(s, axis=-1, keepdims=True))
            alpha = jnp.exp(m_prev - m_new)
            p = jnp.exp(s - m_new)
            l_new = alpha * l_prev + jnp.sum(p, axis=-1, keepdims=True)
            acc_new = alpha * acc_prev + jnp.einsum(
                "hts,hsd->htd", p.astype(bf16), vc, preferred_element_type=f32)
            return m_new, l_new, acc_new

        init = (jnp.full((H, TQ, 1), -jnp.inf, f32),
                jnp.zeros((H, TQ, 1), f32),
                jnp.zeros((H, TQ, hd), f32))
        _, l, acc = jax.lax.fori_loop(0, n_kc, kv_step, init, unroll=(n_kc <= 8))

    o = acc * pl.reciprocal(l, approx=True)                                      # normalize after p@v
    o_c = jnp.transpose(o, (1, 0, 2)).reshape(TQ, E).astype(bf16)                # concat heads
    attn = jnp.dot(o_c, wo_ref[...], preferred_element_type=f32) + bo_ref[...]

    # --- residual 1 (on the LayerNorm'd input, per the reference forward) + LayerNorm 2 -------
    y = hq + attn
    m = _layernorm(y, ln2w_ref[...], ln2b_ref[...]).astype(bf16)

    # --- MLP: Linear -> exact GELU -> Linear, accumulated over F-chunks -----------------------
    F = w1_ref.shape[1]
    ff = jnp.zeros((TQ, E), f32)
    for c in range(F // f_chunk):
        lo = c * f_chunk
        hi = lo + f_chunk
        h1 = jnp.dot(m, w1_ref[:, lo:hi], preferred_element_type=f32) + b1_ref[:, lo:hi]
        h1 = _gelu_exact(h1)
        ff = ff + jnp.dot(h1.astype(bf16), w2_ref[lo:hi, :], preferred_element_type=f32)
    ff = ff + b2_ref[...]

    # --- residual 2 ----------------------------------------------------------------------------
    o_ref[0] = (y + ff).astype(o_ref.dtype)


def gpt2_block(x, params, num_heads, single_buffer_weights=True):
    """x: (B, S, E) float32. Returns (B, S, E) float32 (GPT2Block forward, eval mode)."""
    B, S, E = x.shape
    F = params["ff1_w"].shape[0]
    H = num_heads
    hd = E // H
    scale = 1.0 / math.sqrt(hd)
    f32 = jnp.float32
    bf16 = jnp.bfloat16

    # --- weight prep: (in, out) layout, bf16 matmul operands, f32 biases ----------------------
    wq = (params["in_proj_w"][:E] * scale).T.astype(bf16)            # (E, E), q-scale folded
    bq = (params["in_proj_b"][:E] * scale).reshape(1, E).astype(f32)
    wkv = params["in_proj_w"][E:].T.astype(bf16)                     # (E, 2E)
    bkv = params["in_proj_b"][E:].reshape(1, 2 * E).astype(f32)
    wo = params["out_proj_w"].T.astype(bf16)                         # (E, E)
    bo = params["out_proj_b"].reshape(1, E).astype(f32)
    ln1w = params["ln1_w"].reshape(1, E).astype(f32)
    ln1b = params["ln1_b"].reshape(1, E).astype(f32)
    ln2w = params["ln2_w"].reshape(1, E).astype(f32)
    ln2b = params["ln2_b"].reshape(1, E).astype(f32)
    w1 = params["ff1_w"].T.astype(bf16)                              # (E, F)
    b1 = params["ff1_b"].reshape(1, F).astype(f32)
    w2 = params["ff2_w"].T.astype(bf16)                              # (F, E)
    b2 = params["ff2_b"].reshape(1, E).astype(f32)
    weights = [wq, bq, wkv, bkv, wo, bo, ln1w, ln1b, ln2w, ln2b, w1, b1, w2, b2]

    # --- tiling choices ------------------------------------------------------------------------
    kv_chunk = S if S <= 512 else next((c for c in (512, 256, 128) if S % c == 0), S)
    f_chunk = F if F <= 1024 else next((c for c in (1024, 512, 256) if F % c == 0), F)

    try:
        phys_vmem = int(pltpu.get_tpu_info().vmem_capacity_bytes)
    except Exception:
        phys_vmem = 64 << 20              # v7x per-core VMEM (smallest generation)
    vmem_cap = phys_vmem - (8 << 20)      # headroom for Mosaic internal scratch

    def nbytes(a):
        return int(a.size) * int(jnp.dtype(a.dtype).itemsize)

    weight_bytes = sum(nbytes(a) for a in weights)
    if not single_buffer_weights:
        weight_bytes *= 2
    kv_cache_bytes = 2 * H * S * hd * 2                              # bf16 K/V scratch
    resident = weight_bytes + kv_cache_bytes + 5 * S * E * 4         # + xkv buffers / LN+proj temps

    def tile_act_bytes(t):
        # f32 per-tile temporaries: LN/proj/residual rows, flash chunk, MLP chunk
        return 4 * (8 * t * E + 3 * H * t * kv_chunk + H * t * hd + 2 * t * f_chunk)

    # Query tile: prefer >= 256 rows for MXU depth, shrink if activations would not fit.
    TQ = next((t for t in (512, 256, 128)
               if S % t == 0 and t < S and resident + 2 * tile_act_bytes(t) <= vmem_cap),
              S)
    n_qt = S // TQ

    io_bytes = 2 * 2 * TQ * E * 4 + 2 * S * E * 4
    want = weight_bytes + kv_cache_bytes + io_bytes + 2 * tile_act_bytes(TQ)
    vmem_limit = int(min(vmem_cap, max(32 << 20, want)))

    def full_spec(a):
        nd = a.ndim
        kwargs = {}
        if single_buffer_weights and hasattr(pl, "Buffered"):
            # grid-invariant operands: single-buffered to halve resident weight bytes
            kwargs["pipeline_mode"] = pl.Buffered(1)
        return pl.BlockSpec(a.shape, lambda b, t, _nd=nd: (0,) * _nd, **kwargs)

    flops = 2 * B * (S * E * E              # Q projection
                     + S * 2 * E * E        # K/V projection (once per batch row now)
                     + 2 * S * S * E        # q@k.T + p@v
                     + S * E * E            # output projection
                     + 2 * S * E * F)       # MLP
    transcendentals = B * (H * S * S + S * F)
    bytes_accessed = 3 * 4 * B * S * E + weight_bytes

    kernel = functools.partial(gpt2_block_kernel, num_heads=H,
                               kv_chunk=kv_chunk, f_chunk=f_chunk)

    return pl.pallas_call(
        kernel,
        out_shape=jax.ShapeDtypeStruct((B, S, E), f32),
        grid_spec=pltpu.PrefetchScalarGridSpec(
            num_scalar_prefetch=0,
            grid=(B, n_qt),
            in_specs=[
                pl.BlockSpec((1, TQ, E), lambda b, t: (b, t, 0)),   # x: query rows of this tile
                pl.BlockSpec((1, S, E), lambda b, t: (b, 0, 0)),    # x: full sequence (used at t==0)
            ] + [full_spec(a) for a in weights],
            out_specs=pl.BlockSpec((1, TQ, E), lambda b, t: (b, t, 0)),
            scratch_shapes=[
                pltpu.VMEM((H, S, hd), bf16),   # cached K (head-major), persists across q-tiles
                pltpu.VMEM((H, S, hd), bf16),   # cached V
            ],
        ),
        compiler_params=pltpu.CompilerParams(
            # q-tile axis must be sequential: the K/V cache persists across it (per core).
            dimension_semantics=("parallel", "arbitrary"),
            vmem_limit_bytes=vmem_limit,
        ),
        cost_estimate=pl.CostEstimate(
            flops=int(flops),
            transcendentals=int(transcendentals),
            bytes_accessed=int(bytes_accessed),
        ),
    )(x, x, *weights)


def gpt2_block_ref(x, params, num_heads):
    """Pure-JAX f32 reference replicating the PyTorch GPT2Block forward (eval mode)."""
    B, S, E = x.shape
    hd = E // num_heads
    scale = 1.0 / math.sqrt(hd)

    def ln(y, w, b):
        mu = jnp.mean(y, axis=-1, keepdims=True)
        var = jnp.mean((y - mu) ** 2, axis=-1, keepdims=True)
        return (y - mu) / jnp.sqrt(var + 1e-5) * w + b

    h = ln(x, params["ln1_w"], params["ln1_b"])
    qkv = h @ params["in_proj_w"].T + params["in_proj_b"]
    q, k, v = qkv[..., :E], qkv[..., E:2 * E], qkv[..., 2 * E:]

    def heads(t):  # (B,S,E) -> (B,H,S,hd)
        return t.reshape(B, S, num_heads, hd).transpose(0, 2, 1, 3)

    qh, kh, vh = heads(q) * scale, heads(k), heads(v)
    s = jnp.einsum("bhqd,bhkd->bhqk", qh, kh)
    p = jax.nn.softmax(s, axis=-1)
    o = jnp.einsum("bhqk,bhkd->bhqd", p, vh).transpose(0, 2, 1, 3).reshape(B, S, E)
    attn = o @ params["out_proj_w"].T + params["out_proj_b"]

    y = h + attn
    m = ln(y, params["ln2_w"], params["ln2_b"])
    mlp = jax.nn.gelu(m @ params["ff1_w"].T + params["ff1_b"], approximate=False)
    mlp = mlp @ params["ff2_w"].T + params["ff2_b"]
    return y + mlp


if __name__ == "__main__":
    B, S, E = 2, 8, 32
    num_heads = 4
    forward_expansion = 4
    F = forward_expansion * E

    ks = jax.random.split(jax.random.PRNGKey(0), 11)

    params = {
        "in_proj_w": 0.05 * jax.random.normal(ks[0], (3 * E, E), jnp.float32),
        "in_proj_b": 0.01 * jax.random.normal(ks[1], (3 * E,), jnp.float32),
        "out_proj_w": 0.05 * jax.random.normal(ks[2], (E, E), jnp.float32),
        "out_proj_b": 0.01 * jax.random.normal(ks[3], (E,), jnp.float32),
        "ln1_w": 1.0 + 0.1 * jax.random.normal(ks[4], (E,), jnp.float32),
        "ln1_b": 0.1 * jax.random.normal(ks[5], (E,), jnp.float32),
        "ln2_w": 1.0 + 0.1 * jax.random.normal(ks[6], (E,), jnp.float32),
        "ln2_b": 0.1 * jax.random.normal(ks[7], (E,), jnp.float32),
        "ff1_w": 0.05 * jax.random.normal(ks[8], (F, E), jnp.float32),
        "ff1_b": 0.01 * jax.random.normal(ks[9], (F,), jnp.float32),
        "ff2_w": 0.05 * jax.random.normal(ks[0], (E, F), jnp.float32),
        "ff2_b": 0.01 * jax.random.normal(ks[1], (E,), jnp.float32),
    }

    x = jax.random.normal(ks[10], (B, S, E), jnp.float32)

    try:
        fn = jax.jit(lambda a: gpt2_block(a, params, num_heads))
        out = jax.block_until_ready(fn(x))
    except Exception:
        # Fallback for JAX versions without pl.Buffered(1) single-buffering support.
        fn = jax.jit(lambda a: gpt2_block(a, params, num_heads, single_buffer_weights=False))
        out = jax.block_until_ready(fn(x))

    ref = gpt2_block_ref(x, params, num_heads)
    assert out.shape == (B, S, E)
    err = float(jnp.max(jnp.abs(out - ref)))
    # bf16 matmul operands with f32 accumulation -> a few e-3 absolute error expected.
    assert err < 2e-2, f"max abs err {err}"

    print("KERNEL_OK")
</pallas_src>

<mosaic_0001>
module attributes {stable_mosaic.version = 11 : i64} {
  func.func @gpt2_block_kernel(%arg0: i32, %arg1: i32, %arg2: memref<1x8x32xf32, #tpu.memory_space<vmem>>, %arg3: memref<1x8x32xf32, #tpu.memory_space<vmem>>, %arg4: memref<32x32xbf16, #tpu.memory_space<vmem>>, %arg5: memref<1x32xf32, #tpu.memory_space<vmem>>, %arg6: memref<32x64xbf16, #tpu.memory_space<vmem>>, %arg7: memref<1x64xf32, #tpu.memory_space<vmem>>, %arg8: memref<32x32xbf16, #tpu.memory_space<vmem>>, %arg9: memref<1x32xf32, #tpu.memory_space<vmem>>, %arg10: memref<1x32xf32, #tpu.memory_space<vmem>>, %arg11: memref<1x32xf32, #tpu.memory_space<vmem>>, %arg12: memref<1x32xf32, #tpu.memory_space<vmem>>, %arg13: memref<1x32xf32, #tpu.memory_space<vmem>>, %arg14: memref<32x128xbf16, #tpu.memory_space<vmem>>, %arg15: memref<1x128xf32, #tpu.memory_space<vmem>>, %arg16: memref<128x32xbf16, #tpu.memory_space<vmem>>, %arg17: memref<1x32xf32, #tpu.memory_space<vmem>>, %arg18: memref<1x8x32xf32, #tpu.memory_space<vmem>>, %arg19: memref<4x8x8xbf16, #tpu.memory_space<vmem>>, %arg20: memref<4x8x8xbf16, #tpu.memory_space<vmem>>) attributes {dimension_semantics = [#tpu.dimension_semantics<parallel>, #tpu.dimension_semantics<arbitrary>], iteration_bounds = array<i64: 2, 1>, scalar_prefetch = 0 : i64, scratch_operands = 2 : i64, tpu.core_type = #tpu.core_type<tc>, window_params = [{transform_indices = @transform_0, window_bounds = array<i64: 1, 8, 32>}, {transform_indices = @transform_1, window_bounds = array<i64: 1, 8, 32>}, {pipeline_mode = #tpu.pipeline_mode<synchronous>, transform_indices = @transform_2, window_bounds = array<i64: 32, 32>}, {pipeline_mode = #tpu.pipeline_mode<synchronous>, transform_indices = @transform_3, window_bounds = array<i64: 1, 32>}, {pipeline_mode = #tpu.pipeline_mode<synchronous>, transform_indices = @transform_4, window_bounds = array<i64: 32, 64>}, {pipeline_mode = #tpu.pipeline_mode<synchronous>, transform_indices = @transform_5, window_bounds = array<i64: 1, 64>}, {pipeline_mode = #tpu.pipeline_mode<synchronous>, transform_indices = @transform_6, window_bounds = array<i64: 32, 32>}, {pipeline_mode = #tpu.pipeline_mode<synchronous>, transform_indices = @transform_7, window_bounds = array<i64: 1, 32>}, {pipeline_mode = #tpu.pipeline_mode<synchronous>, transform_indices = @transform_8, window_bounds = array<i64: 1, 32>}, {pipeline_mode = #tpu.pipeline_mode<synchronous>, transform_indices = @transform_9, window_bounds = array<i64: 1, 32>}, {pipeline_mode = #tpu.pipeline_mode<synchronous>, transform_indices = @transform_10, window_bounds = array<i64: 1, 32>}, {pipeline_mode = #tpu.pipeline_mode<synchronous>, transform_indices = @transform_11, window_bounds = array<i64: 1, 32>}, {pipeline_mode = #tpu.pipeline_mode<synchronous>, transform_indices = @transform_12, window_bounds = array<i64: 32, 128>}, {pipeline_mode = #tpu.pipeline_mode<synchronous>, transform_indices = @transform_13, window_bounds = array<i64: 1, 128>}, {pipeline_mode = #tpu.pipeline_mode<synchronous>, transform_indices = @transform_14, window_bounds = array<i64: 128, 32>}, {pipeline_mode = #tpu.pipeline_mode<synchronous>, transform_indices = @transform_15, window_bounds = array<i64: 1, 32>}, {transform_indices = @transform_16, window_bounds = array<i64: 1, 8, 32>}]} {
    %c0 = arith.constant 0 : index
    %c0_0 = arith.constant 0 : index
    %c0_1 = arith.constant 0 : index
    %0 = vector.load %arg2[%c0, %c0_0, %c0_1] : memref<1x8x32xf32, #tpu.memory_space<vmem>>, vector<1x8x32xf32>
    %1 = vector.shape_cast %0 : vector<1x8x32xf32> to vector<8x32xf32>
    %c0_2 = arith.constant 0 : index
    %c0_3 = arith.constant 0 : index
    %2 = vector.load %arg10[%c0_2, %c0_3] : memref<1x32xf32, #tpu.memory_space<vmem>>, vector<1x32xf32>
    %c0_4 = arith.constant 0 : index
    %c0_5 = arith.constant 0 : index
    %3 = vector.load %arg11[%c0_4, %c0_5] : memref<1x32xf32, #tpu.memory_space<vmem>>, vector<1x32xf32>
    %c0_i32 = arith.constant 0 : i32
    %4 = arith.cmpi eq, %arg1, %c0_i32 : i32
    %5 = arith.extui %4 : i1 to i32
    %c0_i32_6 = arith.constant 0 : i32
    %6 = arith.cmpi ne, %5, %c0_i32_6 : i32
    scf.if %6 {
      %c0_57 = arith.constant 0 : index
      %c0_58 = arith.constant 0 : index
      %c0_59 = arith.constant 0 : index
      %112 = vector.load %arg3[%c0_57, %c0_58, %c0_59] : memref<1x8x32xf32, #tpu.memory_space<vmem>>, vector<1x8x32xf32>
      %113 = vector.shape_cast %112 : vector<1x8x32xf32> to vector<8x32xf32>
      %cst_60 = arith.constant dense<0.000000e+00> : vector<8xf32>
      %114 = vector.multi_reduction <add>, %113, %cst_60 [1] : vector<8x32xf32> to vector<8xf32>
      %115 = vector.shape_cast %114 : vector<8xf32> to vector<8x1xf32>
      %cst_61 = arith.constant 3.200000e+01 : f32
      %116 = vector.broadcast %cst_61 : f32 to vector<8x1xf32>
      %117 = arith.divf %115, %116 : vector<8x1xf32>
      %118 = vector.broadcast %117 : vector<8x1xf32> to vector<8x32xf32>
      %119 = arith.subf %113, %118 : vector<8x32xf32>
      %120 = arith.mulf %119, %119 : vector<8x32xf32>
      %cst_62 = arith.constant dense<0.000000e+00> : vector<8xf32>
      %121 = vector.multi_reduction <add>, %120, %cst_62 [1] : vector<8x32xf32> to vector<8xf32>
      %122 = vector.shape_cast %121 : vector<8xf32> to vector<8x1xf32>
      %cst_63 = arith.constant 3.200000e+01 : f32
      %123 = vector.broadcast %cst_63 : f32 to vector<8x1xf32>
      %124 = arith.divf %122, %123 : vector<8x1xf32>
      %125 = vector.broadcast %117 : vector<8x1xf32> to vector<8x32xf32>
      %126 = arith.subf %113, %125 : vector<8x32xf32>
      %cst_64 = arith.constant 9.99999974E-6 : f32
      %127 = vector.broadcast %cst_64 : f32 to vector<8x1xf32>
      %128 = arith.addf %124, %127 : vector<8x1xf32>
      %129 = math.rsqrt %128 : vector<8x1xf32>
      %130 = vector.broadcast %129 : vector<8x1xf32> to vector<8x32xf32>
      %131 = arith.mulf %126, %130 : vector<8x32xf32>
      %132 = vector.broadcast %2 : vector<1x32xf32> to vector<8x32xf32>
      %133 = arith.mulf %131, %132 : vector<8x32xf32>
      %134 = vector.broadcast %3 : vector<1x32xf32> to vector<8x32xf32>
      %135 = arith.addf %133, %134 : vector<8x32xf32>
      %136 = arith.truncf %135 : vector<8x32xf32> to vector<8x32xbf16>
      %c0_65 = arith.constant 0 : index
      %c0_66 = arith.constant 0 : index
      %137 = vector.load %arg6[%c0_65, %c0_66] : memref<32x64xbf16, #tpu.memory_space<vmem>>, vector<32x64xbf16>
      %cst_67 = arith.constant dense<0.000000e+00> : vector<8x64xf32>
      %138 = tpu.matmul %136, %137, %cst_67 {dimension_numbers = #tpu.dot_dimension_numbers<[1], [0], [0], [1], [0, 0, 1, 1], [], []>} : vector<8x32xbf16>, vector<32x64xbf16>, vector<8x64xf32> -> vector<8x64xf32>
      %c0_68 = arith.constant 0 : index
      %c0_69 = arith.constant 0 : index
      %139 = vector.load %arg7[%c0_68, %c0_69] : memref<1x64xf32, #tpu.memory_space<vmem>>, vector<1x64xf32>
      %140 = vector.broadcast %139 : vector<1x64xf32> to vector<8x64xf32>
      %141 = arith.addf %138, %140 : vector<8x64xf32>
      %142 = vector.extract_strided_slice %141 {offsets = [0, 0], sizes = [8, 32], strides = [1, 1]} : vector<8x64xf32> to vector<8x32xf32>
      %143 = vector.shape_cast %142 : vector<8x32xf32> to vector<8x4x8xf32>
      %144 = tpu.transpose %143, [1, 0, 2] : vector<8x4x8xf32> -> vector<4x8x8xf32>
      %145 = vector.extract_strided_slice %141 {offsets = [0, 32], sizes = [8, 32], strides = [1, 1]} : vector<8x64xf32> to vector<8x32xf32>
      %146 = vector.shape_cast %145 : vector<8x32xf32> to vector<8x4x8xf32>
      %147 = tpu.transpose %146, [1, 0, 2] : vector<8x4x8xf32> -> vector<4x8x8xf32>
      %148 = arith.truncf %144 : vector<4x8x8xf32> to vector<4x8x8xbf16>
      %c0_70 = arith.constant 0 : index
      %c0_71 = arith.constant 0 : index
      %c0_72 = arith.constant 0 : index
      %149 = vector.load %arg19[%c0_70, %c0_71, %c0_72] : memref<4x8x8xbf16, #tpu.memory_space<vmem>>, vector<4x8x8xbf16>
      tpu.vector_store %arg19[%c0_70, %c0_71, %c0_72], %148 {strides = array<i32>} : memref<4x8x8xbf16, #tpu.memory_space<vmem>>, vector<4x8x8xbf16>,
      %150 = arith.truncf %147 : vector<4x8x8xf32> to vector<4x8x8xbf16>
      %c0_73 = arith.constant 0 : index
      %c0_74 = arith.constant 0 : index
      %c0_75 = arith.constant 0 : index
      %151 = vector.load %arg20[%c0_73, %c0_74, %c0_75] : memref<4x8x8xbf16, #tpu.memory_space<vmem>>, vector<4x8x8xbf16>
      tpu.vector_store %arg20[%c0_73, %c0_74, %c0_75], %150 {strides = array<i32>} : memref<4x8x8xbf16, #tpu.memory_space<vmem>>, vector<4x8x8xbf16>,
    } else {
    }
    %cst = arith.constant dense<0.000000e+00> : vector<8xf32>
    %7 = vector.multi_reduction <add>, %1, %cst [1] : vector<8x32xf32> to vector<8xf32>
    %8 = vector.shape_cast %7 : vector<8xf32> to vector<8x1xf32>
    %cst_7 = arith.constant 3.200000e+01 : f32
    %9 = vector.broadcast %cst_7 : f32 to vector<8x1xf32>
    %10 = arith.divf %8, %9 : vector<8x1xf32>
    %11 = vector.broadcast %10 : vector<8x1xf32> to vector<8x32xf32>
    %12 = arith.subf %1, %11 : vector<8x32xf32>
    %13 = arith.mulf %12, %12 : vector<8x32xf32>
    %cst_8 = arith.constant dense<0.000000e+00> : vector<8xf32>
    %14 = vector.multi_reduction <add>, %13, %cst_8 [1] : vector<8x32xf32> to vector<8xf32>
    %15 = vector.shape_cast %14 : vector<8xf32> to vector<8x1xf32>
    %cst_9 = arith.constant 3.200000e+01 : f32
    %16 = vector.broadcast %cst_9 : f32 to vector<8x1xf32>
    %17 = arith.divf %15, %16 : vector<8x1xf32>
    %18 = vector.broadcast %10 : vector<8x1xf32> to vector<8x32xf32>
    %19 = arith.subf %1, %18 : vector<8x32xf32>
    %cst_10 = arith.constant 9.99999974E-6 : f32
    %20 = vector.broadcast %cst_10 : f32 to vector<8x1xf32>
    %21 = arith.addf %17, %20 : vector<8x1xf32>
    %22 = math.rsqrt %21 : vector<8x1xf32>
    %23 = vector.broadcast %22 : vector<8x1xf32> to vector<8x32xf32>
    %24 = arith.mulf %19, %23 : vector<8x32xf32>
    %25 = vector.broadcast %2 : vector<1x32xf32> to vector<8x32xf32>
    %26 = arith.mulf %24, %25 : vector<8x32xf32>
    %27 = vector.broadcast %3 : vector<1x32xf32> to vector<8x32xf32>
    %28 = arith.addf %26, %27 : vector<8x32xf32>
    %29 = arith.truncf %28 : vector<8x32xf32> to vector<8x32xbf16>
    %c0_11 = arith.constant 0 : index
    %c0_12 = arith.constant 0 : index
    %30 = vector.load %arg4[%c0_11, %c0_12] : memref<32x32xbf16, #tpu.memory_space<vmem>>, vector<32x32xbf16>
    %cst_13 = arith.constant dense<0.000000e+00> : vector<8x32xf32>
    %31 = tpu.matmul %29, %30, %cst_13 {dimension_numbers = #tpu.dot_dimension_numbers<[1], [0], [0], [1], [0, 0, 1, 1], [], []>} : vector<8x32xbf16>, vector<32x32xbf16>, vector<8x32xf32> -> vector<8x32xf32>
    %c0_14 = arith.constant 0 : index
    %c0_15 = arith.constant 0 : index
    %32 = vector.load %arg5[%c0_14, %c0_15] : memref<1x32xf32, #tpu.memory_space<vmem>>, vector<1x32xf32>
    %33 = vector.broadcast %32 : vector<1x32xf32> to vector<8x32xf32>
    %34 = arith.addf %31, %33 : vector<8x32xf32>
    %35 = vector.shape_cast %34 : vector<8x32xf32> to vector<8x4x8xf32>
    %36 = tpu.transpose %35, [1, 0, 2] : vector<8x4x8xf32> -> vector<4x8x8xf32>
    %37 = arith.truncf %36 : vector<4x8x8xf32> to vector<4x8x8xbf16>
    %c0_16 = arith.constant 0 : index
    %c0_17 = arith.constant 0 : index
    %c0_18 = arith.constant 0 : index
    %38 = vector.load %arg19[%c0_16, %c0_17, %c0_18] : memref<4x8x8xbf16, #tpu.memory_space<vmem>>, vector<4x8x8xbf16>
    "tpu.trace_start"() <{level = 10 : i32, message = "htd,hsd->hts"}> : () -> ()
    %cst_19 = arith.constant dense<0.000000e+00> : vector<4x8x8xf32>
    %39 = tpu.matmul %37, %38, %cst_19 {dimension_numbers = #tpu.dot_dimension_numbers<[2], [2], [1], [1], [0, 0, 0, 1, 1, 1], [0], [0]>} : vector<4x8x8xbf16>, vector<4x8x8xbf16>, vector<4x8x8xf32> -> vector<4x8x8xf32>
    "tpu.trace_stop"() : () -> ()
    %cst_20 = arith.constant dense<0xFF800000> : vector<4x8xf32>
    %40 = vector.multi_reduction <maximumf>, %39, %cst_20 [2] : vector<4x8x8xf32> to vector<4x8xf32>
    %41 = vector.shape_cast %40 : vector<4x8xf32> to vector<4x8x1xf32>
    %42 = vector.broadcast %41 : vector<4x8x1xf32> to vector<4x8x8xf32>
    %43 = arith.subf %39, %42 : vector<4x8x8xf32>
    %44 = math.exp %43 : vector<4x8x8xf32>
    %cst_21 = arith.constant dense<0.000000e+00> : vector<4x8xf32>
    %45 = vector.multi_reduction <add>, %44, %cst_21 [2] : vector<4x8x8xf32> to vector<4x8xf32>
    %46 = vector.shape_cast %45 : vector<4x8xf32> to vector<4x8x1xf32>
    %47 = arith.truncf %44 : vector<4x8x8xf32> to vector<4x8x8xbf16>
    %c0_22 = arith.constant 0 : index
    %c0_23 = arith.constant 0 : index
    %c0_24 = arith.constant 0 : index
    %48 = vector.load %arg20[%c0_22, %c0_23, %c0_24] : memref<4x8x8xbf16, #tpu.memory_space<vmem>>, vector<4x8x8xbf16>
    "tpu.trace_start"() <{level = 10 : i32, message = "hts,hsd->htd"}> : () -> ()
    %cst_25 = arith.constant dense<0.000000e+00> : vector<4x8x8xf32>
    %49 = tpu.matmul %47, %48, %cst_25 {dimension_numbers = #tpu.dot_dimension_numbers<[2], [1], [1], [2], [0, 0, 0, 1, 1, 2], [0], [0]>} : vector<4x8x8xbf16>, vector<4x8x8xbf16>, vector<4x8x8xf32> -> vector<4x8x8xf32>
    "tpu.trace_stop"() : () -> ()
    %50 = tpu.reciprocal %46 {approx = true} : vector<4x8x1xf32> -> vector<4x8x1xf32>
    %51 = vector.broadcast %50 : vector<4x8x1xf32> to vector<4x8x8xf32>
    %52 = arith.mulf %49, %51 : vector<4x8x8xf32>
    %53 = tpu.transpose %52, [1, 0, 2] : vector<4x8x8xf32> -> vector<8x4x8xf32>
    %54 = vector.shape_cast %53 : vector<8x4x8xf32> to vector<8x32xf32>
    %55 = arith.truncf %54 : vector<8x32xf32> to vector<8x32xbf16>
    %c0_26 = arith.constant 0 : index
    %c0_27 = arith.constant 0 : index
    %56 = vector.load %arg8[%c0_26, %c0_27] : memref<32x32xbf16, #tpu.memory_space<vmem>>, vector<32x32xbf16>
    %cst_28 = arith.constant dense<0.000000e+00> : vector<8x32xf32>
    %57 = tpu.matmul %55, %56, %cst_28 {dimension_numbers = #tpu.dot_dimension_numbers<[1], [0], [0], [1], [0, 0, 1, 1], [], []>} : vector<8x32xbf16>, vector<32x32xbf16>, vector<8x32xf32> -> vector<8x32xf32>
    %c0_29 = arith.constant 0 : index
    %c0_30 = arith.constant 0 : index
    %58 = vector.load %arg9[%c0_29, %c0_30] : memref<1x32xf32, #tpu.memory_space<vmem>>, vector<1x32xf32>
    %59 = vector.broadcast %58 : vector<1x32xf32> to vector<8x32xf32>
    %60 = arith.addf %57, %59 : vector<8x32xf32>
    %61 = arith.addf %28, %60 : vector<8x32xf32>
    %c0_31 = arith.constant 0 : index
    %c0_32 = arith.constant 0 : index
    %62 = vector.load %arg12[%c0_31, %c0_32] : memref<1x32xf32, #tpu.memory_space<vmem>>, vector<1x32xf32>
    %c0_33 = arith.constant 0 : index
    %c0_34 = arith.constant 0 : index
    %63 = vector.load %arg13[%c0_33, %c0_34] : memref<1x32xf32, #tpu.memory_space<vmem>>, vector<1x32xf32>
    %cst_35 = arith.constant dense<0.000000e+00> : vector<8xf32>
    %64 = vector.multi_reduction <add>, %61, %cst_35 [1] : vector<8x32xf32> to vector<8xf32>
    %65 = vector.shape_cast %64 : vector<8xf32> to vector<8x1xf32>
    %cst_36 = arith.constant 3.200000e+01 : f32
    %66 = vector.broadcast %cst_36 : f32 to vector<8x1xf32>
    %67 = arith.divf %65, %66 : vector<8x1xf32>
    %68 = vector.broadcast %67 : vector<8x1xf32> to vector<8x32xf32>
    %69 = arith.subf %61, %68 : vector<8x32xf32>
    %70 = arith.mulf %69, %69 : vector<8x32xf32>
    %cst_37 = arith.constant dense<0.000000e+00> : vector<8xf32>
    %71 = vector.multi_reduction <add>, %70, %cst_37 [1] : vector<8x32xf32> to vector<8xf32>
    %72 = vector.shape_cast %71 : vector<8xf32> to vector<8x1xf32>
    %cst_38 = arith.constant 3.200000e+01 : f32
    %73 = vector.broadcast %cst_38 : f32 to vector<8x1xf32>
    %74 = arith.divf %72, %73 : vector<8x1xf32>
    %75 = vector.broadcast %67 : vector<8x1xf32> to vector<8x32xf32>
    %76 = arith.subf %61, %75 : vector<8x32xf32>
    %cst_39 = arith.constant 9.99999974E-6 : f32
    %77 = vector.broadcast %cst_39 : f32 to vector<8x1xf32>
    %78 = arith.addf %74, %77 : vector<8x1xf32>
    %79 = math.rsqrt %78 : vector<8x1xf32>
    %80 = vector.broadcast %79 : vector<8x1xf32> to vector<8x32xf32>
    %81 = arith.mulf %76, %80 : vector<8x32xf32>
    %82 = vector.broadcast %62 : vector<1x32xf32> to vector<8x32xf32>
    %83 = arith.mulf %81, %82 : vector<8x32xf32>
    %84 = vector.broadcast %63 : vector<1x32xf32> to vector<8x32xf32>
    %85 = arith.addf %83, %84 : vector<8x32xf32>
    %86 = arith.truncf %85 : vector<8x32xf32> to vector<8x32xbf16>
    %cst_40 = arith.constant 0.000000e+00 : f32
    %87 = vector.broadcast %cst_40 : f32 to vector<8x32xf32>
    %c0_41 = arith.constant 0 : index
    %c0_42 = arith.constant 0 : index
    %88 = vector.load %arg14[%c0_41, %c0_42] : memref<32x128xbf16, #tpu.memory_space<vmem>>, vector<32x128xbf16>
    %cst_43 = arith.constant dense<0.000000e+00> : vector<8x128xf32>
    %89 = tpu.matmul %86, %88, %cst_43 {dimension_numbers = #tpu.dot_dimension_numbers<[1], [0], [0], [1], [0, 0, 1, 1], [], []>} : vector<8x32xbf16>, vector<32x128xbf16>, vector<8x128xf32> -> vector<8x128xf32>
    %c0_44 = arith.constant 0 : index
    %c0_45 = arith.constant 0 : index
    %90 = vector.load %arg15[%c0_44, %c0_45] : memref<1x128xf32, #tpu.memory_space<vmem>>, vector<1x128xf32>
    %91 = vector.broadcast %90 : vector<1x128xf32> to vector<8x128xf32>
    %92 = arith.addf %89, %91 : vector<8x128xf32>
    %cst_46 = arith.constant 5.000000e-01 : f32
    %93 = vector.broadcast %cst_46 : f32 to vector<8x128xf32>
    %94 = arith.mulf %93, %92 : vector<8x128xf32>
    %cst_47 = arith.constant 0.707106769 : f32
    %95 = vector.broadcast %cst_47 : f32 to vector<8x128xf32>
    %96 = arith.mulf %92, %95 : vector<8x128xf32>
    %97 = math.erf %96 : vector<8x128xf32>
    %cst_48 = arith.constant 1.000000e+00 : f32
    %98 = vector.broadcast %cst_48 : f32 to vector<8x128xf32>
    %99 = arith.addf %98, %97 : vector<8x128xf32>
    %100 = arith.mulf %94, %99 : vector<8x128xf32>
    %101 = arith.truncf %100 : vector<8x128xf32> to vector<8x128xbf16>
    %c0_49 = arith.constant 0 : index
    %c0_50 = arith.constant 0 : index
    %102 = vector.load %arg16[%c0_49, %c0_50] : memref<128x32xbf16, #tpu.memory_space<vmem>>, vector<128x32xbf16>
    %cst_51 = arith.constant dense<0.000000e+00> : vector<8x32xf32>
    %103 = tpu.matmul %101, %102, %cst_51 {dimension_numbers = #tpu.dot_dimension_numbers<[1], [0], [0], [1], [0, 0, 1, 1], [], []>} : vector<8x128xbf16>, vector<128x32xbf16>, vector<8x32xf32> -> vector<8x32xf32>
    %104 = arith.addf %87, %103 : vector<8x32xf32>
    %c0_52 = arith.constant 0 : index
    %c0_53 = arith.constant 0 : index
    %105 = vector.load %arg17[%c0_52, %c0_53] : memref<1x32xf32, #tpu.memory_space<vmem>>, vector<1x32xf32>
    %106 = vector.broadcast %105 : vector<1x32xf32> to vector<8x32xf32>
    %107 = arith.addf %104, %106 : vector<8x32xf32>
    %108 = arith.addf %61, %107 : vector<8x32xf32>
    %c0_54 = arith.constant 0 : index
    %c0_55 = arith.constant 0 : index
    %c0_56 = arith.constant 0 : index
    %109 = vector.load %arg18[%c0_54, %c0_55, %c0_56] : memref<1x8x32xf32, #tpu.memory_space<vmem>>, vector<1x8x32xf32>
    %110 = vector.shape_cast %109 : vector<1x8x32xf32> to vector<8x32xf32>
    %111 = vector.shape_cast %108 : vector<8x32xf32> to vector<1x8x32xf32>
    tpu.vector_store %arg18[%c0_54, %c0_55, %c0_56], %111 {strides = array<i32>} : memref<1x8x32xf32, #tpu.memory_space<vmem>>, vector<1x8x32xf32>,
    return
  }
  func.func @transform_0(%arg0: i32, %arg1: i32) -> (i32, i32, i32) {
    %c0_i32 = arith.constant 0 : i32
    %c0_i32_0 = arith.constant 0 : i32
    return %arg0, %arg1, %c0_i32 : i32, i32, i32
  }
  func.func @transform_1(%arg0: i32, %arg1: i32) -> (i32, i32, i32) {
    %c0_i32 = arith.constant 0 : i32
    %c0_i32_0 = arith.constant 0 : i32
    %c0_i32_1 = arith.constant 0 : i32
    return %arg0, %c0_i32, %c0_i32_0 : i32, i32, i32
  }
  func.func @transform_2(%arg0: i32, %arg1: i32) -> (i32, i32) {
    %c0_i32 = arith.constant 0 : i32
    %c0_i32_0 = arith.constant 0 : i32
    %c0_i32_1 = arith.constant 0 : i32
    return %c0_i32, %c0_i32_0 : i32, i32
  }
  func.func @transform_3(%arg0: i32, %arg1: i32) -> (i32, i32) {
    %c0_i32 = arith.constant 0 : i32
    %c0_i32_0 = arith.constant 0 : i32
    %c0_i32_1 = arith.constant 0 : i32
    return %c0_i32, %c0_i32_0 : i32, i32
  }
  func.func @transform_4(%arg0: i32, %arg1: i32) -> (i32, i32) {
    %c0_i32 = arith.constant 0 : i32
    %c0_i32_0 = arith.constant 0 : i32
    %c0_i32_1 = arith.constant 0 : i32
    return %c0_i32, %c0_i32_0 : i32, i32
  }
  func.func @transform_5(%arg0: i32, %arg1: i32) -> (i32, i32) {
    %c0_i32 = arith.constant 0 : i32
    %c0_i32_0 = arith.constant 0 : i32
    %c0_i32_1 = arith.constant 0 : i32
    return %c0_i32, %c0_i32_0 : i32, i32
  }
  func.func @transform_6(%arg0: i32, %arg1: i32) -> (i32, i32) {
    %c0_i32 = arith.constant 0 : i32
    %c0_i32_0 = arith.constant 0 : i32
    %c0_i32_1 = arith.constant 0 : i32
    return %c0_i32, %c0_i32_0 : i32, i32
  }
  func.func @transform_7(%arg0: i32, %arg1: i32) -> (i32, i32) {
    %c0_i32 = arith.constant 0 : i32
    %c0_i32_0 = arith.constant 0 : i32
    %c0_i32_1 = arith.constant 0 : i32
    return %c0_i32, %c0_i32_0 : i32, i32
  }
  func.func @transform_8(%arg0: i32, %arg1: i32) -> (i32, i32) {
    %c0_i32 = arith.constant 0 : i32
    %c0_i32_0 = arith.constant 0 : i32
    %c0_i32_1 = arith.constant 0 : i32
    return %c0_i32, %c0_i32_0 : i32, i32
  }
  func.func @transform_9(%arg0: i32, %arg1: i32) -> (i32, i32) {
    %c0_i32 = arith.constant 0 : i32
    %c0_i32_0 = arith.constant 0 : i32
    %c0_i32_1 = arith.constant 0 : i32
    return %c0_i32, %c0_i32_0 : i32, i32
  }
  func.func @transform_10(%arg0: i32, %arg1: i32) -> (i32, i32) {
    %c0_i32 = arith.constant 0 : i32
    %c0_i32_0 = arith.constant 0 : i32
    %c0_i32_1 = arith.constant 0 : i32
    return %c0_i32, %c0_i32_0 : i32, i32
  }
  func.func @transform_11(%arg0: i32, %arg1: i32) -> (i32, i32) {
    %c0_i32 = arith.constant 0 : i32
    %c0_i32_0 = arith.constant 0 : i32
    %c0_i32_1 = arith.constant 0 : i32
    return %c0_i32, %c0_i32_0 : i32, i32
  }
  func.func @transform_12(%arg0: i32, %arg1: i32) -> (i32, i32) {
    %c0_i32 = arith.constant 0 : i32
    %c0_i32_0 = arith.constant 0 : i32
    %c0_i32_1 = arith.constant 0 : i32
    return %c0_i32, %c0_i32_0 : i32, i32
  }
  func.func @transform_13(%arg0: i32, %arg1: i32) -> (i32, i32) {
    %c0_i32 = arith.constant 0 : i32
    %c0_i32_0 = arith.constant 0 : i32
    %c0_i32_1 = arith.constant 0 : i32
    return %c0_i32, %c0_i32_0 : i32, i32
  }
  func.func @transform_14(%arg0: i32, %arg1: i32) -> (i32, i32) {
    %c0_i32 = arith.constant 0 : i32
    %c0_i32_0 = arith.constant 0 : i32
    %c0_i32_1 = arith.constant 0 : i32
    return %c0_i32, %c0_i32_0 : i32, i32
  }
  func.func @transform_15(%arg0: i32, %arg1: i32) -> (i32, i32) {
    %c0_i32 = arith.constant 0 : i32
    %c0_i32_0 = arith.constant 0 : i32
    %c0_i32_1 = arith.constant 0 : i32
    return %c0_i32, %c0_i32_0 : i32, i32
  }
  func.func @transform_16(%arg0: i32, %arg1: i32) -> (i32, i32, i32) {
    %c0_i32 = arith.constant 0 : i32
    %c0_i32_0 = arith.constant 0 : i32
    return %arg0, %arg1, %c0_i32 : i32, i32, i32
  }
}

module attributes {stable_mosaic.version = 11 : i64} {
  func.func @gpt2_block_kernel(%arg0: i32, %arg1: i32, %arg2: memref<1x8x32xf32, #tpu.memory_space<vmem>>, %arg3: memref<1x8x32xf32, #tpu.memory_space<vmem>>, %arg4: memref<32x32xbf16, #tpu.memory_space<vmem>>, %arg5: memref<1x32xf32, #tpu.memory_space<vmem>>, %arg6: memref<32x64xbf16, #tpu.memory_space<vmem>>, %arg7: memref<1x64xf32, #tpu.memory_space<vmem>>, %arg8: memref<32x32xbf16, #tpu.memory_space<vmem>>, %arg9: memref<1x32xf32, #tpu.memory_space<vmem>>, %arg10: memref<1x32xf32, #tpu.memory_space<vmem>>, %arg11: memref<1x32xf32, #tpu.memory_space<vmem>>, %arg12: memref<1x32xf32, #tpu.memory_space<vmem>>, %arg13: memref<1x32xf32, #tpu.memory_space<vmem>>, %arg14: memref<32x128xbf16, #tpu.memory_space<vmem>>, %arg15: memref<1x128xf32, #tpu.memory_space<vmem>>, %arg16: memref<128x32xbf16, #tpu.memory_space<vmem>>, %arg17: memref<1x32xf32, #tpu.memory_space<vmem>>, %arg18: memref<1x8x32xf32, #tpu.memory_space<vmem>>, %arg19: memref<4x8x8xbf16, #tpu.memory_space<vmem>>, %arg20: memref<4x8x8xbf16, #tpu.memory_space<vmem>>) attributes {dimension_semantics = [#tpu.dimension_semantics<parallel>, #tpu.dimension_semantics<arbitrary>], iteration_bounds = array<i64: 2, 1>, scalar_prefetch = 0 : i64, scratch_operands = 2 : i64, tpu.core_type = #tpu.core_type<tc>, window_params = [{transform_indices = @transform_0, window_bounds = array<i64: 1, 8, 32>}, {transform_indices = @transform_1, window_bounds = array<i64: 1, 8, 32>}, {pipeline_mode = #tpu.pipeline_mode<synchronous>, transform_indices = @transform_2, window_bounds = array<i64: 32, 32>}, {pipeline_mode = #tpu.pipeline_mode<synchronous>, transform_indices = @transform_3, window_bounds = array<i64: 1, 32>}, {pipeline_mode = #tpu.pipeline_mode<synchronous>, transform_indices = @transform_4, window_bounds = array<i64: 32, 64>}, {pipeline_mode = #tpu.pipeline_mode<synchronous>, transform_indices = @transform_5, window_bounds = array<i64: 1, 64>}, {pipeline_mode = #tpu.pipeline_mode<synchronous>, transform_indices = @transform_6, window_bounds = array<i64: 32, 32>}, {pipeline_mode = #tpu.pipeline_mode<synchronous>, transform_indices = @transform_7, window_bounds = array<i64: 1, 32>}, {pipeline_mode = #tpu.pipeline_mode<synchronous>, transform_indices = @transform_8, window_bounds = array<i64: 1, 32>}, {pipeline_mode = #tpu.pipeline_mode<synchronous>, transform_indices = @transform_9, window_bounds = array<i64: 1, 32>}, {pipeline_mode = #tpu.pipeline_mode<synchronous>, transform_indices = @transform_10, window_bounds = array<i64: 1, 32>}, {pipeline_mode = #tpu.pipeline_mode<synchronous>, transform_indices = @transform_11, window_bounds = array<i64: 1, 32>}, {pipeline_mode = #tpu.pipeline_mode<synchronous>, transform_indices = @transform_12, window_bounds = array<i64: 32, 128>}, {pipeline_mode = #tpu.pipeline_mode<synchronous>, transform_indices = @transform_13, window_bounds = array<i64: 1, 128>}, {pipeline_mode = #tpu.pipeline_mode<synchronous>, transform_indices = @transform_14, window_bounds = array<i64: 128, 32>}, {pipeline_mode = #tpu.pipeline_mode<synchronous>, transform_indices = @transform_15, window_bounds = array<i64: 1, 32>}, {transform_indices = @transform_16, window_bounds = array<i64: 1, 8, 32>}]} {
    %c0 = arith.constant 0 : index
    %c0_0 = arith.constant 0 : index
    %c0_1 = arith.constant 0 : index
    %0 = vector.load %arg2[%c0, %c0_0, %c0_1] : memref<1x8x32xf32, #tpu.memory_space<vmem>>, vector<1x8x32xf32>
    %1 = vector.shape_cast %0 : vector<1x8x32xf32> to vector<8x32xf32>
    %c0_2 = arith.constant 0 : index
    %c0_3 = arith.constant 0 : index
    %2 = vector.load %arg10[%c0_2, %c0_3] : memref<1x32xf32, #tpu.memory_space<vmem>>, vector<1x32xf32>
    %c0_4 = arith.constant 0 : index
    %c0_5 = arith.constant 0 : index
    %3 = vector.load %arg11[%c0_4, %c0_5] : memref<1x32xf32, #tpu.memory_space<vmem>>, vector<1x32xf32>
    %c0_i32 = arith.constant 0 : i32
    %4 = arith.cmpi eq, %arg1, %c0_i32 : i32
    %5 = arith.extui %4 : i1 to i32
    %c0_i32_6 = arith.constant 0 : i32
    %6 = arith.cmpi ne, %5, %c0_i32_6 : i32
    scf.if %6 {
      %c0_57 = arith.constant 0 : index
      %c0_58 = arith.constant 0 : index
      %c0_59 = arith.constant 0 : index
      %112 = vector.load %arg3[%c0_57, %c0_58, %c0_59] : memref<1x8x32xf32, #tpu.memory_space<vmem>>, vector<1x8x32xf32>
      %113 = vector.shape_cast %112 : vector<1x8x32xf32> to vector<8x32xf32>
      %cst_60 = arith.constant dense<0.000000e+00> : vector<8xf32>
      %114 = vector.multi_reduction <add>, %113, %cst_60 [1] : vector<8x32xf32> to vector<8xf32>
      %115 = vector.shape_cast %114 : vector<8xf32> to vector<8x1xf32>
      %cst_61 = arith.constant 3.200000e+01 : f32
      %116 = vector.broadcast %cst_61 : f32 to vector<8x1xf32>
      %117 = arith.divf %115, %116 : vector<8x1xf32>
      %118 = vector.broadcast %117 : vector<8x1xf32> to vector<8x32xf32>
      %119 = arith.subf %113, %118 : vector<8x32xf32>
      %120 = arith.mulf %119, %119 : vector<8x32xf32>
      %cst_62 = arith.constant dense<0.000000e+00> : vector<8xf32>
      %121 = vector.multi_reduction <add>, %120, %cst_62 [1] : vector<8x32xf32> to vector<8xf32>
      %122 = vector.shape_cast %121 : vector<8xf32> to vector<8x1xf32>
      %cst_63 = arith.constant 3.200000e+01 : f32
      %123 = vector.broadcast %cst_63 : f32 to vector<8x1xf32>
      %124 = arith.divf %122, %123 : vector<8x1xf32>
      %125 = vector.broadcast %117 : vector<8x1xf32> to vector<8x32xf32>
      %126 = arith.subf %113, %125 : vector<8x32xf32>
      %cst_64 = arith.constant 9.99999974E-6 : f32
      %127 = vector.broadcast %cst_64 : f32 to vector<8x1xf32>
      %128 = arith.addf %124, %127 : vector<8x1xf32>
      %129 = math.rsqrt %128 : vector<8x1xf32>
      %130 = vector.broadcast %129 : vector<8x1xf32> to vector<8x32xf32>
      %131 = arith.mulf %126, %130 : vector<8x32xf32>
      %132 = vector.broadcast %2 : vector<1x32xf32> to vector<8x32xf32>
      %133 = arith.mulf %131, %132 : vector<8x32xf32>
      %134 = vector.broadcast %3 : vector<1x32xf32> to vector<8x32xf32>
      %135 = arith.addf %133, %134 : vector<8x32xf32>
      %136 = arith.truncf %135 : vector<8x32xf32> to vector<8x32xbf16>
      %c0_65 = arith.constant 0 : index
      %c0_66 = arith.constant 0 : index
      %137 = vector.load %arg6[%c0_65, %c0_66] : memref<32x64xbf16, #tpu.memory_space<vmem>>, vector<32x64xbf16>
      %cst_67 = arith.constant dense<0.000000e+00> : vector<8x64xf32>
      %138 = tpu.matmul %136, %137, %cst_67 {dimension_numbers = #tpu.dot_dimension_numbers<[1], [0], [0], [1], [0, 0, 1, 1], [], []>} : vector<8x32xbf16>, vector<32x64xbf16>, vector<8x64xf32> -> vector<8x64xf32>
      %c0_68 = arith.constant 0 : index
      %c0_69 = arith.constant 0 : index
      %139 = vector.load %arg7[%c0_68, %c0_69] : memref<1x64xf32, #tpu.memory_space<vmem>>, vector<1x64xf32>
      %140 = vector.broadcast %139 : vector<1x64xf32> to vector<8x64xf32>
      %141 = arith.addf %138, %140 : vector<8x64xf32>
      %142 = vector.extract_strided_slice %141 {offsets = [0, 0], sizes = [8, 32], strides = [1, 1]} : vector<8x64xf32> to vector<8x32xf32>
      %143 = vector.shape_cast %142 : vector<8x32xf32> to vector<8x4x8xf32>
      %144 = tpu.transpose %143, [1, 0, 2] : vector<8x4x8xf32> -> vector<4x8x8xf32>
      %145 = vector.extract_strided_slice %141 {offsets = [0, 32], sizes = [8, 32], strides = [1, 1]} : vector<8x64xf32> to vector<8x32xf32>
      %146 = vector.shape_cast %145 : vector<8x32xf32> to vector<8x4x8xf32>
      %147 = tpu.transpose %146, [1, 0, 2] : vector<8x4x8xf32> -> vector<4x8x8xf32>
      %148 = arith.truncf %144 : vector<4x8x8xf32> to vector<4x8x8xbf16>
      %c0_70 = arith.constant 0 : index
      %c0_71 = arith.constant 0 : index
      %c0_72 = arith.constant 0 : index
      %149 = vector.load %arg19[%c0_70, %c0_71, %c0_72] : memref<4x8x8xbf16, #tpu.memory_space<vmem>>, vector<4x8x8xbf16>
      tpu.vector_store %arg19[%c0_70, %c0_71, %c0_72], %148 {strides = array<i32>} : memref<4x8x8xbf16, #tpu.memory_space<vmem>>, vector<4x8x8xbf16>,
      %150 = arith.truncf %147 : vector<4x8x8xf32> to vector<4x8x8xbf16>
      %c0_73 = arith.constant 0 : index
      %c0_74 = arith.constant 0 : index
      %c0_75 = arith.constant 0 : index
      %151 = vector.load %arg20[%c0_73, %c0_74, %c0_75] : memref<4x8x8xbf16, #tpu.memory_space<vmem>>, vector<4x8x8xbf16>
      tpu.vector_store %arg20[%c0_73, %c0_74, %c0_75], %150 {strides = array<i32>} : memref<4x8x8xbf16, #tpu.memory_space<vmem>>, vector<4x8x8xbf16>,
    } else {
    }
    %cst = arith.constant dense<0.000000e+00> : vector<8xf32>
    %7 = vector.multi_reduction <add>, %1, %cst [1] : vector<8x32xf32> to vector<8xf32>
    %8 = vector.shape_cast %7 : vector<8xf32> to vector<8x1xf32>
    %cst_7 = arith.constant 3.200000e+01 : f32
    %9 = vector.broadcast %cst_7 : f32 to vector<8x1xf32>
    %10 = arith.divf %8, %9 : vector<8x1xf32>
    %11 = vector.broadcast %10 : vector<8x1xf32> to vector<8x32xf32>
    %12 = arith.subf %1, %11 : vector<8x32xf32>
    %13 = arith.mulf %12, %12 : vector<8x32xf32>
    %cst_8 = arith.constant dense<0.000000e+00> : vector<8xf32>
    %14 = vector.multi_reduction <add>, %13, %cst_8 [1] : vector<8x32xf32> to vector<8xf32>
    %15 = vector.shape_cast %14 : vector<8xf32> to vector<8x1xf32>
    %cst_9 = arith.constant 3.200000e+01 : f32
    %16 = vector.broadcast %cst_9 : f32 to vector<8x1xf32>
    %17 = arith.divf %15, %16 : vector<8x1xf32>
    %18 = vector.broadcast %10 : vector<8x1xf32> to vector<8x32xf32>
    %19 = arith.subf %1, %18 : vector<8x32xf32>
    %cst_10 = arith.constant 9.99999974E-6 : f32
    %20 = vector.broadcast %cst_10 : f32 to vector<8x1xf32>
    %21 = arith.addf %17, %20 : vector<8x1xf32>
    %22 = math.rsqrt %21 : vector<8x1xf32>
    %23 = vector.broadcast %22 : vector<8x1xf32> to vector<8x32xf32>
    %24 = arith.mulf %19, %23 : vector<8x32xf32>
    %25 = vector.broadcast %2 : vector<1x32xf32> to vector<8x32xf32>
    %26 = arith.mulf %24, %25 : vector<8x32xf32>
    %27 = vector.broadcast %3 : vector<1x32xf32> to vector<8x32xf32>
    %28 = arith.addf %26, %27 : vector<8x32xf32>
    %29 = arith.truncf %28 : vector<8x32xf32> to vector<8x32xbf16>
    %c0_11 = arith.constant 0 : index
    %c0_12 = arith.constant 0 : index
    %30 = vector.load %arg4[%c0_11, %c0_12] : memref<32x32xbf16, #tpu.memory_space<vmem>>, vector<32x32xbf16>
    %cst_13 = arith.constant dense<0.000000e+00> : vector<8x32xf32>
    %31 = tpu.matmul %29, %30, %cst_13 {dimension_numbers = #tpu.dot_dimension_numbers<[1], [0], [0], [1], [0, 0, 1, 1], [], []>} : vector<8x32xbf16>, vector<32x32xbf16>, vector<8x32xf32> -> vector<8x32xf32>
    %c0_14 = arith.constant 0 : index
    %c0_15 = arith.constant 0 : index
    %32 = vector.load %arg5[%c0_14, %c0_15] : memref<1x32xf32, #tpu.memory_space<vmem>>, vector<1x32xf32>
    %33 = vector.broadcast %32 : vector<1x32xf32> to vector<8x32xf32>
    %34 = arith.addf %31, %33 : vector<8x32xf32>
    %35 = vector.shape_cast %34 : vector<8x32xf32> to vector<8x4x8xf32>
    %36 = tpu.transpose %35, [1, 0, 2] : vector<8x4x8xf32> -> vector<4x8x8xf32>
    %37 = arith.truncf %36 : vector<4x8x8xf32> to vector<4x8x8xbf16>
    %c0_16 = arith.constant 0 : index
    %c0_17 = arith.constant 0 : index
    %c0_18 = arith.constant 0 : index
    %38 = vector.load %arg19[%c0_16, %c0_17, %c0_18] : memref<4x8x8xbf16, #tpu.memory_space<vmem>>, vector<4x8x8xbf16>
    "tpu.trace_start"() <{level = 10 : i32, message = "htd,hsd->hts"}> : () -> ()
    %cst_19 = arith.constant dense<0.000000e+00> : vector<4x8x8xf32>
    %39 = tpu.matmul %37, %38, %cst_19 {dimension_numbers = #tpu.dot_dimension_numbers<[2], [2], [1], [1], [0, 0, 0, 1, 1, 1], [0], [0]>} : vector<4x8x8xbf16>, vector<4x8x8xbf16>, vector<4x8x8xf32> -> vector<4x8x8xf32>
    "tpu.trace_stop"() : () -> ()
    %cst_20 = arith.constant dense<0xFF800000> : vector<4x8xf32>
    %40 = vector.multi_reduction <maximumf>, %39, %cst_20 [2] : vector<4x8x8xf32> to vector<4x8xf32>
    %41 = vector.shape_cast %40 : vector<4x8xf32> to vector<4x8x1xf32>
    %42 = vector.broadcast %41 : vector<4x8x1xf32> to vector<4x8x8xf32>
    %43 = arith.subf %39, %42 : vector<4x8x8xf32>
    %44 = math.exp %43 : vector<4x8x8xf32>
    %cst_21 = arith.constant dense<0.000000e+00> : vector<4x8xf32>
    %45 = vector.multi_reduction <add>, %44, %cst_21 [2] : vector<4x8x8xf32> to vector<4x8xf32>
    %46 = vector.shape_cast %45 : vector<4x8xf32> to vector<4x8x1xf32>
    %47 = arith.truncf %44 : vector<4x8x8xf32> to vector<4x8x8xbf16>
    %c0_22 = arith.constant 0 : index
    %c0_23 = arith.constant 0 : index
    %c0_24 = arith.constant 0 : index
    %48 = vector.load %arg20[%c0_22, %c0_23, %c0_24] : memref<4x8x8xbf16, #tpu.memory_space<vmem>>, vector<4x8x8xbf16>
    "tpu.trace_start"() <{level = 10 : i32, message = "hts,hsd->htd"}> : () -> ()
    %cst_25 = arith.constant dense<0.000000e+00> : vector<4x8x8xf32>
    %49 = tpu.matmul %47, %48, %cst_25 {dimension_numbers = #tpu.dot_dimension_numbers<[2], [1], [1], [2], [0, 0, 0, 1, 1, 2], [0], [0]>} : vector<4x8x8xbf16>, vector<4x8x8xbf16>, vector<4x8x8xf32> -> vector<4x8x8xf32>
    "tpu.trace_stop"() : () -> ()
    %50 = tpu.reciprocal %46 {approx = true} : vector<4x8x1xf32> -> vector<4x8x1xf32>
    %51 = vector.broadcast %50 : vector<4x8x1xf32> to vector<4x8x8xf32>
    %52 = arith.mulf %49, %51 : vector<4x8x8xf32>
    %53 = tpu.transpose %52, [1, 0, 2] : vector<4x8x8xf32> -> vector<8x4x8xf32>
    %54 = vector.shape_cast %53 : vector<8x4x8xf32> to vector<8x32xf32>
    %55 = arith.truncf %54 : vector<8x32xf32> to vector<8x32xbf16>
    %c0_26 = arith.constant 0 : index
    %c0_27 = arith.constant 0 : index
    %56 = vector.load %arg8[%c0_26, %c0_27] : memref<32x32xbf16, #tpu.memory_space<vmem>>, vector<32x32xbf16>
    %cst_28 = arith.constant dense<0.000000e+00> : vector<8x32xf32>
    %57 = tpu.matmul %55, %56, %cst_28 {dimension_numbers = #tpu.dot_dimension_numbers<[1], [0], [0], [1], [0, 0, 1, 1], [], []>} : vector<8x32xbf16>, vector<32x32xbf16>, vector<8x32xf32> -> vector<8x32xf32>
    %c0_29 = arith.constant 0 : index
    %c0_30 = arith.constant 0 : index
    %58 = vector.load %arg9[%c0_29, %c0_30] : memref<1x32xf32, #tpu.memory_space<vmem>>, vector<1x32xf32>
    %59 = vector.broadcast %58 : vector<1x32xf32> to vector<8x32xf32>
    %60 = arith.addf %57, %59 : vector<8x32xf32>
    %61 = arith.addf %28, %60 : vector<8x32xf32>
    %c0_31 = arith.constant 0 : index
    %c0_32 = arith.constant 0 : index
    %62 = vector.load %arg12[%c0_31, %c0_32] : memref<1x32xf32, #tpu.memory_space<vmem>>, vector<1x32xf32>
    %c0_33 = arith.constant 0 : index
    %c0_34 = arith.constant 0 : index
    %63 = vector.load %arg13[%c0_33, %c0_34] : memref<1x32xf32, #tpu.memory_space<vmem>>, vector<1x32xf32>
    %cst_35 = arith.constant dense<0.000000e+00> : vector<8xf32>
    %64 = vector.multi_reduction <add>, %61, %cst_35 [1] : vector<8x32xf32> to vector<8xf32>
    %65 = vector.shape_cast %64 : vector<8xf32> to vector<8x1xf32>
    %cst_36 = arith.constant 3.200000e+01 : f32
    %66 = vector.broadcast %cst_36 : f32 to vector<8x1xf32>
    %67 = arith.divf %65, %66 : vector<8x1xf32>
    %68 = vector.broadcast %67 : vector<8x1xf32> to vector<8x32xf32>
    %69 = arith.subf %61, %68 : vector<8x32xf32>
    %70 = arith.mulf %69, %69 : vector<8x32xf32>
    %cst_37 = arith.constant dense<0.000000e+00> : vector<8xf32>
    %71 = vector.multi_reduction <add>, %70, %cst_37 [1] : vector<8x32xf32> to vector<8xf32>
    %72 = vector.shape_cast %71 : vector<8xf32> to vector<8x1xf32>
    %cst_38 = arith.constant 3.200000e+01 : f32
    %73 = vector.broadcast %cst_38 : f32 to vector<8x1xf32>
    %74 = arith.divf %72, %73 : vector<8x1xf32>
    %75 = vector.broadcast %67 : vector<8x1xf32> to vector<8x32xf32>
    %76 = arith.subf %61, %75 : vector<8x32xf32>
    %cst_39 = arith.constant 9.99999974E-6 : f32
    %77 = vector.broadcast %cst_39 : f32 to vector<8x1xf32>
    %78 = arith.addf %74, %77 : vector<8x1xf32>
    %79 = math.rsqrt %78 : vector<8x1xf32>
    %80 = vector.broadcast %79 : vector<8x1xf32> to vector<8x32xf32>
    %81 = arith.mulf %76, %80 : vector<8x32xf32>
    %82 = vector.broadcast %62 : vector<1x32xf32> to vector<8x32xf32>
    %83 = arith.mulf %81, %82 : vector<8x32xf32>
    %84 = vector.broadcast %63 : vector<1x32xf32> to vector<8x32xf32>
    %85 = arith.addf %83, %84 : vector<8x32xf32>
    %86 = arith.truncf %85 : vector<8x32xf32> to vector<8x32xbf16>
    %cst_40 = arith.constant 0.000000e+00 : f32
    %87 = vector.broadcast %cst_40 : f32 to vector<8x32xf32>
    %c0_41 = arith.constant 0 : index
    %c0_42 = arith.constant 0 : index
    %88 = vector.load %arg14[%c0_41, %c0_42] : memref<32x128xbf16, #tpu.memory_space<vmem>>, vector<32x128xbf16>
    %cst_43 = arith.constant dense<0.000000e+00> : vector<8x128xf32>
    %89 = tpu.matmul %86, %88, %cst_43 {dimension_numbers = #tpu.dot_dimension_numbers<[1], [0], [0], [1], [0, 0, 1, 1], [], []>} : vector<8x32xbf16>, vector<32x128xbf16>, vector<8x128xf32> -> vector<8x128xf32>
    %c0_44 = arith.constant 0 : index
    %c0_45 = arith.constant 0 : index
    %90 = vector.load %arg15[%c0_44, %c0_45] : memref<1x128xf32, #tpu.memory_space<vmem>>, vector<1x128xf32>
    %91 = vector.broadcast %90 : vector<1x128xf32> to vector<8x128xf32>
    %92 = arith.addf %89, %91 : vector<8x128xf32>
    %cst_46 = arith.constant 5.000000e-01 : f32
    %93 = vector.broadcast %cst_46 : f32 to vector<8x128xf32>
    %94 = arith.mulf %93, %92 : vector<8x128xf32>
    %cst_47 = arith.constant 0.707106769 : f32
    %95 = vector.broadcast %cst_47 : f32 to vector<8x128xf32>
    %96 = arith.mulf %92, %95 : vector<8x128xf32>
    %97 = math.erf %96 : vector<8x128xf32>
    %cst_48 = arith.constant 1.000000e+00 : f32
    %98 = vector.broadcast %cst_48 : f32 to vector<8x128xf32>
    %99 = arith.addf %98, %97 : vector<8x128xf32>
    %100 = arith.mulf %94, %99 : vector<8x128xf32>
    %101 = arith.truncf %100 : vector<8x128xf32> to vector<8x128xbf16>
    %c0_49 = arith.constant 0 : index
    %c0_50 = arith.constant 0 : index
    %102 = vector.load %arg16[%c0_49, %c0_50] : memref<128x32xbf16, #tpu.memory_space<vmem>>, vector<128x32xbf16>
    %cst_51 = arith.constant dense<0.000000e+00> : vector<8x32xf32>
    %103 = tpu.matmul %101, %102, %cst_51 {dimension_numbers = #tpu.dot_dimension_numbers<[1], [0], [0], [1], [0, 0, 1, 1], [], []>} : vector<8x128xbf16>, vector<128x32xbf16>, vector<8x32xf32> -> vector<8x32xf32>
    %104 = arith.addf %87, %103 : vector<8x32xf32>
    %c0_52 = arith.constant 0 : index
    %c0_53 = arith.constant 0 : index
    %105 = vector.load %arg17[%c0_52, %c0_53] : memref<1x32xf32, #tpu.memory_space<vmem>>, vector<1x32xf32>
    %106 = vector.broadcast %105 : vector<1x32xf32> to vector<8x32xf32>
    %107 = arith.addf %104, %106 : vector<8x32xf32>
    %108 = arith.addf %61, %107 : vector<8x32xf32>
    %c0_54 = arith.constant 0 : index
    %c0_55 = arith.constant 0 : index
    %c0_56 = arith.constant 0 : index
    %109 = vector.load %arg18[%c0_54, %c0_55, %c0_56] : memref<1x8x32xf32, #tpu.memory_space<vmem>>, vector<1x8x32xf32>
    %110 = vector.shape_cast %109 : vector<1x8x32xf32> to vector<8x32xf32>
    %111 = vector.shape_cast %108 : vector<8x32xf32> to vector<1x8x32xf32>
    tpu.vector_store %arg18[%c0_54, %c0_55, %c0_56], %111 {strides = array<i32>} : memref<1x8x32xf32, #tpu.memory_space<vmem>>, vector<1x8x32xf32>,
    return
  }
  func.func @transform_0(%arg0: i32, %arg1: i32) -> (i32, i32, i32) {
    %c0_i32 = arith.constant 0 : i32
    %c0_i32_0 = arith.constant 0 : i32
    return %arg0, %arg1, %c0_i32 : i32, i32, i32
  }
  func.func @transform_1(%arg0: i32, %arg1: i32) -> (i32, i32, i32) {
    %c0_i32 = arith.constant 0 : i32
    %c0_i32_0 = arith.constant 0 : i32
    %c0_i32_1 = arith.constant 0 : i32
    return %arg0, %c0_i32, %c0_i32_0 : i32, i32, i32
  }
  func.func @transform_2(%arg0: i32, %arg1: i32) -> (i32, i32) {
    %c0_i32 = arith.constant 0 : i32
    %c0_i32_0 = arith.constant 0 : i32
    %c0_i32_1 = arith.constant 0 : i32
    return %c0_i32, %c0_i32_0 : i32, i32
  }
  func.func @transform_3(%arg0: i32, %arg1: i32) -> (i32, i32) {
    %c0_i32 = arith.constant 0 : i32
    %c0_i32_0 = arith.constant 0 : i32
    %c0_i32_1 = arith.constant 0 : i32
    return %c0_i32, %c0_i32_0 : i32, i32
  }
  func.func @transform_4(%arg0: i32, %arg1: i32) -> (i32, i32) {
    %c0_i32 = arith.constant 0 : i32
    %c0_i32_0 = arith.constant 0 : i32
    %c0_i32_1 = arith.constant 0 : i32
    return %c0_i32, %c0_i32_0 : i32, i32
  }
  func.func @transform_5(%arg0: i32, %arg1: i32) -> (i32, i32) {
    %c0_i32 = arith.constant 0 : i32
    %c0_i32_0 = arith.constant 0 : i32
    %c0_i32_1 = arith.constant 0 : i32
    return %c0_i32, %c0_i32_0 : i32, i32
  }
  func.func @transform_6(%arg0: i32, %arg1: i32) -> (i32, i32) {
    %c0_i32 = arith.constant 0 : i32
    %c0_i32_0 = arith.constant 0 : i32
    %c0_i32_1 = arith.constant 0 : i32
    return %c0_i32, %c0_i32_0 : i32, i32
  }
  func.func @transform_7(%arg0: i32, %arg1: i32) -> (i32, i32) {
    %c0_i32 = arith.constant 0 : i32
    %c0_i32_0 = arith.constant 0 : i32
    %c0_i32_1 = arith.constant 0 : i32
    return %c0_i32, %c0_i32_0 : i32, i32
  }
  func.func @transform_8(%arg0: i32, %arg1: i32) -> (i32, i32) {
    %c0_i32 = arith.constant 0 : i32
    %c0_i32_0 = arith.constant 0 : i32
    %c0_i32_1 = arith.constant 0 : i32
    return %c0_i32, %c0_i32_0 : i32, i32
  }
  func.func @transform_9(%arg0: i32, %arg1: i32) -> (i32, i32) {
    %c0_i32 = arith.constant 0 : i32
    %c0_i32_0 = arith.constant 0 : i32
    %c0_i32_1 = arith.constant 0 : i32
    return %c0_i32, %c0_i32_0 : i32, i32
  }
  func.func @transform_10(%arg0: i32, %arg1: i32) -> (i32, i32) {
    %c0_i32 = arith.constant 0 : i32
    %c0_i32_0 = arith.constant 0 : i32
    %c0_i32_1 = arith.constant 0 : i32
    return %c0_i32, %c0_i32_0 : i32, i32
  }
  func.func @transform_11(%arg0: i32, %arg1: i32) -> (i32, i32) {
    %c0_i32 = arith.constant 0 : i32
    %c0_i32_0 = arith.constant 0 : i32
    %c0_i32_1 = arith.constant 0 : i32
    return %c0_i32, %c0_i32_0 : i32, i32
  }
  func.func @transform_12(%arg0: i32, %arg1: i32) -> (i32, i32) {
    %c0_i32 = arith.constant 0 : i32
    %c0_i32_0 = arith.constant 0 : i32
    %c0_i32_1 = arith.constant 0 : i32
    return %c0_i32, %c0_i32_0 : i32, i32
  }
  func.func @transform_13(%arg0: i32, %arg1: i32) -> (i32, i32) {
    %c0_i32 = arith.constant 0 : i32
    %c0_i32_0 = arith.constant 0 : i32
    %c0_i32_1 = arith.constant 0 : i32
    return %c0_i32, %c0_i32_0 : i32, i32
  }
  func.func @transform_14(%arg0: i32, %arg1: i32) -> (i32, i32) {
    %c0_i32 = arith.constant 0 : i32
    %c0_i32_0 = arith.constant 0 : i32
    %c0_i32_1 = arith.constant 0 : i32
    return %c0_i32, %c0_i32_0 : i32, i32
  }
  func.func @transform_15(%arg0: i32, %arg1: i32) -> (i32, i32) {
    %c0_i32 = arith.constant 0 : i32
    %c0_i32_0 = arith.constant 0 : i32
    %c0_i32_1 = arith.constant 0 : i32
    return %c0_i32, %c0_i32_0 : i32, i32
  }
  func.func @transform_16(%arg0: i32, %arg1: i32) -> (i32, i32, i32) {
    %c0_i32 = arith.constant 0 : i32
    %c0_i32_0 = arith.constant 0 : i32
    return %arg0, %arg1, %c0_i32 : i32, i32, i32
  }
}

</mosaic_0001>

<llo_original>
// kernel: _lambda_.1
$region0: #{_lambda_.1}
  #allocation0 [shape = 'u32[]', space=smem, size = 0x4, offset = 0x4, fixed_abs, tag = 'smem constant byte address 0x4 - core index']
  #allocation1 [shape = 'u32[144,128]{1,0:T(1,128)}', space=vmem, size = 0x12000, scoped, tag = 'internal scratch']
  #allocation2 [shape = 'bf16[4,8,8]{2,1,0:T(8,128)(2,1)}', space=vmem, size = 0x2000, scoped, tag = 'scratch operand']
  #allocation3 [shape = 'bf16[4,8,8]{2,1,0:T(8,128)(2,1)}', space=vmem, size = 0x2000, scoped, tag = 'scratch operand']
  %s0 = inlined_call_operand.hbm [shape: f32[2,8,32], index: 0, kind: input, shape index: {}, may-alias: {0,1}]
  %s1 = inlined_call_operand.hbm [shape: f32[2,8,32], index: 1, kind: input, shape index: {}, may-alias: {0,1}]
  %s2 = inlined_call_operand.hbm [shape: bf16[32,32], index: 2, kind: input, shape index: {}]
  %s3 = inlined_call_operand.hbm [shape: f32[1,32], index: 3, kind: input, shape index: {}]
  %s4 = inlined_call_operand.hbm [shape: bf16[32,64], index: 4, kind: input, shape index: {}]
  %s5 = inlined_call_operand.hbm [shape: f32[1,64], index: 5, kind: input, shape index: {}]
  %s6 = inlined_call_operand.hbm [shape: bf16[32,32], index: 6, kind: input, shape index: {}]
  %s7 = inlined_call_operand.vmem [shape: f32[1,32], index: 7, kind: input, shape index: {}]
  %s8 = inlined_call_operand.vmem [shape: f32[1,32], index: 8, kind: input, shape index: {}]
  %s9 = inlined_call_operand.vmem [shape: f32[1,32], index: 9, kind: input, shape index: {}]
  %s10 = inlined_call_operand.vmem [shape: f32[1,32], index: 10, kind: input, shape index: {}]
  %s11 = inlined_call_operand.vmem [shape: f32[1,32], index: 11, kind: input, shape index: {}]
  %s12 = inlined_call_operand.hbm [shape: bf16[32,128], index: 12, kind: input, shape index: {}]
  %s13 = inlined_call_operand.vmem [shape: f32[1,128], index: 13, kind: input, shape index: {}]
  %s14 = inlined_call_operand.vmem [shape: bf16[128,32], index: 14, kind: input, shape index: {}]
  %s15 = inlined_call_operand.vmem [shape: f32[1,32], index: 15, kind: input, shape index: {}]
  %s16 = inlined_call_operand.hbm [shape: f32[2,8,32], index: 16, kind: output, shape index: {}]
  %s17 = sld [smem:[#allocation0]]
  $region133: #{_lambda_.1} parent=0
    _
  %s19 = ssub.s32 1, %s17
  %s20 = scalar_select 0, %s19, %s17
  $region1: #{_lambda_.1} parent=0
    #allocation4 [shape = 'u8[8192]{0}', space=vmem, size = 0x2000, scoped, tag = 'input window, operand 0']
    #allocation5 [shape = 's32[2]{0}', space=sflag, size = 0x8, scoped, tag = 'scoped memory for _lambda_.1']
    #allocation6 [shape = 's32[2]{0}', space=sflag, size = 0x8, scoped, tag = 'scoped memory for _lambda_.1']
    #allocation7 [shape = 'u8[8192]{0}', space=vmem, size = 0x2000, scoped, tag = 'input window, operand 1']
    #allocation8 [shape = 's32[2]{0}', space=sflag, size = 0x8, scoped, tag = 'scoped memory for _lambda_.1']
    #allocation9 [shape = 'u8[8192]{0}', space=vmem, size = 0x2000, scoped, tag = 'input window, operand 2, single buffered']
    #allocation10 [shape = 'u8[512]{0}', space=vmem, size = 0x400, scoped, tag = 'input window, operand 3, single buffered']
    #allocation11 [shape = 's32[1]{0}', space=sflag, size = 0x4, scoped, tag = 'scoped memory for _lambda_.1']
    #allocation12 [shape = 'u8[8192]{0}', space=vmem, size = 0x2000, scoped, tag = 'input window, operand 4, single buffered']
    #allocation13 [shape = 'u8[512]{0}', space=vmem, size = 0x400, scoped, tag = 'input window, operand 5, single buffered']
    #allocation14 [shape = 's32[1]{0}', space=sflag, size = 0x4, scoped, tag = 'scoped memory for _lambda_.1']
    #allocation15 [shape = 'u8[8192]{0}', space=vmem, size = 0x2000, scoped, tag = 'input window, operand 6, single buffered']
    #allocation16 [shape = 'u8[8192]{0}', space=vmem, size = 0x2000, scoped, tag = 'input window, operand 12, single buffered']
    #allocation17 [shape = 's32[1]{0}', space=sflag, size = 0x4, scoped, tag = 'scoped memory for _lambda_.1']
    #allocation18 [shape = 'u8[8192]{0}', space=vmem, size = 0x2000, scoped, tag = 'output window, operand 0']
    %21 = vsyncpa [#allocation5], 0
    %s22 = scalar_lea.sflag [#allocation5], 1
    %23 = vsyncpa %s22, 0
    %24 = vsyncpa [#allocation8], 0
    %s25 = scalar_lea.sflag [#allocation8], 1
    %26 = vsyncpa %s25, 0
    %27 = vsyncpa [#allocation11], 0
    %28 = vsyncpa [#allocation14], 0
    %29 = vsyncpa [#allocation17], 0
    %30 = vsyncpa [#allocation6], 0
    %s31 = scalar_lea.sflag [#allocation6], 1
    %32 = vsyncpa %s31, 0
    loop: start=0, step=1, limit=4
    $region2: #{_lambda_.1} parent=1 // loop_pre_header
      _
    $region3: #{_lambda_.1} parent=1 // loop_header
      %s34 = sphi 0, %s38
      %p35 = scmp.ge.s32.totalorder %s34, 4
      %s41 = sphi 0, %s53
      %s42 = sphi 0, %s49
      %s43 = sphi 0, %s41
      %s44 = sphi 0, %s42
      %s45 = sphi 0, %s43
      %s46 = sphi 0, %s44
      %s58 = sphi 0, %s60
      %s61 = sphi 0, %s58
      %s62 = sphi 0, %s61
      %s78 = sphi 0, %s62
      %s84 = sphi 0, %s86
      %s87 = sphi 0, %s84
      %s88 = sphi 0, %s87
      %s104 = sphi 0, %s88
      %s108 = sphi 0, %s108
      %s110 = sphi 0, %s108
      %s111 = sphi 0, %s110
      %s125 = sphi 0, %s111
      %s129 = sphi 0, %s129
      %s131 = sphi 0, %s129
      %s132 = sphi 0, %s131
      %s146 = sphi 0, %s132
      %s150 = sphi 0, %s150
      %s152 = sphi 0, %s150
      %s153 = sphi 0, %s152
      %s167 = sphi 0, %s153
      %s171 = sphi 0, %s171
      %s173 = sphi 0, %s171
      %s174 = sphi 0, %s173
      %s188 = sphi 0, %s174
      %s192 = sphi 0, %s192
      %s194 = sphi 0, %s192
      %s195 = sphi 0, %s194
      %s209 = sphi 0, %s195
      %s213 = sphi 0, %s213
      %s215 = sphi 0, %s213
      %s216 = sphi 0, %s215
      %s230 = sphi 0, %s216
      %s234 = sphi 0, %s234
      %s236 = sphi 0, %s234
      %s237 = sphi 0, %s236
      %s251 = sphi 0, %s237
      %s255 = sphi 0, %s255
      %s257 = sphi 0, %s255
      %s258 = sphi 0, %s257
      %s272 = sphi 0, %s258
      %s276 = sphi 0, %s276
      %s278 = sphi 0, %s276
      %s279 = sphi 0, %s278
      %s293 = sphi 0, %s279
      %s297 = sphi 0, %s297
      %s299 = sphi 0, %s297
      %s300 = sphi 0, %s299
      %s314 = sphi 0, %s300
      %s318 = sphi 0, %s318
      %s320 = sphi 0, %s318
      %s321 = sphi 0, %s320
      %s335 = sphi 0, %s321
      %s339 = sphi 0, %s339
      %s341 = sphi 0, %s339
      %s342 = sphi 0, %s341
      %s356 = sphi 0, %s342
      %s360 = sphi 0, %s360
      %s362 = sphi 0, %s360
      %s363 = sphi 0, %s362
      %s377 = sphi 0, %s363
      %s381 = sphi 0, %s381
      %s383 = sphi 0, %s381
      %s384 = sphi 0, %s383
      %s398 = sphi 0, %s384
      %s406 = sphi 0, %s408
      %s409 = sphi 0, %s406
      %s410 = sphi 0, %s409
      %s426 = sphi 0, %s410
    $region4: #{_lambda_.1} parent=1 // loop_header_branch
      %37 = sbr.rel (%p35) target = $region8
    $region5: #{_lambda_.1} parent=1 // loop_body
      %s39 = ssub.s32 %s34, 1
      %s40 = ssub.s32 %s34, 2
      %s47 = sadd.s32 1, %s42
      %p48 = scmp.ge.s32.totalorder %s47, 1
      %s49 = scalar_select %p48, 0, %s47
      %s50 = sadd.s32 1, %s41
      %s51 = scalar_select %p48, %s50, %s41
      %p52 = scmp.ge.s32.totalorder %s51, 2
      %s53 = scalar_select %p52, 0, %s51
      %s54 = ssub.s32 %s41, %s53
      %s55 = ssub.s32 %s42, %s49
      %s56 = sor.u32 %s54, %s55
      %p57 = scmp.eq.s32.totalorder %s56, 0
      %s59 = sadd.s32 %s58, 1
      %s60 = scalar_select %p57, %s58, %s59
      %p63 = pneg %p57
      %p64 = scmp.eq.s32.totalorder %s34, 1
      %p65 = por %p63, %p64
      %p66 = scmp.ne.s32.totalorder %s58, %s61
      %p67 = scmp.eq.s32.totalorder %s34, 0
      %p68 = por %p66, %p67
      %p69 = scmp.ne.s32.totalorder %s58, %s61
      %p70 = scmp.eq.s32.totalorder %s39, 1
      %p71 = por %p69, %p70
      %p72 = scmp.ne.s32.totalorder %s61, %s62
      %p73 = scmp.eq.s32.totalorder %s39, 0
      %p74 = por %p72, %p73
      %p75 = scmp.ne.s32.totalorder %s61, %s62
      %p76 = scmp.eq.s32.totalorder %s40, 1
      %p77 = por %p75, %p76
      %p79 = scmp.ne.s32.totalorder %s62, %s78
      %p80 = scmp.eq.s32.totalorder %s40, 0
      %p81 = por %p79, %p80
      %s82 = ssub.s32 %s41, %s53
      %p83 = scmp.eq.s32.totalorder %s82, 0
      %s85 = sadd.s32 %s84, 1
      %s86 = scalar_select %p83, %s84, %s85
      %p89 = pneg %p83
      %p90 = scmp.eq.s32.totalorder %s34, 1
      %p91 = por %p89, %p90
      %p92 = scmp.ne.s32.totalorder %s84, %s87
      %p93 = scmp.eq.s32.totalorder %s34, 0
      %p94 = por %p92, %p93
      %p95 = scmp.ne.s32.totalorder %s84, %s87
      %p96 = scmp.eq.s32.totalorder %s39, 1
      %p97 = por %p95, %p96
      %p98 = scmp.ne.s32.totalorder %s87, %s88
      %p99 = scmp.eq.s32.totalorder %s39, 0
      %p100 = por %p98, %p99
      %p101 = scmp.ne.s32.totalorder %s87, %s88
      %p102 = scmp.eq.s32.totalorder %s40, 1
      %p103 = por %p101, %p102
      %p105 = scmp.ne.s32.totalorder %s88, %s104
      %p106 = scmp.eq.s32.totalorder %s40, 0
      %p107 = por %p105, %p106
      %s109 = sadd.s32 %s108, 1
      %p112 = scmp.eq.s32.totalorder %s34, 1
      %p113 = scmp.ne.s32.totalorder %s108, %s110
      %p114 = scmp.eq.s32.totalorder %s34, 0
      %p115 = por %p113, %p114
      %p116 = scmp.ne.s32.totalorder %s108, %s110
      %p117 = scmp.eq.s32.totalorder %s39, 1
      %p118 = por %p116, %p117
      %p119 = scmp.ne.s32.totalorder %s110, %s111
      %p120 = scmp.eq.s32.totalorder %s39, 0
      %p121 = por %p119, %p120
      %p122 = scmp.ne.s32.totalorder %s110, %s111
      %p123 = scmp.eq.s32.totalorder %s40, 1
      %p124 = por %p122, %p123
      %p126 = scmp.ne.s32.totalorder %s111, %s125
      %p127 = scmp.eq.s32.totalorder %s40, 0
      %p128 = por %p126, %p127
      %s130 = sadd.s32 %s129, 1
      %p133 = scmp.eq.s32.totalorder %s34, 1
      %p134 = scmp.ne.s32.totalorder %s129, %s131
      %p135 = scmp.eq.s32.totalorder %s34, 0
      %p136 = por %p134, %p135
      %p137 = scmp.ne.s32.totalorder %s129, %s131
      %p138 = scmp.eq.s32.totalorder %s39, 1
      %p139 = por %p137, %p138
      %p140 = scmp.ne.s32.totalorder %s131, %s132
      %p141 = scmp.eq.s32.totalorder %s39, 0
      %p142 = por %p140, %p141
      %p143 = scmp.ne.s32.totalorder %s131, %s132
      %p144 = scmp.eq.s32.totalorder %s40, 1
      %p145 = por %p143, %p144
      %p147 = scmp.ne.s32.totalorder %s132, %s146
      %p148 = scmp.eq.s32.totalorder %s40, 0
      %p149 = por %p147, %p148
      %s151 = sadd.s32 %s150, 1
      %p154 = scmp.eq.s32.totalorder %s34, 1
      %p155 = scmp.ne.s32.totalorder %s150, %s152
      %p156 = scmp.eq.s32.totalorder %s34, 0
      %p157 = por %p155, %p156
      %p158 = scmp.ne.s32.totalorder %s150, %s152
      %p159 = scmp.eq.s32.totalorder %s39, 1
      %p160 = por %p158, %p159
      %p161 = scmp.ne.s32.totalorder %s152, %s153
      %p162 = scmp.eq.s32.totalorder %s39, 0
      %p163 = por %p161, %p162
      %p164 = scmp.ne.s32.totalorder %s152, %s153
      %p165 = scmp.eq.s32.totalorder %s40, 1
      %p166 = por %p164, %p165
      %p168 = scmp.ne.s32.totalorder %s153, %s167
      %p169 = scmp.eq.s32.totalorder %s40, 0
      %p170 = por %p168, %p169
      %s172 = sadd.s32 %s171, 1
      %p175 = scmp.eq.s32.totalorder %s34, 1
      %p176 = scmp.ne.s32.totalorder %s171, %s173
      %p177 = scmp.eq.s32.totalorder %s34, 0
      %p178 = por %p176, %p177
      %p179 = scmp.ne.s32.totalorder %s171, %s173
      %p180 = scmp.eq.s32.totalorder %s39, 1
      %p181 = por %p179, %p180
      %p182 = scmp.ne.s32.totalorder %s173, %s174
      %p183 = scmp.eq.s32.totalorder %s39, 0
      %p184 = por %p182, %p183
      %p185 = scmp.ne.s32.totalorder %s173, %s174
      %p186 = scmp.eq.s32.totalorder %s40, 1
      %p187 = por %p185, %p186
      %p189 = scmp.ne.s32.totalorder %s174, %s188
      %p190 = scmp.eq.s32.totalorder %s40, 0
      %p191 = por %p189, %p190
      %s193 = sadd.s32 %s192, 1
      %p196 = scmp.eq.s32.totalorder %s34, 1
      %p197 = scmp.ne.s32.totalorder %s192, %s194
      %p198 = scmp.eq.s32.totalorder %s34, 0
      %p199 = por %p197, %p198
      %p200 = scmp.ne.s32.totalorder %s192, %s194
      %p201 = scmp.eq.s32.totalorder %s39, 1
      %p202 = por %p200, %p201
      %p203 = scmp.ne.s32.totalorder %s194, %s195
      %p204 = scmp.eq.s32.totalorder %s39, 0
      %p205 = por %p203, %p204
      %p206 = scmp.ne.s32.totalorder %s194, %s195
      %p207 = scmp.eq.s32.totalorder %s40, 1
      %p208 = por %p206, %p207
      %p210 = scmp.ne.s32.totalorder %s195, %s209
      %p211 = scmp.eq.s32.totalorder %s40, 0
      %p212 = por %p210, %p211
      %s214 = sadd.s32 %s213, 1
      %p217 = scmp.eq.s32.totalorder %s34, 1
      %p218 = scmp.ne.s32.totalorder %s213, %s215
      %p219 = scmp.eq.s32.totalorder %s34, 0
      %p220 = por %p218, %p219
      %p221 = scmp.ne.s32.totalorder %s213, %s215
      %p222 = scmp.eq.s32.totalorder %s39, 1
      %p223 = por %p221, %p222
      %p224 = scmp.ne.s32.totalorder %s215, %s216
      %p225 = scmp.eq.s32.totalorder %s39, 0
      %p226 = por %p224, %p225
      %p227 = scmp.ne.s32.totalorder %s215, %s216
      %p228 = scmp.eq.s32.totalorder %s40, 1
      %p229 = por %p227, %p228
      %p231 = scmp.ne.s32.totalorder %s216, %s230
      %p232 = scmp.eq.s32.totalorder %s40, 0
      %p233 = por %p231, %p232
      %s235 = sadd.s32 %s234, 1
      %p238 = scmp.eq.s32.totalorder %s34, 1
      %p239 = scmp.ne.s32.totalorder %s234, %s236
      %p240 = scmp.eq.s32.totalorder %s34, 0
      %p241 = por %p239, %p240
      %p242 = scmp.ne.s32.totalorder %s234, %s236
      %p243 = scmp.eq.s32.totalorder %s39, 1
      %p244 = por %p242, %p243
      %p245 = scmp.ne.s32.totalorder %s236, %s237
      %p246 = scmp.eq.s32.totalorder %s39, 0
      %p247 = por %p245, %p246
      %p248 = scmp.ne.s32.totalorder %s236, %s237
      %p249 = scmp.eq.s32.totalorder %s40, 1
      %p250 = por %p248, %p249
      %p252 = scmp.ne.s32.totalorder %s237, %s251
      %p253 = scmp.eq.s32.totalorder %s40, 0
      %p254 = por %p252, %p253
      %s256 = sadd.s32 %s255, 1
      %p259 = scmp.eq.s32.totalorder %s34, 1
      %p260 = scmp.ne.s32.totalorder %s255, %s257
      %p261 = scmp.eq.s32.totalorder %s34, 0
      %p262 = por %p260, %p261
      %p263 = scmp.ne.s32.totalorder %s255, %s257
      %p264 = scmp.eq.s32.totalorder %s39, 1
      %p265 = por %p263, %p264
      %p266 = scmp.ne.s32.totalorder %s257, %s258
      %p267 = scmp.eq.s32.totalorder %s39, 0
      %p268 = por %p266, %p267
      %p269 = scmp.ne.s32.totalorder %s257, %s258
      %p270 = scmp.eq.s32.totalorder %s40, 1
      %p271 = por %p269, %p270
      %p273 = scmp.ne.s32.totalorder %s258, %s272
      %p274 = scmp.eq.s32.totalorder %s40, 0
      %p275 = por %p273, %p274
      %s277 = sadd.s32 %s276, 1
      %p280 = scmp.eq.s32.totalorder %s34, 1
      %p281 = scmp.ne.s32.totalorder %s276, %s278
      %p282 = scmp.eq.s32.totalorder %s34, 0
      %p283 = por %p281, %p282
      %p284 = scmp.ne.s32.totalorder %s276, %s278
      %p285 = scmp.eq.s32.totalorder %s39, 1
      %p286 = por %p284, %p285
      %p287 = scmp.ne.s32.totalorder %s278, %s279
      %p288 = scmp.eq.s32.totalorder %s39, 0
      %p289 = por %p287, %p288
      %p290 = scmp.ne.s32.totalorder %s278, %s279
      %p291 = scmp.eq.s32.totalorder %s40, 1
      %p292 = por %p290, %p291
      %p294 = scmp.ne.s32.totalorder %s279, %s293
      %p295 = scmp.eq.s32.totalorder %s40, 0
      %p296 = por %p294, %p295
      %s298 = sadd.s32 %s297, 1
      %p301 = scmp.eq.s32.totalorder %s34, 1
      %p302 = scmp.ne.s32.totalorder %s297, %s299
      %p303 = scmp.eq.s32.totalorder %s34, 0
      %p304 = por %p302, %p303
      %p305 = scmp.ne.s32.totalorder %s297, %s299
      %p306 = scmp.eq.s32.totalorder %s39, 1
      %p307 = por %p305, %p306
      %p308 = scmp.ne.s32.totalorder %s299, %s300
      %p309 = scmp.eq.s32.totalorder %s39, 0
      %p310 = por %p308, %p309
      %p311 = scmp.ne.s32.totalorder %s299, %s300
      %p312 = scmp.eq.s32.totalorder %s40, 1
      %p313 = por %p311, %p312
      %p315 = scmp.ne.s32.totalorder %s300, %s314
      %p316 = scmp.eq.s32.totalorder %s40, 0
      %p317 = por %p315, %p316
      %s319 = sadd.s32 %s318, 1
      %p322 = scmp.eq.s32.totalorder %s34, 1
      %p323 = scmp.ne.s32.totalorder %s318, %s320
      %p324 = scmp.eq.s32.totalorder %s34, 0
      %p325 = por %p323, %p324
      %p326 = scmp.ne.s32.totalorder %s318, %s320
      %p327 = scmp.eq.s32.totalorder %s39, 1
      %p328 = por %p326, %p327
      %p329 = scmp.ne.s32.totalorder %s320, %s321
      %p330 = scmp.eq.s32.totalorder %s39, 0
      %p331 = por %p329, %p330
      %p332 = scmp.ne.s32.totalorder %s320, %s321
      %p333 = scmp.eq.s32.totalorder %s40, 1
      %p334 = por %p332, %p333
      %p336 = scmp.ne.s32.totalorder %s321, %s335
      %p337 = scmp.eq.s32.totalorder %s40, 0
      %p338 = por %p336, %p337
      %s340 = sadd.s32 %s339, 1
      %p343 = scmp.eq.s32.totalorder %s34, 1
      %p344 = scmp.ne.s32.totalorder %s339, %s341
      %p345 = scmp.eq.s32.totalorder %s34, 0
      %p346 = por %p344, %p345
      %p347 = scmp.ne.s32.totalorder %s339, %s341
      %p348 = scmp.eq.s32.totalorder %s39, 1
      %p349 = por %p347, %p348
      %p350 = scmp.ne.s32.totalorder %s341, %s342
      %p351 = scmp.eq.s32.totalorder %s39, 0
      %p352 = por %p350, %p351
      %p353 = scmp.ne.s32.totalorder %s341, %s342
      %p354 = scmp.eq.s32.totalorder %s40, 1
      %p355 = por %p353, %p354
      %p357 = scmp.ne.s32.totalorder %s342, %s356
      %p358 = scmp.eq.s32.totalorder %s40, 0
      %p359 = por %p357, %p358
      %s361 = sadd.s32 %s360, 1
      %p364 = scmp.eq.s32.totalorder %s34, 1
      %p365 = scmp.ne.s32.totalorder %s360, %s362
      %p366 = scmp.eq.s32.totalorder %s34, 0
      %p367 = por %p365, %p366
      %p368 = scmp.ne.s32.totalorder %s360, %s362
      %p369 = scmp.eq.s32.totalorder %s39, 1
      %p370 = por %p368, %p369
      %p371 = scmp.ne.s32.totalorder %s362, %s363
      %p372 = scmp.eq.s32.totalorder %s39, 0
      %p373 = por %p371, %p372
      %p374 = scmp.ne.s32.totalorder %s362, %s363
      %p375 = scmp.eq.s32.totalorder %s40, 1
      %p376 = por %p374, %p375
      %p378 = scmp.ne.s32.totalorder %s363, %s377
      %p379 = scmp.eq.s32.totalorder %s40, 0
      %p380 = por %p378, %p379
      %s382 = sadd.s32 %s381, 1
      %p385 = scmp.eq.s32.totalorder %s34, 1
      %p386 = scmp.ne.s32.totalorder %s381, %s383
      %p387 = scmp.eq.s32.totalorder %s34, 0
      %p388 = por %p386, %p387
      %p389 = scmp.ne.s32.totalorder %s381, %s383
      %p390 = scmp.eq.s32.totalorder %s39, 1
      %p391 = por %p389, %p390
      %p392 = scmp.ne.s32.totalorder %s383, %s384
      %p393 = scmp.eq.s32.totalorder %s39, 0
      %p394 = por %p392, %p393
      %p395 = scmp.ne.s32.totalorder %s383, %s384
      %p396 = scmp.eq.s32.totalorder %s40, 1
      %p397 = por %p395, %p396
      %p399 = scmp.ne.s32.totalorder %s384, %s398
      %p400 = scmp.eq.s32.totalorder %s40, 0
      %p401 = por %p399, %p400
      %s402 = ssub.s32 %s41, %s53
      %s403 = ssub.s32 %s42, %s49
      %s404 = sor.u32 %s402, %s403
      %p405 = scmp.eq.s32.totalorder %s404, 0
      %s407 = sadd.s32 %s406, 1
      %s408 = scalar_select %p405, %s406, %s407
      %p411 = pneg %p405
      %p412 = scmp.eq.s32.totalorder %s34, 1
      %p413 = por %p411, %p412
      %p414 = scmp.ne.s32.totalorder %s406, %s409
      %p415 = scmp.eq.s32.totalorder %s34, 0
      %p416 = por %p414, %p415
      %p417 = scmp.ne.s32.totalorder %s406, %s409
      %p418 = scmp.eq.s32.totalorder %s39, 1
      %p419 = por %p417, %p418
      %p420 = scmp.ne.s32.totalorder %s409, %s410
      %p421 = scmp.eq.s32.totalorder %s39, 0
      %p422 = por %p420, %p421
      %p423 = scmp.ne.s32.totalorder %s409, %s410
      %p424 = scmp.eq.s32.totalorder %s40, 1
      %p425 = por %p423, %p424
      %p427 = scmp.ne.s32.totalorder %s410, %s426
      %p428 = scmp.eq.s32.totalorder %s40, 0
      %p429 = por %p427, %p428
      %p430 = scmp.le.s32.totalorder 1, %s34
      %p431 = scmp.lt.s32.totalorder %s34, 3
      %p432 = pnand %p430, %p431
      %p433 = pneg %p432
      // Predicated region
      $region9: #{_lambda_.1} parent=5 // pred_check
        _
      $region10: #{_lambda_.1} parent=5 // pred_check_branch
        %435 = sbr.rel (%p432) target = $region12
      $region11: #{_lambda_.1} parent=5 // pred_region
        %s436 = ssub.s32 %s34, 1
        // Predicated region
        $region13: #{_lambda_.1} parent=11 // pred_check
          %p437 = pneg %p121
        $region14: #{_lambda_.1} parent=11 // pred_check_branch
          %439 = sbr.rel (%p437) target = $region16
        $region15: #{_lambda_.1} parent=11 // pred_region
          %s441 = ssub.s32 256, 256
          %442 = vsyncadd [#allocation8], %s441
          %s443 = sshll.u32 [#allocation9], 4
          %s444 = int_to_ptr.vmem [resolvable:$true] %s443
          %449 = dma.hbm_to_vmem [thread:$0]  %s2, 256, %s444, [#allocation8], 64, 64, 4
        $region16: #{_lambda_.1} parent=11 // pred_fallthru
          _
        // Predicated region
        $region17: #{_lambda_.1} parent=11 // pred_check
          %p450 = pneg %p142
        $region18: #{_lambda_.1} parent=11 // pred_check_branch
          %452 = sbr.rel (%p450) target = $region20
        $region19: #{_lambda_.1} parent=11 // pred_region
          %s454 = ssub.s32 16, 16
          %455 = vsyncadd [#allocation11], %s454
          %s457 = sshll.u32 [#allocation10], 4
          %s458 = int_to_ptr.vmem [resolvable:$true] %s457
          %460 = dma.hbm_to_vmem [thread:$0]  %s3, 16, %s458, [#allocation11]
        $region20: #{_lambda_.1} parent=11 // pred_fallthru
          _
        // Predicated region
        $region21: #{_lambda_.1} parent=11 // pred_check
          %p461 = pneg %p163
        $region22: #{_lambda_.1} parent=11 // pred_check_branch
          %463 = sbr.rel (%p461) target = $region24
        $region23: #{_lambda_.1} parent=11 // pred_region
          %s465 = ssub.s32 256, 256
          %466 = vsyncadd [#allocation11], %s465
          %s467 = sshll.u32 [#allocation12], 4
          %s468 = int_to_ptr.vmem [resolvable:$true] %s467
          %473 = dma.hbm_to_vmem [thread:$0]  %s4, 256, %s468, [#allocation11], 64, 64, 4
        $region24: #{_lambda_.1} parent=11 // pred_fallthru
          _
        // Predicated region
        $region25: #{_lambda_.1} parent=11 // pred_check
          %p474 = pneg %p184
        $region26: #{_lambda_.1} parent=11 // pred_check_branch
          %476 = sbr.rel (%p474) target = $region28
        $region27: #{_lambda_.1} parent=11 // pred_region
          %s478 = ssub.s32 16, 16
          %479 = vsyncadd [#allocation14], %s478
          %s481 = sshll.u32 [#allocation13], 4
          %s482 = int_to_ptr.vmem [resolvable:$true] %s481
          %484 = dma.hbm_to_vmem [thread:$0]  %s5, 16, %s482, [#allocation14]
        $region28: #{_lambda_.1} parent=11 // pred_fallthru
          _
        // Predicated region
        $region29: #{_lambda_.1} parent=11 // pred_check
          %p485 = pneg %p205
        $region30: #{_lambda_.1} parent=11 // pred_check_branch
          %487 = sbr.rel (%p485) target = $region32
        $region31: #{_lambda_.1} parent=11 // pred_region
          %s489 = ssub.s32 256, 256
          %490 = vsyncadd [#allocation14], %s489
          %s491 = sshll.u32 [#allocation15], 4
          %s492 = int_to_ptr.vmem [resolvable:$true] %s491
          %497 = dma.hbm_to_vmem [thread:$0]  %s6, 256, %s492, [#allocation14], 64, 64, 4
        $region32: #{_lambda_.1} parent=11 // pred_fallthru
          _
        // Predicated region
        $region33: #{_lambda_.1} parent=11 // pred_check
          %p498 = pneg %p226
        $region34: #{_lambda_.1} parent=11 // pred_check_branch
          %500 = sbr.rel (%p498) target = $region36
        $region35: #{_lambda_.1} parent=11 // pred_region
          _
        $region36: #{_lambda_.1} parent=11 // pred_fallthru
          _
        // Predicated region
        $region37: #{_lambda_.1} parent=11 // pred_check
          %p501 = pneg %p247
        $region38: #{_lambda_.1} parent=11 // pred_check_branch
          %503 = sbr.rel (%p501) target = $region40
        $region39: #{_lambda_.1} parent=11 // pred_region
          _
        $region40: #{_lambda_.1} parent=11 // pred_fallthru
          _
        // Predicated region
        $region41: #{_lambda_.1} parent=11 // pred_check
          %p504 = pneg %p268
        $region42: #{_lambda_.1} parent=11 // pred_check_branch
          %506 = sbr.rel (%p504) target = $region44
        $region43: #{_lambda_.1} parent=11 // pred_region
          _
        $region44: #{_lambda_.1} parent=11 // pred_fallthru
          _
        // Predicated region
        $region45: #{_lambda_.1} parent=11 // pred_check
          %p507 = pneg %p289
        $region46: #{_lambda_.1} parent=11 // pred_check_branch
          %509 = sbr.rel (%p507) target = $region48
        $region47: #{_lambda_.1} parent=11 // pred_region
          _
        $region48: #{_lambda_.1} parent=11 // pred_fallthru
          _
        // Predicated region
        $region49: #{_lambda_.1} parent=11 // pred_check
          %p510 = pneg %p310
        $region50: #{_lambda_.1} parent=11 // pred_check_branch
          %512 = sbr.rel (%p510) target = $region52
        $region51: #{_lambda_.1} parent=11 // pred_region
          _
        $region52: #{_lambda_.1} parent=11 // pred_fallthru
          _
        // Predicated region
        $region53: #{_lambda_.1} parent=11 // pred_check
          %p513 = pneg %p331
        $region54: #{_lambda_.1} parent=11 // pred_check_branch
          %515 = sbr.rel (%p513) target = $region56
        $region55: #{_lambda_.1} parent=11 // pred_region
          %s517 = ssub.s32 256, 256
          %518 = vsyncadd [#allocation17], %s517
          %s519 = sshll.u32 [#allocation16], 4
          %s520 = int_to_ptr.vmem [resolvable:$true] %s519
          %525 = dma.hbm_to_vmem [thread:$0]  %s12, 256, %s520, [#allocation17], 64, 64, 4
        $region56: #{_lambda_.1} parent=11 // pred_fallthru
          _
        // Predicated region
        $region57: #{_lambda_.1} parent=11 // pred_check
          %p526 = pneg %p352
        $region58: #{_lambda_.1} parent=11 // pred_check_branch
          %528 = sbr.rel (%p526) target = $region60
        $region59: #{_lambda_.1} parent=11 // pred_region
          _
        $region60: #{_lambda_.1} parent=11 // pred_fallthru
          _
        // Predicated region
        $region61: #{_lambda_.1} parent=11 // pred_check
          %p529 = pneg %p373
        $region62: #{_lambda_.1} parent=11 // pred_check_branch
          %531 = sbr.rel (%p529) target = $region64
        $region63: #{_lambda_.1} parent=11 // pred_region
          _
        $region64: #{_lambda_.1} parent=11 // pred_fallthru
          _
        // Predicated region
        $region65: #{_lambda_.1} parent=11 // pred_check
          %p532 = pneg %p394
        $region66: #{_lambda_.1} parent=11 // pred_check_branch
          %534 = sbr.rel (%p532) target = $region68
        $region67: #{_lambda_.1} parent=11 // pred_region
          _
        $region68: #{_lambda_.1} parent=11 // pred_fallthru
          _
      $region12: #{_lambda_.1} parent=5 // pred_fallthru
        _
      %p535 = scmp.lt.s32.totalorder %s34, 2
      // Predicated region
      $region69: #{_lambda_.1} parent=5 // pred_check
        %p536 = pneg %p535
      $region70: #{_lambda_.1} parent=5 // pred_check_branch
        %538 = sbr.rel (%p536) target = $region72
      $region71: #{_lambda_.1} parent=5 // pred_region
        // Predicated region
        $region73: #{_lambda_.1} parent=71 // pred_check
          %p539 = pneg %p68
        $region74: #{_lambda_.1} parent=71 // pred_check_branch
          %541 = sbr.rel (%p539) target = $region76
        $region75: #{_lambda_.1} parent=71 // pred_region
          %s542 = sand.u32 %s58, 1
          %s543 = scalar_lea.sflag [#allocation5], %s542
          %s544 = sand.u32 %s58, 1
          %s545 = smul.addr %s544, 8
          %s546 = scalar_lea.vmem [#allocation4], %s545
          %s548 = ssub.s32 128, 128
          %549 = vsyncadd %s543, %s548
          %s550 = sadd.s32 %s42, %s41
          %s551 = smul.addr %s550, 128
          %s552 = scalar_lea.hbm %s0, %s551
          %s554 = sshll.u32 %s546, 4
          %s555 = int_to_ptr.vmem [resolvable:$true] %s554
          %557 = dma.hbm_to_vmem [thread:$0]  %s552, 128, %s555, %s543
        $region76: #{_lambda_.1} parent=71 // pred_fallthru
          _
        // Predicated region
        $region77: #{_lambda_.1} parent=71 // pred_check
          %p558 = pneg %p94
        $region78: #{_lambda_.1} parent=71 // pred_check_branch
          %560 = sbr.rel (%p558) target = $region80
        $region79: #{_lambda_.1} parent=71 // pred_region
          %s561 = sand.u32 %s34, 1
          %s562 = scalar_lea.sflag [#allocation8], %s561
          %s563 = sand.u32 %s84, 1
          %s564 = smul.addr %s563, 8
          %s565 = scalar_lea.vmem [#allocation7], %s564
          %s567 = ssub.s32 128, 128
          %568 = vsyncadd %s562, %s567
          %s569 = smul.addr %s41, 128
          %s570 = scalar_lea.hbm %s1, %s569
          %s572 = sshll.u32 %s565, 4
          %s573 = int_to_ptr.vmem [resolvable:$true] %s572
          %575 = dma.hbm_to_vmem [thread:$0]  %s570, 128, %s573, %s562
        $region80: #{_lambda_.1} parent=71 // pred_fallthru
          _
      $region72: #{_lambda_.1} parent=5 // pred_fallthru
        _
      %p576 = scmp.le.s32.totalorder 1, %s34
      %p577 = scmp.lt.s32.totalorder %s34, 3
      %p578 = pnand %p576, %p577
      %p579 = pneg %p578
      // Predicated region
      $region81: #{_lambda_.1} parent=5 // pred_check
        _
      $region82: #{_lambda_.1} parent=5 // pred_check_branch
        %581 = sbr.rel (%p578) target = $region84
      $region83: #{_lambda_.1} parent=5 // pred_region
        %s582 = ssub.s32 %s34, 1
        %s583 = sand.u32 %s61, 1
        %s584 = scalar_lea.sflag [#allocation5], %s583
        %s585 = sand.u32 %s61, 1
        %s586 = smul.addr %s585, 8
        %s587 = scalar_lea.vmem [#allocation4], %s586
        // Predicated region
        $region85: #{_lambda_.1} parent=83 // pred_check
          %p588 = pneg %p74
        $region86: #{_lambda_.1} parent=83 // pred_check_branch
          %590 = sbr.rel (%p588) target = $region88
        $region87: #{_lambda_.1} parent=83 // pred_region
          %591 = dma.done %s584, 128
        $region88: #{_lambda_.1} parent=83 // pred_fallthru
          _
        %s592 = sand.u32 %s39, 1
        %s593 = scalar_lea.sflag [#allocation8], %s592
        %s594 = sand.u32 %s87, 1
        %s595 = smul.addr %s594, 8
        %s596 = scalar_lea.vmem [#allocation7], %s595
        // Predicated region
        $region89: #{_lambda_.1} parent=83 // pred_check
          %p597 = pneg %p100
        $region90: #{_lambda_.1} parent=83 // pred_check_branch
          %599 = sbr.rel (%p597) target = $region92
        $region91: #{_lambda_.1} parent=83 // pred_region
          %600 = dma.done %s593, 128
        $region92: #{_lambda_.1} parent=83 // pred_fallthru
          _
        // Predicated region
        $region93: #{_lambda_.1} parent=83 // pred_check
          %p601 = pneg %p121
        $region94: #{_lambda_.1} parent=83 // pred_check_branch
          %603 = sbr.rel (%p601) target = $region96
        $region95: #{_lambda_.1} parent=83 // pred_region
          %604 = dma.done [#allocation8], 256
        $region96: #{_lambda_.1} parent=83 // pred_fallthru
          _
        // Predicated region
        $region97: #{_lambda_.1} parent=83 // pred_check
          %p605 = pneg %p142
        $region98: #{_lambda_.1} parent=83 // pred_check_branch
          %607 = sbr.rel (%p605) target = $region100
        $region99: #{_lambda_.1} parent=83 // pred_region
          %608 = dma.done [#allocation11], 16
        $region100: #{_lambda_.1} parent=83 // pred_fallthru
          _
        // Predicated region
        $region101: #{_lambda_.1} parent=83 // pred_check
          %p609 = pneg %p163
        $region102: #{_lambda_.1} parent=83 // pred_check_branch
          %611 = sbr.rel (%p609) target = $region104
        $region103: #{_lambda_.1} parent=83 // pred_region
          %612 = dma.done [#allocation11], 256
        $region104: #{_lambda_.1} parent=83 // pred_fallthru
          _
        // Predicated region
        $region105: #{_lambda_.1} parent=83 // pred_check
          %p613 = pneg %p184
        $region106: #{_lambda_.1} parent=83 // pred_check_branch
          %615 = sbr.rel (%p613) target = $region108
        $region107: #{_lambda_.1} parent=83 // pred_region
          %616 = dma.done [#allocation14], 16
        $region108: #{_lambda_.1} parent=83 // pred_fallthru
          _
        // Predicated region
        $region109: #{_lambda_.1} parent=83 // pred_check
          %p617 = pneg %p205
        $region110: #{_lambda_.1} parent=83 // pred_check_branch
          %619 = sbr.rel (%p617) target = $region112
        $region111: #{_lambda_.1} parent=83 // pred_region
          %620 = dma.done [#allocation14], 256
        $region112: #{_lambda_.1} parent=83 // pred_fallthru
          _
        // Predicated region
        $region113: #{_lambda_.1} parent=83 // pred_check
          %p621 = pneg %p331
        $region114: #{_lambda_.1} parent=83 // pred_check_branch
          %623 = sbr.rel (%p621) target = $region116
        $region115: #{_lambda_.1} parent=83 // pred_region
          %624 = dma.done [#allocation17], 256
        $region116: #{_lambda_.1} parent=83 // pred_fallthru
          _
        %s625 = sand.u32 %s61, 1
        %s626 = scalar_lea.sflag [#allocation5], %s625
        %s627 = sand.u32 %s61, 1
        %s628 = smul.addr %s627, 8
        %s629 = scalar_lea.vmem [#allocation4], %s628
        %p630 = pneg %p74
        %p631 = pneg %p71
        %s632 = sand.u32 %s39, 1
        %s633 = scalar_lea.sflag [#allocation8], %s632
        %s634 = sand.u32 %s87, 1
        %s635 = smul.addr %s634, 8
        %s636 = scalar_lea.vmem [#allocation7], %s635
        %p637 = pneg %p100
        %p638 = pneg %p97
        %p639 = pneg %p121
        %p640 = pneg %p118
        %p641 = pneg %p142
        %p642 = pneg %p139
        %p643 = pneg %p163
        %p644 = pneg %p160
        %p645 = pneg %p184
        %p646 = pneg %p181
        %p647 = pneg %p205
        %p648 = pneg %p202
        %p649 = pneg %p226
        %p650 = pneg %p223
        %p651 = pneg %p247
        %p652 = pneg %p244
        %p653 = pneg %p268
        %p654 = pneg %p265
        %p655 = pneg %p289
        %p656 = pneg %p286
        %p657 = pneg %p310
        %p658 = pneg %p307
        %p659 = pneg %p331
        %p660 = pneg %p328
        %p661 = pneg %p352
        %p662 = pneg %p349
        %p663 = pneg %p373
        %p664 = pneg %p370
        %p665 = pneg %p394
        %p666 = pneg %p391
        %p667 = pneg %p422
        %p668 = pneg %p419
        %s669 = sand.u32 %s409, 1
        %s670 = scalar_lea.sflag [#allocation6], %s669
        %s671 = sand.u32 %s409, 1
        %s672 = smul.addr %s671, 8
        %s673 = scalar_lea.vmem [#allocation18], %s672
        %v675 = vld [vmem:[%s587] sm:$0xff]
        %v676 = vld [vmem:[%s8] sm:$0x1]
        %v677 = vld [vmem:[%s9] sm:$0x1]
        %p678 = scmp.eq.s32.totalorder %s44, 0
        // Predicated region
        $region117: #{_lambda_.1} parent=83 // pred_check
          %p679 = pneg %p678
        $region118: #{_lambda_.1} parent=83 // pred_check_branch
          %681 = sbr.rel (%p679) target = $region120
        $region119: #{_lambda_.1} parent=83 // pred_region
          %v682 = vld [vmem:[%s596] sm:$0xff]
          %vm683 = vcmask 261120
          %v684 = vsel %vm683, %v682, 0.0
          %685 = vadd.xlane.f32.xlu0 %v684
          %v686 = vpop.xlane.xlu0 %685
          %v687 = vrcp.pop 32.0
          %v688 = vmul.f32 %v686, %v687
          %v689 = vsub.f32 %v682, %v688
          %v690 = vmul.f32 %v689, %v689
          %v691 = vsel %vm683, %v690, 0.0
          %692 = vadd.xlane.f32.xlu0 %v691
          %v693 = vpop.xlane.xlu0 %692
          %v694 = vmul.f32 %v693, %v687
          %v695 = vadd.f32 %v694, 1e-05
          %v696 = vrsqrt.pop %v695
          %v697 = vmul.f32 %v689, %v696
          %v699 = vlaneseq
          %v700 = vshrl.u32 %v699, 7
          %v701 = vsub.s32 0, %v700
          %v702 = vrot.slane %v676, %v701
          %v704 = vmul.f32 %v697, %v702
          %v706 = vlaneseq
          %v707 = vshrl.u32 %v706, 7
          %v708 = vsub.s32 0, %v707
          %v709 = vrot.slane %v677, %v708
          %v711 = vadd.f32 %v704, %v709
          %v712 = vpack.c.bf16 %v711, %v711
          %v713 = vld [vmem:[#allocation12] sm:$0xf]
          %v714 = vld [vmem:[#allocation12 + $0x4] sm:$0xf]
          %v715 = vld [vmem:[#allocation12 + $0x8] sm:$0xf]
          %v716 = vld [vmem:[#allocation12 + $0xc] sm:$0xf]
          %v717 = vld [vmem:[#allocation13] sm:$0x1]
          %v719 = vlaneseq
          %v720 = vshrl.u32 %v719, 7
          %v721 = vsub.s32 0, %v720
          %v722 = vrot.slane %v717, %v721
          %v728 = vunpack.c.l.b16 %v713
          %v729 = vunpack.c.l.b16 %v714
          %v730 = vunpack.c.l.b16 %v715
          %v731 = vunpack.c.l.b16 %v716
          %v732 = vpack.c.b16 %v729, %v728
          %v733 = vpack.c.b16 %v731, %v730
          %v737 = vsel %vm683, %v712, 0
          %739 = vmatprep.subr.bf16.mxu0 0
          %740 = vmatpush1.bf16.msra.mxu0 %v732
          %741 = vmatprep.subr.bf16.mxu0 0
          %742 = vmatpush1.bf16.msra.mxu0 %v733
          %743 = vmatprep.subr.bf16.mxu0 0
          %744 = vmatpush1.bf16.msra.mxu0 0
          %745 = vmatprep.subr.bf16.mxu0 0
          %746 = vmatpush1.bf16.msra.mxu0 0
          %747 = vmatprep.subr.bf16.mxu0 0
          %748 = vmatpush1.bf16.msra.mxu0 0
          %749 = vmatprep.subr.bf16.mxu0 0
          %750 = vmatpush1.bf16.msra.mxu0 0
          %751 = vmatprep.subr.bf16.mxu0 0
          %752 = vmatpush1.bf16.msra.mxu0 0
          %753 = vmatprep.subr.bf16.mxu0 0
          %754 = vmatpush1.bf16.msra.mxu0 0
          %755 = vmatprep.subr.bf16.mxu0 0
          %756 = vmatpush1.bf16.msra.mxu0 0
          %757 = vmatprep.subr.bf16.mxu0 0
          %758 = vmatpush1.bf16.msra.mxu0 0
          %759 = vmatprep.subr.bf16.mxu0 0
          %760 = vmatpush1.bf16.msra.mxu0 0
          %761 = vmatprep.subr.bf16.mxu0 0
          %762 = vmatpush1.bf16.msra.mxu0 0
          %763 = vmatprep.subr.bf16.mxu0 0
          %764 = vmatpush1.bf16.msra.mxu0 0
          %765 = vmatprep.subr.bf16.mxu0 0
          %766 = vmatpush1.bf16.msra.mxu0 0
          %767 = vmatprep.subr.bf16.mxu0 0
          %768 = vmatpush1.bf16.msra.mxu0 0
          %769 = vmatprep.subr.bf16.mxu0 0
          %770 = vmatpush1.bf16.msra.mxu0 0
          %771 = vmatprep.mubr.bf16.mxu0 0
          %772 = vmatmul.mubr.bf16.gmra.mrb[0].mxu0 %v737
          %v773 = vpop.f32.mrb[0].mxu0
          %v774 = vadd.f32 %v722, %v773
          %v775 = vpop.f32.mrb[0].mxu0
          %v776 = vpop.f32.mrb[0].mxu0
          %v777 = vpop.f32.mrb[0].mxu0
          %778 = vdwg.mxu0
          %780 = vrot.lane.b32.xlu0 %v774, 120
          %v781 = vpop.permute.xlu0 %780
          %783 = vrot.lane.b32.xlu0 %v774, 112
          %v784 = vpop.permute.xlu0 %783
          %786 = vrot.lane.b32.xlu0 %v774, 104
          %v787 = vpop.permute.xlu0 %786
          %v789 = vcombine.low %v774, %v784
          %v790 = vcombine.high %v774, %v784
          %v792 = vunpack.c.l.s4 1983009808
          %v793 = vunpack.c.0.s8 %v792
          %v794 = vlaneseq
          %v795 = vshrl.u32 %v794, 7
          %v796 = vsub.s32 %v793, %v795
          %v797 = vrot.slane %v789, %v796
          %v799 = vunpack.c.l.s4 1983009808
          %v800 = vunpack.c.0.s8 %v799
          %v801 = vlaneseq
          %v802 = vshrl.u32 %v801, 7
          %v803 = vsub.s32 %v800, %v802
          %v804 = vrot.slane %v790, %v803
          %v805 = vcombine.low %v781, %v787
          %v806 = vcombine.high %v781, %v787
          %v808 = vunpack.c.l.s4 1983009808
          %v809 = vunpack.c.0.s8 %v808
          %v810 = vlaneseq
          %v811 = vshrl.u32 %v810, 7
          %v812 = vsub.s32 %v809, %v811
          %v813 = vrot.slane %v805, %v812
          %v815 = vunpack.c.l.s4 1983009808
          %v816 = vunpack.c.0.s8 %v815
          %v817 = vlaneseq
          %v818 = vshrl.u32 %v817, 7
          %v819 = vsub.s32 %v816, %v818
          %v820 = vrot.slane %v806, %v819
          %v821 = vcombine.low %v797, %v813
          %v822 = vcombine.high %v797, %v813
          %v824 = vunpack.c.l.s4 1934713408
          %v825 = vunpack.c.0.s8 %v824
          %v826 = vlaneseq
          %v827 = vshrl.u32 %v826, 7
          %v828 = vsub.s32 %v825, %v827
          %v829 = vrot.slane %v821, %v828
          %v831 = vunpack.c.l.s4 1934713408
          %v832 = vunpack.c.0.s8 %v831
          %v833 = vlaneseq
          %v834 = vshrl.u32 %v833, 7
          %v835 = vsub.s32 %v832, %v834
          %v836 = vrot.slane %v822, %v835
          %v837 = vcombine.low %v804, %v820
          %v838 = vcombine.high %v804, %v820
          %v840 = vunpack.c.l.s4 1934713408
          %v841 = vunpack.c.0.s8 %v840
          %v842 = vlaneseq
          %v843 = vshrl.u32 %v842, 7
          %v844 = vsub.s32 %v841, %v843
          %v845 = vrot.slane %v837, %v844
          %v847 = vunpack.c.l.s4 1934713408
          %v848 = vunpack.c.0.s8 %v847
          %v849 = vlaneseq
          %v850 = vshrl.u32 %v849, 7
          %v851 = vsub.s32 %v848, %v850
          %v852 = vrot.slane %v838, %v851
          %v853 = vcombine.high %v829, 0.0
          %v854 = vcombine.high %v836, 0.0
          %v855 = vcombine.high %v845, 0.0
          %v856 = vcombine.high %v852, 0.0
          %v857 = vcombine.low %v829, %v836
          %v859 = vunpack.c.l.s4 1983009808
          %v860 = vunpack.c.0.s8 %v859
          %v861 = vlaneseq
          %v862 = vshrl.u32 %v861, 7
          %v863 = vsub.s32 %v860, %v862
          %v864 = vrot.slane %v857, %v863
          %v865 = vcombine.low %v853, %v854
          %v867 = vunpack.c.l.s4 1983009808
          %v868 = vunpack.c.0.s8 %v867
          %v869 = vlaneseq
          %v870 = vshrl.u32 %v869, 7
          %v871 = vsub.s32 %v868, %v870
          %v872 = vrot.slane %v865, %v871
          %v873 = vcombine.low %v845, %v852
          %v875 = vunpack.c.l.s4 1983009808
          %v876 = vunpack.c.0.s8 %v875
          %v877 = vlaneseq
          %v878 = vshrl.u32 %v877, 7
          %v879 = vsub.s32 %v876, %v878
          %v880 = vrot.slane %v873, %v879
          %v881 = vcombine.low %v855, %v856
          %v883 = vunpack.c.l.s4 1983009808
          %v884 = vunpack.c.0.s8 %v883
          %v885 = vlaneseq
          %v886 = vshrl.u32 %v885, 7
          %v887 = vsub.s32 %v884, %v886
          %v888 = vrot.slane %v881, %v887
          %v889 = vcombine.low %v864, %v872
          %v890 = vcombine.high %v864, %v872
          %v892 = vunpack.c.l.s4 1934713408
          %v893 = vunpack.c.0.s8 %v892
          %v894 = vlaneseq
          %v895 = vshrl.u32 %v894, 7
          %v896 = vsub.s32 %v893, %v895
          %v897 = vrot.slane %v889, %v896
          %v899 = vunpack.c.l.s4 1934713408
          %v900 = vunpack.c.0.s8 %v899
          %v901 = vlaneseq
          %v902 = vshrl.u32 %v901, 7
          %v903 = vsub.s32 %v900, %v902
          %v904 = vrot.slane %v890, %v903
          %v905 = vcombine.low %v880, %v888
          %v906 = vcombine.high %v880, %v888
          %v908 = vunpack.c.l.s4 1934713408
          %v909 = vunpack.c.0.s8 %v908
          %v910 = vlaneseq
          %v911 = vshrl.u32 %v910, 7
          %v912 = vsub.s32 %v909, %v911
          %v913 = vrot.slane %v905, %v912
          %v915 = vunpack.c.l.s4 1934713408
          %v916 = vunpack.c.0.s8 %v915
          %v917 = vlaneseq
          %v918 = vshrl.u32 %v917, 7
          %v919 = vsub.s32 %v916, %v918
          %v920 = vrot.slane %v906, %v919
          %v921 = vcombine.low %v897, %v913
          %v922 = vcombine.high %v897, %v913
          %v923 = vcombine.low %v904, %v920
          %v924 = vcombine.high %v904, %v920
          %925 = vrot.lane.b32.xlu0 %v774, 96
          %v926 = vpop.permute.xlu0 %925
          %927 = vrot.lane.b32.xlu0 %v781, 96
          %v928 = vpop.permute.xlu0 %927
          %929 = vrot.lane.b32.xlu0 %v784, 96
          %v930 = vpop.permute.xlu0 %929
          %931 = vrot.lane.b32.xlu0 %v787, 96
          %v932 = vpop.permute.xlu0 %931
          %v937 = vcombine.low %v926, %v930
          %v938 = vcombine.high %v926, %v930
          %v940 = vunpack.c.l.s4 1983009808
          %v941 = vunpack.c.0.s8 %v940
          %v942 = vlaneseq
          %v943 = vshrl.u32 %v942, 7
          %v944 = vsub.s32 %v941, %v943
          %v945 = vrot.slane %v937, %v944
          %v947 = vunpack.c.l.s4 1983009808
          %v948 = vunpack.c.0.s8 %v947
          %v949 = vlaneseq
          %v950 = vshrl.u32 %v949, 7
          %v951 = vsub.s32 %v948, %v950
          %v952 = vrot.slane %v938, %v951
          %v953 = vcombine.low %v928, %v932
          %v954 = vcombine.high %v928, %v932
          %v956 = vunpack.c.l.s4 1983009808
          %v957 = vunpack.c.0.s8 %v956
          %v958 = vlaneseq
          %v959 = vshrl.u32 %v958, 7
          %v960 = vsub.s32 %v957, %v959
          %v961 = vrot.slane %v953, %v960
          %v963 = vunpack.c.l.s4 1983009808
          %v964 = vunpack.c.0.s8 %v963
          %v965 = vlaneseq
          %v966 = vshrl.u32 %v965, 7
          %v967 = vsub.s32 %v964, %v966
          %v968 = vrot.slane %v954, %v967
          %v969 = vcombine.low %v945, %v961
          %v970 = vcombine.high %v945, %v961
          %v972 = vunpack.c.l.s4 1934713408
          %v973 = vunpack.c.0.s8 %v972
          %v974 = vlaneseq
          %v975 = vshrl.u32 %v974, 7
          %v976 = vsub.s32 %v973, %v975
          %v977 = vrot.slane %v969, %v976
          %v979 = vunpack.c.l.s4 1934713408
          %v980 = vunpack.c.0.s8 %v979
          %v981 = vlaneseq
          %v982 = vshrl.u32 %v981, 7
          %v983 = vsub.s32 %v980, %v982
          %v984 = vrot.slane %v970, %v983
          %v985 = vcombine.low %v952, %v968
          %v986 = vcombine.high %v952, %v968
          %v988 = vunpack.c.l.s4 1934713408
          %v989 = vunpack.c.0.s8 %v988
          %v990 = vlaneseq
          %v991 = vshrl.u32 %v990, 7
          %v992 = vsub.s32 %v989, %v991
          %v993 = vrot.slane %v985, %v992
          %v995 = vunpack.c.l.s4 1934713408
          %v996 = vunpack.c.0.s8 %v995
          %v997 = vlaneseq
          %v998 = vshrl.u32 %v997, 7
          %v999 = vsub.s32 %v996, %v998
          %v1000 = vrot.slane %v986, %v999
          %v1001 = vcombine.high %v977, 0.0
          %v1002 = vcombine.high %v984, 0.0
          %v1003 = vcombine.high %v993, 0.0
          %v1004 = vcombine.high %v1000, 0.0
          %v1005 = vcombine.low %v977, %v984
          %v1007 = vunpack.c.l.s4 1983009808
          %v1008 = vunpack.c.0.s8 %v1007
          %v1009 = vlaneseq
          %v1010 = vshrl.u32 %v1009, 7
          %v1011 = vsub.s32 %v1008, %v1010
          %v1012 = vrot.slane %v1005, %v1011
          %v1013 = vcombine.low %v1001, %v1002
          %v1015 = vunpack.c.l.s4 1983009808
          %v1016 = vunpack.c.0.s8 %v1015
          %v1017 = vlaneseq
          %v1018 = vshrl.u32 %v1017, 7
          %v1019 = vsub.s32 %v1016, %v1018
          %v1020 = vrot.slane %v1013, %v1019
          %v1021 = vcombine.low %v993, %v1000
          %v1023 = vunpack.c.l.s4 1983009808
          %v1024 = vunpack.c.0.s8 %v1023
          %v1025 = vlaneseq
          %v1026 = vshrl.u32 %v1025, 7
          %v1027 = vsub.s32 %v1024, %v1026
          %v1028 = vrot.slane %v1021, %v1027
          %v1029 = vcombine.low %v1003, %v1004
          %v1031 = vunpack.c.l.s4 1983009808
          %v1032 = vunpack.c.0.s8 %v1031
          %v1033 = vlaneseq
          %v1034 = vshrl.u32 %v1033, 7
          %v1035 = vsub.s32 %v1032, %v1034
          %v1036 = vrot.slane %v1029, %v1035
          %v1037 = vcombine.low %v1012, %v1020
          %v1038 = vcombine.high %v1012, %v1020
          %v1040 = vunpack.c.l.s4 1934713408
          %v1041 = vunpack.c.0.s8 %v1040
          %v1042 = vlaneseq
          %v1043 = vshrl.u32 %v1042, 7
          %v1044 = vsub.s32 %v1041, %v1043
          %v1045 = vrot.slane %v1037, %v1044
          %v1047 = vunpack.c.l.s4 1934713408
          %v1048 = vunpack.c.0.s8 %v1047
          %v1049 = vlaneseq
          %v1050 = vshrl.u32 %v1049, 7
          %v1051 = vsub.s32 %v1048, %v1050
          %v1052 = vrot.slane %v1038, %v1051
          %v1053 = vcombine.low %v1028, %v1036
          %v1054 = vcombine.high %v1028, %v1036
          %v1056 = vunpack.c.l.s4 1934713408
          %v1057 = vunpack.c.0.s8 %v1056
          %v1058 = vlaneseq
          %v1059 = vshrl.u32 %v1058, 7
          %v1060 = vsub.s32 %v1057, %v1059
          %v1061 = vrot.slane %v1053, %v1060
          %v1063 = vunpack.c.l.s4 1934713408
          %v1064 = vunpack.c.0.s8 %v1063
          %v1065 = vlaneseq
          %v1066 = vshrl.u32 %v1065, 7
          %v1067 = vsub.s32 %v1064, %v1066
          %v1068 = vrot.slane %v1054, %v1067
          %v1069 = vcombine.low %v1045, %v1061
          %v1070 = vcombine.high %v1045, %v1061
          %v1071 = vcombine.low %v1052, %v1068
          %v1072 = vcombine.high %v1052, %v1068
          %v1073 = vpack.c.bf16 %v921, %v921
          %v1074 = vpack.c.bf16 %v922, %v922
          %v1075 = vpack.c.bf16 %v923, %v923
          %v1076 = vpack.c.bf16 %v924, %v924
          %vm1077 = vcmask 60416
          %1078 = vst.msk [vmem:[#allocation2] sm:$0xf] %vm1077, %v1073
          %1079 = vst.msk [vmem:[#allocation2 + $0x4] sm:$0xf] %vm1077, %v1074
          %1080 = vst.msk [vmem:[#allocation2 + $0x8] sm:$0xf] %vm1077, %v1075
          %1081 = vst.msk [vmem:[#allocation2 + $0xc] sm:$0xf] %vm1077, %v1076
          %v1082 = vpack.c.bf16 %v1069, %v1069
          %v1083 = vpack.c.bf16 %v1070, %v1070
          %v1084 = vpack.c.bf16 %v1071, %v1071
          %v1085 = vpack.c.bf16 %v1072, %v1072
          %1086 = vst.msk [vmem:[#allocation3] sm:$0xf] %vm1077, %v1082
          %1087 = vst.msk [vmem:[#allocation3 + $0x4] sm:$0xf] %vm1077, %v1083
          %1088 = vst.msk [vmem:[#allocation3 + $0x8] sm:$0xf] %vm1077, %v1084
          %1089 = vst.msk [vmem:[#allocation3 + $0xc] sm:$0xf] %vm1077, %v1085
        $region120: #{_lambda_.1} parent=83 // pred_fallthru
          _
        %vm1090 = vcmask 261120
        %v1091 = vsel %vm1090, %v675, 0.0
        %1092 = vadd.xlane.f32.xlu0 %v1091
        %v1093 = vpop.xlane.xlu0 %1092
        %v1094 = vrcp.pop 32.0
        %v1095 = vmul.f32 %v1093, %v1094
        %v1096 = vsub.f32 %v675, %v1095
        %v1097 = vmul.f32 %v1096, %v1096
        %v1098 = vsel %vm1090, %v1097, 0.0
        %1099 = vadd.xlane.f32.xlu0 %v1098
        %v1100 = vpop.xlane.xlu0 %1099
        %v1101 = vmul.f32 %v1100, %v1094
        %v1102 = vadd.f32 %v1101, 1e-05
        %v1103 = vrsqrt.pop %v1102
        %v1104 = vmul.f32 %v1096, %v1103
        %v1106 = vlaneseq
        %v1107 = vshrl.u32 %v1106, 7
        %v1108 = vsub.s32 0, %v1107
        %v1109 = vrot.slane %v676, %v1108
        %v1111 = vmul.f32 %v1104, %v1109
        %v1113 = vlaneseq
        %v1114 = vshrl.u32 %v1113, 7
        %v1115 = vsub.s32 0, %v1114
        %v1116 = vrot.slane %v677, %v1115
        %v1118 = vadd.f32 %v1111, %v1116
        %v1119 = vpack.c.bf16 %v1118, %v1118
        %v1120 = vld [vmem:[#allocation9] sm:$0xf]
        %v1121 = vld [vmem:[#allocation9 + $0x4] sm:$0xf]
        %v1122 = vld [vmem:[#allocation9 + $0x8] sm:$0xf]
        %v1123 = vld [vmem:[#allocation9 + $0xc] sm:$0xf]
        %v1124 = vld [vmem:[#allocation10] sm:$0x1]
        %v1126 = vlaneseq
        %v1127 = vshrl.u32 %v1126, 7
        %v1128 = vsub.s32 0, %v1127
        %v1129 = vrot.slane %v1124, %v1128
        %v1135 = vunpack.c.l.b16 %v1120
        %v1136 = vunpack.c.l.b16 %v1121
        %v1137 = vunpack.c.l.b16 %v1122
        %v1138 = vunpack.c.l.b16 %v1123
        %v1139 = vpack.c.b16 %v1136, %v1135
        %v1140 = vpack.c.b16 %v1138, %v1137
        %v1144 = vsel %vm1090, %v1119, 0
        %1146 = vmatprep.subr.bf16.mxu0 0
        %1147 = vmatpush1.bf16.msra.mxu0 %v1139
        %1148 = vmatprep.subr.bf16.mxu0 0
        %1149 = vmatpush1.bf16.msra.mxu0 %v1140
        %1150 = vmatprep.subr.bf16.mxu0 0
        %1151 = vmatpush1.bf16.msra.mxu0 0
        %1152 = vmatprep.subr.bf16.mxu0 0
        %1153 = vmatpush1.bf16.msra.mxu0 0
        %1154 = vmatprep.subr.bf16.mxu0 0
        %1155 = vmatpush1.bf16.msra.mxu0 0
        %1156 = vmatprep.subr.bf16.mxu0 0
        %1157 = vmatpush1.bf16.msra.mxu0 0
        %1158 = vmatprep.subr.bf16.mxu0 0
        %1159 = vmatpush1.bf16.msra.mxu0 0
        %1160 = vmatprep.subr.bf16.mxu0 0
        %1161 = vmatpush1.bf16.msra.mxu0 0
        %1162 = vmatprep.subr.bf16.mxu0 0
        %1163 = vmatpush1.bf16.msra.mxu0 0
        %1164 = vmatprep.subr.bf16.mxu0 0
        %1165 = vmatpush1.bf16.msra.mxu0 0
        %1166 = vmatprep.subr.bf16.mxu0 0
        %1167 = vmatpush1.bf16.msra.mxu0 0
        %1168 = vmatprep.subr.bf16.mxu0 0
        %1169 = vmatpush1.bf16.msra.mxu0 0
        %1170 = vmatprep.subr.bf16.mxu0 0
        %1171 = vmatpush1.bf16.msra.mxu0 0
        %1172 = vmatprep.subr.bf16.mxu0 0
        %1173 = vmatpush1.bf16.msra.mxu0 0
        %1174 = vmatprep.subr.bf16.mxu0 0
        %1175 = vmatpush1.bf16.msra.mxu0 0
        %1176 = vmatprep.subr.bf16.mxu0 0
        %1177 = vmatpush1.bf16.msra.mxu0 0
        %1178 = vmatprep.mubr.bf16.mxu0 0
        %1179 = vmatmul.mubr.bf16.gmra.mrb[0].mxu0 %v1144
        %v1180 = vpop.f32.mrb[0].mxu0
        %v1181 = vadd.f32 %v1129, %v1180
        %v1182 = vpop.f32.mrb[0].mxu0
        %v1183 = vpop.f32.mrb[0].mxu0
        %v1184 = vpop.f32.mrb[0].mxu0
        %1185 = vdwg.mxu0
        %1187 = vrot.lane.b32.xlu0 %v1181, 120
        %v1188 = vpop.permute.xlu0 %1187
        %1190 = vrot.lane.b32.xlu0 %v1181, 112
        %v1191 = vpop.permute.xlu0 %1190
        %1193 = vrot.lane.b32.xlu0 %v1181, 104
        %v1194 = vpop.permute.xlu0 %1193
        %v1196 = vcombine.low %v1181, %v1191
        %v1197 = vcombine.high %v1181, %v1191
        %v1199 = vunpack.c.l.s4 1983009808
        %v1200 = vunpack.c.0.s8 %v1199
        %v1201 = vlaneseq
        %v1202 = vshrl.u32 %v1201, 7
        %v1203 = vsub.s32 %v1200, %v1202
        %v1204 = vrot.slane %v1196, %v1203
        %v1206 = vunpack.c.l.s4 1983009808
        %v1207 = vunpack.c.0.s8 %v1206
        %v1208 = vlaneseq
        %v1209 = vshrl.u32 %v1208, 7
        %v1210 = vsub.s32 %v1207, %v1209
        %v1211 = vrot.slane %v1197, %v1210
        %v1212 = vcombine.low %v1188, %v1194
        %v1213 = vcombine.high %v1188, %v1194
        %v1215 = vunpack.c.l.s4 1983009808
        %v1216 = vunpack.c.0.s8 %v1215
        %v1217 = vlaneseq
        %v1218 = vshrl.u32 %v1217, 7
        %v1219 = vsub.s32 %v1216, %v1218
        %v1220 = vrot.slane %v1212, %v1219
        %v1222 = vunpack.c.l.s4 1983009808
        %v1223 = vunpack.c.0.s8 %v1222
        %v1224 = vlaneseq
        %v1225 = vshrl.u32 %v1224, 7
        %v1226 = vsub.s32 %v1223, %v1225
        %v1227 = vrot.slane %v1213, %v1226
        %v1228 = vcombine.low %v1204, %v1220
        %v1229 = vcombine.high %v1204, %v1220
        %v1231 = vunpack.c.l.s4 1934713408
        %v1232 = vunpack.c.0.s8 %v1231
        %v1233 = vlaneseq
        %v1234 = vshrl.u32 %v1233, 7
        %v1235 = vsub.s32 %v1232, %v1234
        %v1236 = vrot.slane %v1228, %v1235
        %v1238 = vunpack.c.l.s4 1934713408
        %v1239 = vunpack.c.0.s8 %v1238
        %v1240 = vlaneseq
        %v1241 = vshrl.u32 %v1240, 7
        %v1242 = vsub.s32 %v1239, %v1241
        %v1243 = vrot.slane %v1229, %v1242
        %v1244 = vcombine.low %v1211, %v1227
        %v1245 = vcombine.high %v1211, %v1227
        %v1247 = vunpack.c.l.s4 1934713408
        %v1248 = vunpack.c.0.s8 %v1247
        %v1249 = vlaneseq
        %v1250 = vshrl.u32 %v1249, 7
        %v1251 = vsub.s32 %v1248, %v1250
        %v1252 = vrot.slane %v1244, %v1251
        %v1254 = vunpack.c.l.s4 1934713408
        %v1255 = vunpack.c.0.s8 %v1254
        %v1256 = vlaneseq
        %v1257 = vshrl.u32 %v1256, 7
        %v1258 = vsub.s32 %v1255, %v1257
        %v1259 = vrot.slane %v1245, %v1258
        %v1260 = vcombine.high %v1236, 0.0
        %v1261 = vcombine.high %v1243, 0.0
        %v1262 = vcombine.high %v1252, 0.0
        %v1263 = vcombine.high %v1259, 0.0
        %v1264 = vcombine.low %v1236, %v1243
        %v1266 = vunpack.c.l.s4 1983009808
        %v1267 = vunpack.c.0.s8 %v1266
        %v1268 = vlaneseq
        %v1269 = vshrl.u32 %v1268, 7
        %v1270 = vsub.s32 %v1267, %v1269
        %v1271 = vrot.slane %v1264, %v1270
        %v1272 = vcombine.low %v1260, %v1261
        %v1274 = vunpack.c.l.s4 1983009808
        %v1275 = vunpack.c.0.s8 %v1274
        %v1276 = vlaneseq
        %v1277 = vshrl.u32 %v1276, 7
        %v1278 = vsub.s32 %v1275, %v1277
        %v1279 = vrot.slane %v1272, %v1278
        %v1280 = vcombine.low %v1252, %v1259
        %v1282 = vunpack.c.l.s4 1983009808
        %v1283 = vunpack.c.0.s8 %v1282
        %v1284 = vlaneseq
        %v1285 = vshrl.u32 %v1284, 7
        %v1286 = vsub.s32 %v1283, %v1285
        %v1287 = vrot.slane %v1280, %v1286
        %v1288 = vcombine.low %v1262, %v1263
        %v1290 = vunpack.c.l.s4 1983009808
        %v1291 = vunpack.c.0.s8 %v1290
        %v1292 = vlaneseq
        %v1293 = vshrl.u32 %v1292, 7
        %v1294 = vsub.s32 %v1291, %v1293
        %v1295 = vrot.slane %v1288, %v1294
        %v1296 = vcombine.low %v1271, %v1279
        %v1297 = vcombine.high %v1271, %v1279
        %v1299 = vunpack.c.l.s4 1934713408
        %v1300 = vunpack.c.0.s8 %v1299
        %v1301 = vlaneseq
        %v1302 = vshrl.u32 %v1301, 7
        %v1303 = vsub.s32 %v1300, %v1302
        %v1304 = vrot.slane %v1296, %v1303
        %v1306 = vunpack.c.l.s4 1934713408
        %v1307 = vunpack.c.0.s8 %v1306
        %v1308 = vlaneseq
        %v1309 = vshrl.u32 %v1308, 7
        %v1310 = vsub.s32 %v1307, %v1309
        %v1311 = vrot.slane %v1297, %v1310
        %v1312 = vcombine.low %v1287, %v1295
        %v1313 = vcombine.high %v1287, %v1295
        %v1315 = vunpack.c.l.s4 1934713408
        %v1316 = vunpack.c.0.s8 %v1315
        %v1317 = vlaneseq
        %v1318 = vshrl.u32 %v1317, 7
        %v1319 = vsub.s32 %v1316, %v1318
        %v1320 = vrot.slane %v1312, %v1319
        %v1322 = vunpack.c.l.s4 1934713408
        %v1323 = vunpack.c.0.s8 %v1322
        %v1324 = vlaneseq
        %v1325 = vshrl.u32 %v1324, 7
        %v1326 = vsub.s32 %v1323, %v1325
        %v1327 = vrot.slane %v1313, %v1326
        %v1328 = vcombine.low %v1304, %v1320
        %v1329 = vcombine.high %v1304, %v1320
        %v1330 = vcombine.low %v1311, %v1327
        %v1331 = vcombine.high %v1311, %v1327
        %v1332 = vpack.c.bf16 %v1328, %v1328
        %v1333 = vpack.c.bf16 %v1329, %v1329
        %v1334 = vpack.c.bf16 %v1330, %v1330
        %v1335 = vpack.c.bf16 %v1331, %v1331
        %v1336 = vld [vmem:[#allocation2] sm:$0xf]
        %v1337 = vld [vmem:[#allocation2 + $0x4] sm:$0xf]
        %v1338 = vld [vmem:[#allocation2 + $0x8] sm:$0xf]
        %v1339 = vld [vmem:[#allocation2 + $0xc] sm:$0xf]
        %vm1340 = vcmask 64512
        %v1342 = vsel %vm1340, %v1332, 0
        %v1345 = vsel %vm1340, %v1336, 0
        %1347 = vmatprep.subr.bf16.mxu0 0
        %1348 = vmatpush1.bf16.xpose.msra.mxu0 %v1345
        %1349 = vmatprep.subr.bf16.mxu0 0
        %1350 = vmatpush1.bf16.xpose.msra.mxu0 0
        %1351 = vmatprep.subr.bf16.mxu0 0
        %1352 = vmatpush1.bf16.xpose.msra.mxu0 0
        %1353 = vmatprep.subr.bf16.mxu0 0
        %1354 = vmatpush1.bf16.xpose.msra.mxu0 0
        %1355 = vmatprep.subr.bf16.mxu0 0
        %1356 = vmatpush1.bf16.xpose.msra.mxu0 0
        %1357 = vmatprep.subr.bf16.mxu0 0
        %1358 = vmatpush1.bf16.xpose.msra.mxu0 0
        %1359 = vmatprep.subr.bf16.mxu0 0
        %1360 = vmatpush1.bf16.xpose.msra.mxu0 0
        %1361 = vmatprep.subr.bf16.mxu0 0
        %1362 = vmatpush1.bf16.xpose.msra.mxu0 0
        %1363 = vmatprep.subr.bf16.mxu0 0
        %1364 = vmatpush1.bf16.xpose.msra.mxu0 0
        %1365 = vmatprep.subr.bf16.mxu0 0
        %1366 = vmatpush1.bf16.xpose.msra.mxu0 0
        %1367 = vmatprep.subr.bf16.mxu0 0
        %1368 = vmatpush1.bf16.xpose.msra.mxu0 0
        %1369 = vmatprep.subr.bf16.mxu0 0
        %1370 = vmatpush1.bf16.xpose.msra.mxu0 0
        %1371 = vmatprep.subr.bf16.mxu0 0
        %1372 = vmatpush1.bf16.xpose.msra.mxu0 0
        %1373 = vmatprep.subr.bf16.mxu0 0
        %1374 = vmatpush1.bf16.xpose.msra.mxu0 0
        %1375 = vmatprep.subr.bf16.mxu0 0
        %1376 = vmatpush1.bf16.xpose.msra.mxu0 0
        %1377 = vmatprep.subr.bf16.mxu0 0
        %1378 = vmatpush1.bf16.xpose.msra.mxu0 0
        %1379 = vmatprep.mubr.bf16.mxu0 0
        %1380 = vmatmul.mubr.bf16.gmra.mrb[0].mxu0 %v1342
        %v1381 = vpop.f32.mrb[0].mxu0
        %v1382 = vadd.f32 0.0, %v1381
        %v1383 = vpop.f32.mrb[0].mxu0
        %v1384 = vpop.f32.mrb[0].mxu0
        %v1385 = vpop.f32.mrb[0].mxu0
        %1386 = vdwg.mxu0
        %v1388 = vsel %vm1340, %v1333, 0
        %v1391 = vsel %vm1340, %v1337, 0
        %1393 = vmatprep.subr.bf16.mxu0 0
        %1394 = vmatpush1.bf16.xpose.msra.mxu0 %v1391
        %1395 = vmatprep.subr.bf16.mxu0 0
        %1396 = vmatpush1.bf16.xpose.msra.mxu0 0
        %1397 = vmatprep.subr.bf16.mxu0 0
        %1398 = vmatpush1.bf16.xpose.msra.mxu0 0
        %1399 = vmatprep.subr.bf16.mxu0 0
        %1400 = vmatpush1.bf16.xpose.msra.mxu0 0
        %1401 = vmatprep.subr.bf16.mxu0 0
        %1402 = vmatpush1.bf16.xpose.msra.mxu0 0
        %1403 = vmatprep.subr.bf16.mxu0 0
        %1404 = vmatpush1.bf16.xpose.msra.mxu0 0
        %1405 = vmatprep.subr.bf16.mxu0 0
        %1406 = vmatpush1.bf16.xpose.msra.mxu0 0
        %1407 = vmatprep.subr.bf16.mxu0 0
        %1408 = vmatpush1.bf16.xpose.msra.mxu0 0
        %1409 = vmatprep.subr.bf16.mxu0 0
        %1410 = vmatpush1.bf16.xpose.msra.mxu0 0
        %1411 = vmatprep.subr.bf16.mxu0 0
        %1412 = vmatpush1.bf16.xpose.msra.mxu0 0
        %1413 = vmatprep.subr.bf16.mxu0 0
        %1414 = vmatpush1.bf16.xpose.msra.mxu0 0
        %1415 = vmatprep.subr.bf16.mxu0 0
        %1416 = vmatpush1.bf16.xpose.msra.mxu0 0
        %1417 = vmatprep.subr.bf16.mxu0 0
        %1418 = vmatpush1.bf16.xpose.msra.mxu0 0
        %1419 = vmatprep.subr.bf16.mxu0 0
        %1420 = vmatpush1.bf16.xpose.msra.mxu0 0
        %1421 = vmatprep.subr.bf16.mxu0 0
        %1422 = vmatpush1.bf16.xpose.msra.mxu0 0
        %1423 = vmatprep.subr.bf16.mxu0 0
        %1424 = vmatpush1.bf16.xpose.msra.mxu0 0
        %1425 = vmatprep.mubr.bf16.mxu0 0
        %1426 = vmatmul.mubr.bf16.gmra.mrb[0].mxu0 %v1388
        %v1427 = vpop.f32.mrb[0].mxu0
        %v1428 = vadd.f32 0.0, %v1427
        %v1429 = vpop.f32.mrb[0].mxu0
        %v1430 = vpop.f32.mrb[0].mxu0
        %v1431 = vpop.f32.mrb[0].mxu0
        %1432 = vdwg.mxu0
        %v1434 = vsel %vm1340, %v1334, 0
        %v1437 = vsel %vm1340, %v1338, 0
        %1439 = vmatprep.subr.bf16.mxu0 0
        %1440 = vmatpush1.bf16.xpose.msra.mxu0 %v1437
        %1441 = vmatprep.subr.bf16.mxu0 0
        %1442 = vmatpush1.bf16.xpose.msra.mxu0 0
        %1443 = vmatprep.subr.bf16.mxu0 0
        %1444 = vmatpush1.bf16.xpose.msra.mxu0 0
        %1445 = vmatprep.subr.bf16.mxu0 0
        %1446 = vmatpush1.bf16.xpose.msra.mxu0 0
        %1447 = vmatprep.subr.bf16.mxu0 0
        %1448 = vmatpush1.bf16.xpose.msra.mxu0 0
        %1449 = vmatprep.subr.bf16.mxu0 0
        %1450 = vmatpush1.bf16.xpose.msra.mxu0 0
        %1451 = vmatprep.subr.bf16.mxu0 0
        %1452 = vmatpush1.bf16.xpose.msra.mxu0 0
        %1453 = vmatprep.subr.bf16.mxu0 0
        %1454 = vmatpush1.bf16.xpose.msra.mxu0 0
        %1455 = vmatprep.subr.bf16.mxu0 0
        %1456 = vmatpush1.bf16.xpose.msra.mxu0 0
        %1457 = vmatprep.subr.bf16.mxu0 0
        %1458 = vmatpush1.bf16.xpose.msra.mxu0 0
        %1459 = vmatprep.subr.bf16.mxu0 0
        %1460 = vmatpush1.bf16.xpose.msra.mxu0 0
        %1461 = vmatprep.subr.bf16.mxu0 0
        %1462 = vmatpush1.bf16.xpose.msra.mxu0 0
        %1463 = vmatprep.subr.bf16.mxu0 0
        %1464 = vmatpush1.bf16.xpose.msra.mxu0 0
        %1465 = vmatprep.subr.bf16.mxu0 0
        %1466 = vmatpush1.bf16.xpose.msra.mxu0 0
        %1467 = vmatprep.subr.bf16.mxu0 0
        %1468 = vmatpush1.bf16.xpose.msra.mxu0 0
        %1469 = vmatprep.subr.bf16.mxu0 0
        %1470 = vmatpush1.bf16.xpose.msra.mxu0 0
        %1471 = vmatprep.mubr.bf16.mxu0 0
        %1472 = vmatmul.mubr.bf16.gmra.mrb[0].mxu0 %v1434
        %v1473 = vpop.f32.mrb[0].mxu0
        %v1474 = vadd.f32 0.0, %v1473
        %v1475 = vpop.f32.mrb[0].mxu0
        %v1476 = vpop.f32.mrb[0].mxu0
        %v1477 = vpop.f32.mrb[0].mxu0
        %1478 = vdwg.mxu0
        %v1480 = vsel %vm1340, %v1335, 0
        %v1483 = vsel %vm1340, %v1339, 0
        %1485 = vmatprep.subr.bf16.mxu0 0
        %1486 = vmatpush1.bf16.xpose.msra.mxu0 %v1483
        %1487 = vmatprep.subr.bf16.mxu0 0
        %1488 = vmatpush1.bf16.xpose.msra.mxu0 0
        %1489 = vmatprep.subr.bf16.mxu0 0
        %1490 = vmatpush1.bf16.xpose.msra.mxu0 0
        %1491 = vmatprep.subr.bf16.mxu0 0
        %1492 = vmatpush1.bf16.xpose.msra.mxu0 0
        %1493 = vmatprep.subr.bf16.mxu0 0
        %1494 = vmatpush1.bf16.xpose.msra.mxu0 0
        %1495 = vmatprep.subr.bf16.mxu0 0
        %1496 = vmatpush1.bf16.xpose.msra.mxu0 0
        %1497 = vmatprep.subr.bf16.mxu0 0
        %1498 = vmatpush1.bf16.xpose.msra.mxu0 0
        %1499 = vmatprep.subr.bf16.mxu0 0
        %1500 = vmatpush1.bf16.xpose.msra.mxu0 0
        %1501 = vmatprep.subr.bf16.mxu0 0
        %1502 = vmatpush1.bf16.xpose.msra.mxu0 0
        %1503 = vmatprep.subr.bf16.mxu0 0
        %1504 = vmatpush1.bf16.xpose.msra.mxu0 0
        %1505 = vmatprep.subr.bf16.mxu0 0
        %1506 = vmatpush1.bf16.xpose.msra.mxu0 0
        %1507 = vmatprep.subr.bf16.mxu0 0
        %1508 = vmatpush1.bf16.xpose.msra.mxu0 0
        %1509 = vmatprep.subr.bf16.mxu0 0
        %1510 = vmatpush1.bf16.xpose.msra.mxu0 0
        %1511 = vmatprep.subr.bf16.mxu0 0
        %1512 = vmatpush1.bf16.xpose.msra.mxu0 0
        %1513 = vmatprep.subr.bf16.mxu0 0
        %1514 = vmatpush1.bf16.xpose.msra.mxu0 0
        %1515 = vmatprep.subr.bf16.mxu0 0
        %1516 = vmatpush1.bf16.xpose.msra.mxu0 0
        %1517 = vmatprep.mubr.bf16.mxu0 0
        %1518 = vmatmul.mubr.bf16.gmra.mrb[0].mxu0 %v1480
        %v1519 = vpop.f32.mrb[0].mxu0
        %v1520 = vadd.f32 0.0, %v1519
        %v1521 = vpop.f32.mrb[0].mxu0
        %v1522 = vpop.f32.mrb[0].mxu0
        %v1523 = vpop.f32.mrb[0].mxu0
        %1524 = vdwg.mxu0
        %v1525 = vsel %vm1340, %v1382, -inf
        %1526 = vmax.xlane.f32.xlu0 %v1525
        %v1527 = vpop.xlane.xlu0 %1526
        %v1528 = vsel %vm1340, %v1428, -inf
        %1529 = vmax.xlane.f32.xlu0 %v1528
        %v1530 = vpop.xlane.xlu0 %1529
        %v1531 = vsel %vm1340, %v1474, -inf
        %1532 = vmax.xlane.f32.xlu0 %v1531
        %v1533 = vpop.xlane.xlu0 %1532
        %v1534 = vsel %vm1340, %v1520, -inf
        %1535 = vmax.xlane.f32.xlu0 %v1534
        %v1536 = vpop.xlane.xlu0 %1535
        %v1537 = vsub.f32 %v1382, %v1527
        %v1538 = vsub.f32 %v1428, %v1530
        %v1539 = vsub.f32 %v1474, %v1533
        %v1540 = vsub.f32 %v1520, %v1536
        %v1541 = vmul.f32 %v1537, 1.442695
        %v1542 = vpow.pop %v1541
        %v1543 = vmul.f32 %v1538, 1.442695
        %v1544 = vpow.pop %v1543
        %v1545 = vmul.f32 %v1539, 1.442695
        %v1546 = vpow.pop %v1545
        %v1547 = vmul.f32 %v1540, 1.442695
        %v1548 = vpow.pop %v1547
        %v1549 = vsel %vm1340, %v1542, 0.0
        %1550 = vadd.xlane.f32.xlu0 %v1549
        %v1551 = vpop.xlane.xlu0 %1550
        %v1552 = vsel %vm1340, %v1544, 0.0
        %1553 = vadd.xlane.f32.xlu0 %v1552
        %v1554 = vpop.xlane.xlu0 %1553
        %v1555 = vsel %vm1340, %v1546, 0.0
        %1556 = vadd.xlane.f32.xlu0 %v1555
        %v1557 = vpop.xlane.xlu0 %1556
        %v1558 = vsel %vm1340, %v1548, 0.0
        %1559 = vadd.xlane.f32.xlu0 %v1558
        %v1560 = vpop.xlane.xlu0 %1559
        %v1561 = vpack.c.bf16 %v1542, %v1542
        %v1562 = vpack.c.bf16 %v1544, %v1544
        %v1563 = vpack.c.bf16 %v1546, %v1546
        %v1564 = vpack.c.bf16 %v1548, %v1548
        %v1565 = vld [vmem:[#allocation3] sm:$0xf]
        %v1566 = vld [vmem:[#allocation3 + $0x4] sm:$0xf]
        %v1567 = vld [vmem:[#allocation3 + $0x8] sm:$0xf]
        %v1568 = vld [vmem:[#allocation3 + $0xc] sm:$0xf]
        %v1570 = vsel %vm1340, %v1561, 0
        %vm1572 = vcmask 1043456
        %v1574 = vsel %vm1572, %v1565, 0
        %1576 = vmatprep.subr.bf16.mxu0 0
        %1577 = vmatpush1.bf16.msra.mxu0 %v1574
        %1578 = vmatprep.subr.bf16.mxu0 0
        %1579 = vmatpush1.bf16.msra.mxu0 0
        %1580 = vmatprep.subr.bf16.mxu0 0
        %1581 = vmatpush1.bf16.msra.mxu0 0
        %1582 = vmatprep.subr.bf16.mxu0 0
        %1583 = vmatpush1.bf16.msra.mxu0 0
        %1584 = vmatprep.subr.bf16.mxu0 0
        %1585 = vmatpush1.bf16.msra.mxu0 0
        %1586 = vmatprep.subr.bf16.mxu0 0
        %1587 = vmatpush1.bf16.msra.mxu0 0
        %1588 = vmatprep.subr.bf16.mxu0 0
        %1589 = vmatpush1.bf16.msra.mxu0 0
        %1590 = vmatprep.subr.bf16.mxu0 0
        %1591 = vmatpush1.bf16.msra.mxu0 0
        %1592 = vmatprep.subr.bf16.mxu0 0
        %1593 = vmatpush1.bf16.msra.mxu0 0
        %1594 = vmatprep.subr.bf16.mxu0 0
        %1595 = vmatpush1.bf16.msra.mxu0 0
        %1596 = vmatprep.subr.bf16.mxu0 0
        %1597 = vmatpush1.bf16.msra.mxu0 0
        %1598 = vmatprep.subr.bf16.mxu0 0
        %1599 = vmatpush1.bf16.msra.mxu0 0
        %1600 = vmatprep.subr.bf16.mxu0 0
        %1601 = vmatpush1.bf16.msra.mxu0 0
        %1602 = vmatprep.subr.bf16.mxu0 0
        %1603 = vmatpush1.bf16.msra.mxu0 0
        %1604 = vmatprep.subr.bf16.mxu0 0
        %1605 = vmatpush1.bf16.msra.mxu0 0
        %1606 = vmatprep.subr.bf16.mxu0 0
        %1607 = vmatpush1.bf16.msra.mxu0 0
        %1608 = vmatprep.mubr.bf16.mxu0 0
        %1609 = vmatmul.mubr.bf16.gmra.mrb[0].mxu0 %v1570
        %v1610 = vpop.f32.mrb[0].mxu0
        %v1611 = vadd.f32 0.0, %v1610
        %v1612 = vpop.f32.mrb[0].mxu0
        %v1613 = vpop.f32.mrb[0].mxu0
        %v1614 = vpop.f32.mrb[0].mxu0
        %1615 = vdwg.mxu0
        %v1617 = vsel %vm1340, %v1562, 0
        %v1620 = vsel %vm1572, %v1566, 0
        %1622 = vmatprep.subr.bf16.mxu0 0
        %1623 = vmatpush1.bf16.msra.mxu0 %v1620
        %1624 = vmatprep.subr.bf16.mxu0 0
        %1625 = vmatpush1.bf16.msra.mxu0 0
        %1626 = vmatprep.subr.bf16.mxu0 0
        %1627 = vmatpush1.bf16.msra.mxu0 0
        %1628 = vmatprep.subr.bf16.mxu0 0
        %1629 = vmatpush1.bf16.msra.mxu0 0
        %1630 = vmatprep.subr.bf16.mxu0 0
        %1631 = vmatpush1.bf16.msra.mxu0 0
        %1632 = vmatprep.subr.bf16.mxu0 0
        %1633 = vmatpush1.bf16.msra.mxu0 0
        %1634 = vmatprep.subr.bf16.mxu0 0
        %1635 = vmatpush1.bf16.msra.mxu0 0
        %1636 = vmatprep.subr.bf16.mxu0 0
        %1637 = vmatpush1.bf16.msra.mxu0 0
        %1638 = vmatprep.subr.bf16.mxu0 0
        %1639 = vmatpush1.bf16.msra.mxu0 0
        %1640 = vmatprep.subr.bf16.mxu0 0
        %1641 = vmatpush1.bf16.msra.mxu0 0
        %1642 = vmatprep.subr.bf16.mxu0 0
        %1643 = vmatpush1.bf16.msra.mxu0 0
        %1644 = vmatprep.subr.bf16.mxu0 0
        %1645 = vmatpush1.bf16.msra.mxu0 0
        %1646 = vmatprep.subr.bf16.mxu0 0
        %1647 = vmatpush1.bf16.msra.mxu0 0
        %1648 = vmatprep.subr.bf16.mxu0 0
        %1649 = vmatpush1.bf16.msra.mxu0 0
        %1650 = vmatprep.subr.bf16.mxu0 0
        %1651 = vmatpush1.bf16.msra.mxu0 0
        %1652 = vmatprep.subr.bf16.mxu0 0
        %1653 = vmatpush1.bf16.msra.mxu0 0
        %1654 = vmatprep.mubr.bf16.mxu0 0
        %1655 = vmatmul.mubr.bf16.gmra.mrb[0].mxu0 %v1617
        %v1656 = vpop.f32.mrb[0].mxu0
        %v1657 = vadd.f32 0.0, %v1656
        %v1658 = vpop.f32.mrb[0].mxu0
        %v1659 = vpop.f32.mrb[0].mxu0
        %v1660 = vpop.f32.mrb[0].mxu0
        %1661 = vdwg.mxu0
        %v1663 = vsel %vm1340, %v1563, 0
        %v1666 = vsel %vm1572, %v1567, 0
        %1668 = vmatprep.subr.bf16.mxu0 0
        %1669 = vmatpush1.bf16.msra.mxu0 %v1666
        %1670 = vmatprep.subr.bf16.mxu0 0
        %1671 = vmatpush1.bf16.msra.mxu0 0
        %1672 = vmatprep.subr.bf16.mxu0 0
        %1673 = vmatpush1.bf16.msra.mxu0 0
        %1674 = vmatprep.subr.bf16.mxu0 0
        %1675 = vmatpush1.bf16.msra.mxu0 0
        %1676 = vmatprep.subr.bf16.mxu0 0
        %1677 = vmatpush1.bf16.msra.mxu0 0
        %1678 = vmatprep.subr.bf16.mxu0 0
        %1679 = vmatpush1.bf16.msra.mxu0 0
        %1680 = vmatprep.subr.bf16.mxu0 0
        %1681 = vmatpush1.bf16.msra.mxu0 0
        %1682 = vmatprep.subr.bf16.mxu0 0
        %1683 = vmatpush1.bf16.msra.mxu0 0
        %1684 = vmatprep.subr.bf16.mxu0 0
        %1685 = vmatpush1.bf16.msra.mxu0 0
        %1686 = vmatprep.subr.bf16.mxu0 0
        %1687 = vmatpush1.bf16.msra.mxu0 0
        %1688 = vmatprep.subr.bf16.mxu0 0
        %1689 = vmatpush1.bf16.msra.mxu0 0
        %1690 = vmatprep.subr.bf16.mxu0 0
        %1691 = vmatpush1.bf16.msra.mxu0 0
        %1692 = vmatprep.subr.bf16.mxu0 0
        %1693 = vmatpush1.bf16.msra.mxu0 0
        %1694 = vmatprep.subr.bf16.mxu0 0
        %1695 = vmatpush1.bf16.msra.mxu0 0
        %1696 = vmatprep.subr.bf16.mxu0 0
        %1697 = vmatpush1.bf16.msra.mxu0 0
        %1698 = vmatprep.subr.bf16.mxu0 0
        %1699 = vmatpush1.bf16.msra.mxu0 0
        %1700 = vmatprep.mubr.bf16.mxu0 0
        %1701 = vmatmul.mubr.bf16.gmra.mrb[0].mxu0 %v1663
        %v1702 = vpop.f32.mrb[0].mxu0
        %v1703 = vadd.f32 0.0, %v1702
        %v1704 = vpop.f32.mrb[0].mxu0
        %v1705 = vpop.f32.mrb[0].mxu0
        %v1706 = vpop.f32.mrb[0].mxu0
        %1707 = vdwg.mxu0
        %v1709 = vsel %vm1340, %v1564, 0
        %v1712 = vsel %vm1572, %v1568, 0
        %1714 = vmatprep.subr.bf16.mxu0 0
        %1715 = vmatpush1.bf16.msra.mxu0 %v1712
        %1716 = vmatprep.subr.bf16.mxu0 0
        %1717 = vmatpush1.bf16.msra.mxu0 0
        %1718 = vmatprep.subr.bf16.mxu0 0
        %1719 = vmatpush1.bf16.msra.mxu0 0
        %1720 = vmatprep.subr.bf16.mxu0 0
        %1721 = vmatpush1.bf16.msra.mxu0 0
        %1722 = vmatprep.subr.bf16.mxu0 0
        %1723 = vmatpush1.bf16.msra.mxu0 0
        %1724 = vmatprep.subr.bf16.mxu0 0
        %1725 = vmatpush1.bf16.msra.mxu0 0
        %1726 = vmatprep.subr.bf16.mxu0 0
        %1727 = vmatpush1.bf16.msra.mxu0 0
        %1728 = vmatprep.subr.bf16.mxu0 0
        %1729 = vmatpush1.bf16.msra.mxu0 0
        %1730 = vmatprep.subr.bf16.mxu0 0
        %1731 = vmatpush1.bf16.msra.mxu0 0
        %1732 = vmatprep.subr.bf16.mxu0 0
        %1733 = vmatpush1.bf16.msra.mxu0 0
        %1734 = vmatprep.subr.bf16.mxu0 0
        %1735 = vmatpush1.bf16.msra.mxu0 0
        %1736 = vmatprep.subr.bf16.mxu0 0
        %1737 = vmatpush1.bf16.msra.mxu0 0
        %1738 = vmatprep.subr.bf16.mxu0 0
        %1739 = vmatpush1.bf16.msra.mxu0 0
        %1740 = vmatprep.subr.bf16.mxu0 0
        %1741 = vmatpush1.bf16.msra.mxu0 0
        %1742 = vmatprep.subr.bf16.mxu0 0
        %1743 = vmatpush1.bf16.msra.mxu0 0
        %1744 = vmatprep.subr.bf16.mxu0 0
        %1745 = vmatpush1.bf16.msra.mxu0 0
        %1746 = vmatprep.mubr.bf16.mxu0 0
        %1747 = vmatmul.mubr.bf16.gmra.mrb[0].mxu0 %v1709
        %v1748 = vpop.f32.mrb[0].mxu0
        %v1749 = vadd.f32 0.0, %v1748
        %v1750 = vpop.f32.mrb[0].mxu0
        %v1751 = vpop.f32.mrb[0].mxu0
        %v1752 = vpop.f32.mrb[0].mxu0
        %1753 = vdwg.mxu0
        %v1754 = vrcp.pop %v1551
        %v1755 = vrcp.pop %v1554
        %v1756 = vrcp.pop %v1557
        %v1757 = vrcp.pop %v1560
        %v1758 = vmul.f32 %v1611, %v1754
        %v1759 = vmul.f32 %v1657, %v1755
        %v1760 = vmul.f32 %v1703, %v1756
        %v1761 = vmul.f32 %v1749, %v1757
        %v1762 = vcombine.low %v1758, %v1760
        %v1763 = vcombine.high %v1758, %v1760
        %v1765 = vunpack.c.l.s4 1983009808
        %v1766 = vunpack.c.0.s8 %v1765
        %v1767 = vlaneseq
        %v1768 = vshrl.u32 %v1767, 7
        %v1769 = vsub.s32 %v1766, %v1768
        %v1770 = vrot.slane %v1762, %v1769
        %v1772 = vunpack.c.l.s4 1983009808
        %v1773 = vunpack.c.0.s8 %v1772
        %v1774 = vlaneseq
        %v1775 = vshrl.u32 %v1774, 7
        %v1776 = vsub.s32 %v1773, %v1775
        %v1777 = vrot.slane %v1763, %v1776
        %v1778 = vcombine.low %v1759, %v1761
        %v1779 = vcombine.high %v1759, %v1761
        %v1781 = vunpack.c.l.s4 1983009808
        %v1782 = vunpack.c.0.s8 %v1781
        %v1783 = vlaneseq
        %v1784 = vshrl.u32 %v1783, 7
        %v1785 = vsub.s32 %v1782, %v1784
        %v1786 = vrot.slane %v1778, %v1785
        %v1788 = vunpack.c.l.s4 1983009808
        %v1789 = vunpack.c.0.s8 %v1788
        %v1790 = vlaneseq
        %v1791 = vshrl.u32 %v1790, 7
        %v1792 = vsub.s32 %v1789, %v1791
        %v1793 = vrot.slane %v1779, %v1792
        %v1794 = vcombine.low %v1770, %v1786
        %v1795 = vcombine.high %v1770, %v1786
        %v1797 = vunpack.c.l.s4 1934713408
        %v1798 = vunpack.c.0.s8 %v1797
        %v1799 = vlaneseq
        %v1800 = vshrl.u32 %v1799, 7
        %v1801 = vsub.s32 %v1798, %v1800
        %v1802 = vrot.slane %v1794, %v1801
        %v1804 = vunpack.c.l.s4 1934713408
        %v1805 = vunpack.c.0.s8 %v1804
        %v1806 = vlaneseq
        %v1807 = vshrl.u32 %v1806, 7
        %v1808 = vsub.s32 %v1805, %v1807
        %v1809 = vrot.slane %v1795, %v1808
        %v1810 = vcombine.low %v1777, %v1793
        %v1811 = vcombine.high %v1777, %v1793
        %v1813 = vunpack.c.l.s4 1934713408
        %v1814 = vunpack.c.0.s8 %v1813
        %v1815 = vlaneseq
        %v1816 = vshrl.u32 %v1815, 7
        %v1817 = vsub.s32 %v1814, %v1816
        %v1818 = vrot.slane %v1810, %v1817
        %v1820 = vunpack.c.l.s4 1934713408
        %v1821 = vunpack.c.0.s8 %v1820
        %v1822 = vlaneseq
        %v1823 = vshrl.u32 %v1822, 7
        %v1824 = vsub.s32 %v1821, %v1823
        %v1825 = vrot.slane %v1811, %v1824
        %v1826 = vcombine.high %v1802, 0.0
        %v1827 = vcombine.high %v1809, 0.0
        %v1828 = vcombine.high %v1818, 0.0
        %v1829 = vcombine.high %v1825, 0.0
        %v1830 = vcombine.low %v1802, %v1809
        %v1832 = vunpack.c.l.s4 1983009808
        %v1833 = vunpack.c.0.s8 %v1832
        %v1834 = vlaneseq
        %v1835 = vshrl.u32 %v1834, 7
        %v1836 = vsub.s32 %v1833, %v1835
        %v1837 = vrot.slane %v1830, %v1836
        %v1838 = vcombine.low %v1826, %v1827
        %v1840 = vunpack.c.l.s4 1983009808
        %v1841 = vunpack.c.0.s8 %v1840
        %v1842 = vlaneseq
        %v1843 = vshrl.u32 %v1842, 7
        %v1844 = vsub.s32 %v1841, %v1843
        %v1845 = vrot.slane %v1838, %v1844
        %v1846 = vcombine.low %v1818, %v1825
        %v1848 = vunpack.c.l.s4 1983009808
        %v1849 = vunpack.c.0.s8 %v1848
        %v1850 = vlaneseq
        %v1851 = vshrl.u32 %v1850, 7
        %v1852 = vsub.s32 %v1849, %v1851
        %v1853 = vrot.slane %v1846, %v1852
        %v1854 = vcombine.low %v1828, %v1829
        %v1856 = vunpack.c.l.s4 1983009808
        %v1857 = vunpack.c.0.s8 %v1856
        %v1858 = vlaneseq
        %v1859 = vshrl.u32 %v1858, 7
        %v1860 = vsub.s32 %v1857, %v1859
        %v1861 = vrot.slane %v1854, %v1860
        %v1862 = vcombine.low %v1837, %v1845
        %v1863 = vcombine.high %v1837, %v1845
        %v1865 = vunpack.c.l.s4 1934713408
        %v1866 = vunpack.c.0.s8 %v1865
        %v1867 = vlaneseq
        %v1868 = vshrl.u32 %v1867, 7
        %v1869 = vsub.s32 %v1866, %v1868
        %v1870 = vrot.slane %v1862, %v1869
        %v1872 = vunpack.c.l.s4 1934713408
        %v1873 = vunpack.c.0.s8 %v1872
        %v1874 = vlaneseq
        %v1875 = vshrl.u32 %v1874, 7
        %v1876 = vsub.s32 %v1873, %v1875
        %v1877 = vrot.slane %v1863, %v1876
        %v1878 = vcombine.low %v1853, %v1861
        %v1879 = vcombine.high %v1853, %v1861
        %v1881 = vunpack.c.l.s4 1934713408
        %v1882 = vunpack.c.0.s8 %v1881
        %v1883 = vlaneseq
        %v1884 = vshrl.u32 %v1883, 7
        %v1885 = vsub.s32 %v1882, %v1884
        %v1886 = vrot.slane %v1878, %v1885
        %v1888 = vunpack.c.l.s4 1934713408
        %v1889 = vunpack.c.0.s8 %v1888
        %v1890 = vlaneseq
        %v1891 = vshrl.u32 %v1890, 7
        %v1892 = vsub.s32 %v1889, %v1891
        %v1893 = vrot.slane %v1879, %v1892
        %v1894 = vcombine.low %v1870, %v1886
        %v1895 = vcombine.high %v1870, %v1886
        %v1896 = vcombine.low %v1877, %v1893
        %v1897 = vcombine.high %v1877, %v1893
        %1899 = vrot.lane.b32.xlu0 %v1895, 8
        %v1900 = vpop.permute.xlu0 %1899
        %1903 = vrot.lane.b32.xlu0 %v1896, 16
        %v1904 = vpop.permute.xlu0 %1903
        %1907 = vrot.lane.b32.xlu0 %v1897, 24
        %v1908 = vpop.permute.xlu0 %1907
        %v1910 = vsel %vm1340, %v1894, %v1900
        %vm1911 = vcmask 130048
        %v1912 = vsel %vm1911, %v1910, %v1904
        %vm1913 = vcmask 195584
        %v1914 = vsel %vm1913, %v1912, %v1908
        %v1915 = vpack.c.bf16 %v1914, %v1914
        %v1916 = vld [vmem:[#allocation15] sm:$0xf]
        %v1917 = vld [vmem:[#allocation15 + $0x4] sm:$0xf]
        %v1918 = vld [vmem:[#allocation15 + $0x8] sm:$0xf]
        %v1919 = vld [vmem:[#allocation15 + $0xc] sm:$0xf]
        %v1920 = vld [vmem:[%s7] sm:$0x1]
        %v1922 = vlaneseq
        %v1923 = vshrl.u32 %v1922, 7
        %v1924 = vsub.s32 0, %v1923
        %v1925 = vrot.slane %v1920, %v1924
        %v1931 = vunpack.c.l.b16 %v1916
        %v1932 = vunpack.c.l.b16 %v1917
        %v1933 = vunpack.c.l.b16 %v1918
        %v1934 = vunpack.c.l.b16 %v1919
        %v1935 = vpack.c.b16 %v1932, %v1931
        %v1936 = vpack.c.b16 %v1934, %v1933
        %v1940 = vsel %vm1090, %v1915, 0
        %1942 = vmatprep.subr.bf16.mxu0 0
        %1943 = vmatpush1.bf16.msra.mxu0 %v1935
        %1944 = vmatprep.subr.bf16.mxu0 0
        %1945 = vmatpush1.bf16.msra.mxu0 %v1936
        %1946 = vmatprep.subr.bf16.mxu0 0
        %1947 = vmatpush1.bf16.msra.mxu0 0
        %1948 = vmatprep.subr.bf16.mxu0 0
        %1949 = vmatpush1.bf16.msra.mxu0 0
        %1950 = vmatprep.subr.bf16.mxu0 0
        %1951 = vmatpush1.bf16.msra.mxu0 0
        %1952 = vmatprep.subr.bf16.mxu0 0
        %1953 = vmatpush1.bf16.msra.mxu0 0
        %1954 = vmatprep.subr.bf16.mxu0 0
        %1955 = vmatpush1.bf16.msra.mxu0 0
        %1956 = vmatprep.subr.bf16.mxu0 0
        %1957 = vmatpush1.bf16.msra.mxu0 0
        %1958 = vmatprep.subr.bf16.mxu0 0
        %1959 = vmatpush1.bf16.msra.mxu0 0
        %1960 = vmatprep.subr.bf16.mxu0 0
        %1961 = vmatpush1.bf16.msra.mxu0 0
        %1962 = vmatprep.subr.bf16.mxu0 0
        %1963 = vmatpush1.bf16.msra.mxu0 0
        %1964 = vmatprep.subr.bf16.mxu0 0
        %1965 = vmatpush1.bf16.msra.mxu0 0
        %1966 = vmatprep.subr.bf16.mxu0 0
        %1967 = vmatpush1.bf16.msra.mxu0 0
        %1968 = vmatprep.subr.bf16.mxu0 0
        %1969 = vmatpush1.bf16.msra.mxu0 0
        %1970 = vmatprep.subr.bf16.mxu0 0
        %1971 = vmatpush1.bf16.msra.mxu0 0
        %1972 = vmatprep.subr.bf16.mxu0 0
        %1973 = vmatpush1.bf16.msra.mxu0 0
        %1974 = vmatprep.mubr.bf16.mxu0 0
        %1975 = vmatmul.mubr.bf16.gmra.mrb[0].mxu0 %v1940
        %v1976 = vpop.f32.mrb[0].mxu0
        %v1977 = vadd.f32 %v1925, %v1976
        %v1978 = vpop.f32.mrb[0].mxu0
        %v1979 = vpop.f32.mrb[0].mxu0
        %v1980 = vpop.f32.mrb[0].mxu0
        %1981 = vdwg.mxu0
        %v1982 = vadd.f32 %v1118, %v1977
        %v1983 = vld [vmem:[%s10] sm:$0x1]
        %v1984 = vld [vmem:[%s11] sm:$0x1]
        %v1985 = vsel %vm1090, %v1982, 0.0
        %1986 = vadd.xlane.f32.xlu0 %v1985
        %v1987 = vpop.xlane.xlu0 %1986
        %v1988 = vmul.f32 %v1987, %v1094
        %v1989 = vsub.f32 %v1982, %v1988
        %v1990 = vmul.f32 %v1989, %v1989
        %v1991 = vsel %vm1090, %v1990, 0.0
        %1992 = vadd.xlane.f32.xlu0 %v1991
        %v1993 = vpop.xlane.xlu0 %1992
        %v1994 = vmul.f32 %v1993, %v1094
        %v1995 = vadd.f32 %v1994, 1e-05
        %v1996 = vrsqrt.pop %v1995
        %v1997 = vmul.f32 %v1989, %v1996
        %v1999 = vlaneseq
        %v2000 = vshrl.u32 %v1999, 7
        %v2001 = vsub.s32 0, %v2000
        %v2002 = vrot.slane %v1983, %v2001
        %v2004 = vmul.f32 %v1997, %v2002
        %v2006 = vlaneseq
        %v2007 = vshrl.u32 %v2006, 7
        %v2008 = vsub.s32 0, %v2007
        %v2009 = vrot.slane %v1984, %v2008
        %v2011 = vadd.f32 %v2004, %v2009
        %v2012 = vpack.c.bf16 %v2011, %v2011
        %v2013 = vld [vmem:[#allocation16] sm:$0xf]
        %v2014 = vld [vmem:[#allocation16 + $0x4] sm:$0xf]
        %v2015 = vld [vmem:[#allocation16 + $0x8] sm:$0xf]
        %v2016 = vld [vmem:[#allocation16 + $0xc] sm:$0xf]
        %v2017 = vld [vmem:[%s13] sm:$0x1]
        %v2019 = vlaneseq
        %v2020 = vshrl.u32 %v2019, 7
        %v2021 = vsub.s32 0, %v2020
        %v2022 = vrot.slane %v2017, %v2021
        %v2028 = vunpack.c.l.b16 %v2013
        %v2029 = vunpack.c.l.b16 %v2014
        %v2030 = vunpack.c.l.b16 %v2015
        %v2031 = vunpack.c.l.b16 %v2016
        %v2032 = vpack.c.b16 %v2029, %v2028
        %v2033 = vpack.c.b16 %v2031, %v2030
        %v2037 = vsel %vm1090, %v2012, 0
        %2039 = vmatprep.subr.bf16.mxu0 0
        %2040 = vmatpush1.bf16.msra.mxu0 %v2032
        %2041 = vmatprep.subr.bf16.mxu0 0
        %2042 = vmatpush1.bf16.msra.mxu0 %v2033
        %2043 = vmatprep.subr.bf16.mxu0 0
        %2044 = vmatpush1.bf16.msra.mxu0 0
        %2045 = vmatprep.subr.bf16.mxu0 0
        %2046 = vmatpush1.bf16.msra.mxu0 0
        %2047 = vmatprep.subr.bf16.mxu0 0
        %2048 = vmatpush1.bf16.msra.mxu0 0
        %2049 = vmatprep.subr.bf16.mxu0 0
        %2050 = vmatpush1.bf16.msra.mxu0 0
        %2051 = vmatprep.subr.bf16.mxu0 0
        %2052 = vmatpush1.bf16.msra.mxu0 0
        %2053 = vmatprep.subr.bf16.mxu0 0
        %2054 = vmatpush1.bf16.msra.mxu0 0
        %2055 = vmatprep.subr.bf16.mxu0 0
        %2056 = vmatpush1.bf16.msra.mxu0 0
        %2057 = vmatprep.subr.bf16.mxu0 0
        %2058 = vmatpush1.bf16.msra.mxu0 0
        %2059 = vmatprep.subr.bf16.mxu0 0
        %2060 = vmatpush1.bf16.msra.mxu0 0
        %2061 = vmatprep.subr.bf16.mxu0 0
        %2062 = vmatpush1.bf16.msra.mxu0 0
        %2063 = vmatprep.subr.bf16.mxu0 0
        %2064 = vmatpush1.bf16.msra.mxu0 0
        %2065 = vmatprep.subr.bf16.mxu0 0
        %2066 = vmatpush1.bf16.msra.mxu0 0
        %2067 = vmatprep.subr.bf16.mxu0 0
        %2068 = vmatpush1.bf16.msra.mxu0 0
        %2069 = vmatprep.subr.bf16.mxu0 0
        %2070 = vmatpush1.bf16.msra.mxu0 0
        %2071 = vmatprep.mubr.bf16.mxu0 0
        %2072 = vmatmul.mubr.bf16.gmra.mrb[0].mxu0 %v2037
        %v2073 = vpop.f32.mrb[0].mxu0
        %v2074 = vadd.f32 %v2022, %v2073
        %v2075 = vpop.f32.mrb[0].mxu0
        %v2076 = vpop.f32.mrb[0].mxu0
        %v2077 = vpop.f32.mrb[0].mxu0
        %2078 = vdwg.mxu0
        %v2079 = vmul.f32 %v2074, 0.5
        %v2080 = vmul.f32 %v2074, 0.70710677
        %v2081 = verf.f32.pop %v2080
        %v2082 = vadd.f32 %v2081, 1.0
        %v2083 = vmul.f32 %v2079, %v2082
        %v2084 = vpack.c.bf16 %v2083, %v2083
        %v2085 = vld [vmem:[%s14] sm:$0xf]
        %v2086 = vld [vmem:[%s14 + $0x4] sm:$0xf]
        %v2087 = vld [vmem:[%s14 + $0x8] sm:$0xf]
        %v2088 = vld [vmem:[%s14 + $0xc] sm:$0xf]
        %v2089 = vld [vmem:[%s14 + $0x10] sm:$0xf]
        %v2090 = vld [vmem:[%s14 + $0x14] sm:$0xf]
        %v2091 = vld [vmem:[%s14 + $0x18] sm:$0xf]
        %v2092 = vld [vmem:[%s14 + $0x1c] sm:$0xf]
        %v2093 = vld [vmem:[%s14 + $0x20] sm:$0xf]
        %v2094 = vld [vmem:[%s14 + $0x24] sm:$0xf]
        %v2095 = vld [vmem:[%s14 + $0x28] sm:$0xf]
        %v2096 = vld [vmem:[%s14 + $0x2c] sm:$0xf]
        %v2097 = vld [vmem:[%s14 + $0x30] sm:$0xf]
        %v2098 = vld [vmem:[%s14 + $0x34] sm:$0xf]
        %v2099 = vld [vmem:[%s14 + $0x38] sm:$0xf]
        %v2100 = vld [vmem:[%s14 + $0x3c] sm:$0xf]
        %v2101 = vld [vmem:[%s15] sm:$0x1]
        %v2103 = vlaneseq
        %v2104 = vshrl.u32 %v2103, 7
        %v2105 = vsub.s32 0, %v2104
        %v2106 = vrot.slane %v2101, %v2105
        %v2124 = vunpack.c.l.b16 %v2085
        %v2125 = vunpack.c.l.b16 %v2086
        %v2126 = vunpack.c.l.b16 %v2087
        %v2127 = vunpack.c.l.b16 %v2088
        %v2128 = vunpack.c.l.b16 %v2089
        %v2129 = vunpack.c.l.b16 %v2090
        %v2130 = vunpack.c.l.b16 %v2091
        %v2131 = vunpack.c.l.b16 %v2092
        %v2132 = vunpack.c.l.b16 %v2093
        %v2133 = vunpack.c.l.b16 %v2094
        %v2134 = vunpack.c.l.b16 %v2095
        %v2135 = vunpack.c.l.b16 %v2096
        %v2136 = vunpack.c.l.b16 %v2097
        %v2137 = vunpack.c.l.b16 %v2098
        %v2138 = vunpack.c.l.b16 %v2099
        %v2139 = vunpack.c.l.b16 %v2100
        %v2140 = vpack.c.b16 %v2125, %v2124
        %v2141 = vpack.c.b16 %v2127, %v2126
        %v2142 = vpack.c.b16 %v2129, %v2128
        %v2143 = vpack.c.b16 %v2131, %v2130
        %v2144 = vpack.c.b16 %v2133, %v2132
        %v2145 = vpack.c.b16 %v2135, %v2134
        %v2146 = vpack.c.b16 %v2137, %v2136
        %v2147 = vpack.c.b16 %v2139, %v2138
        %2156 = vmatprep.subr.bf16.mxu0 0
        %2157 = vmatpush1.bf16.msra.mxu0 %v2140
        %2158 = vmatprep.subr.bf16.mxu0 0
        %2159 = vmatpush1.bf16.msra.mxu0 %v2141
        %2160 = vmatprep.subr.bf16.mxu0 0
        %2161 = vmatpush1.bf16.msra.mxu0 %v2142
        %2162 = vmatprep.subr.bf16.mxu0 0
        %2163 = vmatpush1.bf16.msra.mxu0 %v2143
        %2164 = vmatprep.subr.bf16.mxu0 0
        %2165 = vmatpush1.bf16.msra.mxu0 %v2144
        %2166 = vmatprep.subr.bf16.mxu0 0
        %2167 = vmatpush1.bf16.msra.mxu0 %v2145
        %2168 = vmatprep.subr.bf16.mxu0 0
        %2169 = vmatpush1.bf16.msra.mxu0 %v2146
        %2170 = vmatprep.subr.bf16.mxu0 0
        %2171 = vmatpush1.bf16.msra.mxu0 %v2147
        %2172 = vmatprep.subr.bf16.mxu0 0
        %2173 = vmatpush1.bf16.msra.mxu0 0
        %2174 = vmatprep.subr.bf16.mxu0 0
        %2175 = vmatpush1.bf16.msra.mxu0 0
        %2176 = vmatprep.subr.bf16.mxu0 0
        %2177 = vmatpush1.bf16.msra.mxu0 0
        %2178 = vmatprep.subr.bf16.mxu0 0
        %2179 = vmatpush1.bf16.msra.mxu0 0
        %2180 = vmatprep.subr.bf16.mxu0 0
        %2181 = vmatpush1.bf16.msra.mxu0 0
        %2182 = vmatprep.subr.bf16.mxu0 0
        %2183 = vmatpush1.bf16.msra.mxu0 0
        %2184 = vmatprep.subr.bf16.mxu0 0
        %2185 = vmatpush1.bf16.msra.mxu0 0
        %2186 = vmatprep.subr.bf16.mxu0 0
        %2187 = vmatpush1.bf16.msra.mxu0 0
        %2188 = vmatprep.mubr.bf16.mxu0 0
        %2189 = vmatmul.mubr.bf16.gmra.mrb[0].mxu0 %v2084
        %v2190 = vpop.f32.mrb[0].mxu0
        %v2191 = vadd.f32 %v2106, %v2190
        %v2192 = vpop.f32.mrb[0].mxu0
        %v2193 = vpop.f32.mrb[0].mxu0
        %v2194 = vpop.f32.mrb[0].mxu0
        %2195 = vdwg.mxu0
        %v2196 = vadd.f32 %v1982, %v2191
        %2197 = vst.msk [vmem:[%s673] sm:$0xff] %vm1090, %v2196
        %s2198 = sand.u32 %s409, 1
        %s2199 = scalar_lea.sflag [#allocation6], %s2198
        %s2200 = sand.u32 %s409, 1
        %s2201 = smul.addr %s2200, 8
        %s2202 = scalar_lea.vmem [#allocation18], %s2201
        // Predicated region
        $region121: #{_lambda_.1} parent=83 // pred_check
          %p2203 = pneg %p419
        $region122: #{_lambda_.1} parent=83 // pred_check_branch
          %2205 = sbr.rel (%p2203) target = $region124
        $region123: #{_lambda_.1} parent=83 // pred_region
          %s2207 = ssub.s32 128, 128
          %2208 = vsyncadd %s2199, %s2207
          %s2209 = sadd.s32 %s44, %s43
          %s2210 = smul.addr %s2209, 128
          %s2211 = scalar_lea.hbm %s16, %s2210
          %s2213 = sshll.u32 %s2202, 4
          %s2214 = int_to_ptr.vmem [resolvable:$true] %s2213
          %2216 = dma.vmem_to_hbm [thread:$0]  %s2214, 128, %s2211, %s2199
        $region124: #{_lambda_.1} parent=83 // pred_fallthru
          _
      $region84: #{_lambda_.1} parent=5 // pred_fallthru
        _
      %p2217 = scmp.le.s32.totalorder 2, %s34
      // Predicated region
      $region125: #{_lambda_.1} parent=5 // pred_check
        %p2218 = pneg %p2217
      $region126: #{_lambda_.1} parent=5 // pred_check_branch
        %2220 = sbr.rel (%p2218) target = $region128
      $region127: #{_lambda_.1} parent=5 // pred_region
        %s2221 = ssub.s32 %s34, 2
        // Predicated region
        $region129: #{_lambda_.1} parent=127 // pred_check
          %p2222 = pneg %p425
        $region130: #{_lambda_.1} parent=127 // pred_check_branch
          %2224 = sbr.rel (%p2222) target = $region132
        $region131: #{_lambda_.1} parent=127 // pred_region
          %s2225 = sand.u32 %s410, 1
          %s2226 = scalar_lea.sflag [#allocation6], %s2225
          %s2227 = sand.u32 %s410, 1
          %s2228 = smul.addr %s2227, 8
          %s2229 = scalar_lea.vmem [#allocation18], %s2228
          %2230 = dma.done %s2226, 128
        $region132: #{_lambda_.1} parent=127 // pred_fallthru
          _
      $region128: #{_lambda_.1} parent=5 // pred_fallthru
        _
    $region6: #{_lambda_.1} parent=1 // loop_footer
      %s38 = sadd.s32 1, %s34
    $region7: #{_lambda_.1} parent=1 // loop_footer_branch
      %33 = sbr.rel target = $region3
    $region8: #{_lambda_.1} parent=1 // loop_exit
      _
    %2231 = vsyncpa [#allocation5], 1
    %s2232 = scalar_lea.sflag [#allocation5], 1
    %2233 = vsyncpa %s2232, 1
    %2234 = vsyncpa [#allocation8], 1
    %s2235 = scalar_lea.sflag [#allocation8], 1
    %2236 = vsyncpa %s2235, 1
    %2237 = vsyncpa [#allocation11], 1
    %2238 = vsyncpa [#allocation14], 1
    %2239 = vsyncpa [#allocation17], 1
    %2240 = vsyncpa [#allocation6], 1
    %s2241 = scalar_lea.sflag [#allocation6], 1
    %2242 = vsyncpa %s2241, 1

// kernel: _lambda_.1
$region0: #{_lambda_.1}
  #allocation0 [shape = 'u32[]', space=smem, size = 0x4, offset = 0x4, fixed_abs, tag = 'smem constant byte address 0x4 - core index']
  #allocation1 [shape = 'u32[144,128]{1,0:T(1,128)}', space=vmem, size = 0x12000, scoped, tag = 'internal scratch']
  #allocation2 [shape = 'bf16[4,8,8]{2,1,0:T(8,128)(2,1)}', space=vmem, size = 0x2000, scoped, tag = 'scratch operand']
  #allocation3 [shape = 'bf16[4,8,8]{2,1,0:T(8,128)(2,1)}', space=vmem, size = 0x2000, scoped, tag = 'scratch operand']
  %s0 = inlined_call_operand.hbm [shape: f32[2,8,32], index: 0, kind: input, shape index: {}, may-alias: {0,1}]
  %s1 = inlined_call_operand.hbm [shape: f32[2,8,32], index: 1, kind: input, shape index: {}, may-alias: {0,1}]
  %s2 = inlined_call_operand.hbm [shape: bf16[32,32], index: 2, kind: input, shape index: {}]
  %s3 = inlined_call_operand.hbm [shape: f32[1,32], index: 3, kind: input, shape index: {}]
  %s4 = inlined_call_operand.hbm [shape: bf16[32,64], index: 4, kind: input, shape index: {}]
  %s5 = inlined_call_operand.hbm [shape: f32[1,64], index: 5, kind: input, shape index: {}]
  %s6 = inlined_call_operand.hbm [shape: bf16[32,32], index: 6, kind: input, shape index: {}]
  %s7 = inlined_call_operand.vmem [shape: f32[1,32], index: 7, kind: input, shape index: {}]
  %s8 = inlined_call_operand.vmem [shape: f32[1,32], index: 8, kind: input, shape index: {}]
  %s9 = inlined_call_operand.vmem [shape: f32[1,32], index: 9, kind: input, shape index: {}]
  %s10 = inlined_call_operand.vmem [shape: f32[1,32], index: 10, kind: input, shape index: {}]
  %s11 = inlined_call_operand.vmem [shape: f32[1,32], index: 11, kind: input, shape index: {}]
  %s12 = inlined_call_operand.hbm [shape: bf16[32,128], index: 12, kind: input, shape index: {}]
  %s13 = inlined_call_operand.vmem [shape: f32[1,128], index: 13, kind: input, shape index: {}]
  %s14 = inlined_call_operand.vmem [shape: bf16[128,32], index: 14, kind: input, shape index: {}]
  %s15 = inlined_call_operand.vmem [shape: f32[1,32], index: 15, kind: input, shape index: {}]
  %s16 = inlined_call_operand.hbm [shape: f32[2,8,32], index: 16, kind: output, shape index: {}]
  %s17 = sld [smem:[#allocation0]]
  $region133: #{_lambda_.1} parent=0
    _
  %s19 = ssub.s32 1, %s17
  %s20 = scalar_select 0, %s19, %s17
  $region1: #{_lambda_.1} parent=0
    #allocation4 [shape = 'u8[8192]{0}', space=vmem, size = 0x2000, scoped, tag = 'input window, operand 0']
    #allocation5 [shape = 's32[2]{0}', space=sflag, size = 0x8, scoped, tag = 'scoped memory for _lambda_.1']
    #allocation6 [shape = 's32[2]{0}', space=sflag, size = 0x8, scoped, tag = 'scoped memory for _lambda_.1']
    #allocation7 [shape = 'u8[8192]{0}', space=vmem, size = 0x2000, scoped, tag = 'input window, operand 1']
    #allocation8 [shape = 's32[2]{0}', space=sflag, size = 0x8, scoped, tag = 'scoped memory for _lambda_.1']
    #allocation9 [shape = 'u8[8192]{0}', space=vmem, size = 0x2000, scoped, tag = 'input window, operand 2, single buffered']
    #allocation10 [shape = 'u8[512]{0}', space=vmem, size = 0x400, scoped, tag = 'input window, operand 3, single buffered']
    #allocation11 [shape = 's32[1]{0}', space=sflag, size = 0x4, scoped, tag = 'scoped memory for _lambda_.1']
    #allocation12 [shape = 'u8[8192]{0}', space=vmem, size = 0x2000, scoped, tag = 'input window, operand 4, single buffered']
    #allocation13 [shape = 'u8[512]{0}', space=vmem, size = 0x400, scoped, tag = 'input window, operand 5, single buffered']
    #allocation14 [shape = 's32[1]{0}', space=sflag, size = 0x4, scoped, tag = 'scoped memory for _lambda_.1']
    #allocation15 [shape = 'u8[8192]{0}', space=vmem, size = 0x2000, scoped, tag = 'input window, operand 6, single buffered']
    #allocation16 [shape = 'u8[8192]{0}', space=vmem, size = 0x2000, scoped, tag = 'input window, operand 12, single buffered']
    #allocation17 [shape = 's32[1]{0}', space=sflag, size = 0x4, scoped, tag = 'scoped memory for _lambda_.1']
    #allocation18 [shape = 'u8[8192]{0}', space=vmem, size = 0x2000, scoped, tag = 'output window, operand 0']
    %21 = vsyncpa [#allocation5], 0
    %s22 = scalar_lea.sflag [#allocation5], 1
    %23 = vsyncpa %s22, 0
    %24 = vsyncpa [#allocation8], 0
    %s25 = scalar_lea.sflag [#allocation8], 1
    %26 = vsyncpa %s25, 0
    %27 = vsyncpa [#allocation11], 0
    %28 = vsyncpa [#allocation14], 0
    %29 = vsyncpa [#allocation17], 0
    %30 = vsyncpa [#allocation6], 0
    %s31 = scalar_lea.sflag [#allocation6], 1
    %32 = vsyncpa %s31, 0
    loop: start=0, step=1, limit=4
    $region2: #{_lambda_.1} parent=1 // loop_pre_header
      _
    $region3: #{_lambda_.1} parent=1 // loop_header
      %s34 = sphi 0, %s38
      %p35 = scmp.ge.s32.totalorder %s34, 4
      %s41 = sphi 0, %s53
      %s42 = sphi 0, %s49
      %s43 = sphi 0, %s41
      %s44 = sphi 0, %s42
      %s45 = sphi 0, %s43
      %s46 = sphi 0, %s44
      %s58 = sphi 0, %s60
      %s61 = sphi 0, %s58
      %s62 = sphi 0, %s61
      %s78 = sphi 0, %s62
      %s84 = sphi 0, %s86
      %s87 = sphi 0, %s84
      %s88 = sphi 0, %s87
      %s104 = sphi 0, %s88
      %s108 = sphi 0, %s108
      %s110 = sphi 0, %s108
      %s111 = sphi 0, %s110
      %s125 = sphi 0, %s111
      %s129 = sphi 0, %s129
      %s131 = sphi 0, %s129
      %s132 = sphi 0, %s131
      %s146 = sphi 0, %s132
      %s150 = sphi 0, %s150
      %s152 = sphi 0, %s150
      %s153 = sphi 0, %s152
      %s167 = sphi 0, %s153
      %s171 = sphi 0, %s171
      %s173 = sphi 0, %s171
      %s174 = sphi 0, %s173
      %s188 = sphi 0, %s174
      %s192 = sphi 0, %s192
      %s194 = sphi 0, %s192
      %s195 = sphi 0, %s194
      %s209 = sphi 0, %s195
      %s213 = sphi 0, %s213
      %s215 = sphi 0, %s213
      %s216 = sphi 0, %s215
      %s230 = sphi 0, %s216
      %s234 = sphi 0, %s234
      %s236 = sphi 0, %s234
      %s237 = sphi 0, %s236
      %s251 = sphi 0, %s237
      %s255 = sphi 0, %s255
      %s257 = sphi 0, %s255
      %s258 = sphi 0, %s257
      %s272 = sphi 0, %s258
      %s276 = sphi 0, %s276
      %s278 = sphi 0, %s276
      %s279 = sphi 0, %s278
      %s293 = sphi 0, %s279
      %s297 = sphi 0, %s297
      %s299 = sphi 0, %s297
      %s300 = sphi 0, %s299
      %s314 = sphi 0, %s300
      %s318 = sphi 0, %s318
      %s320 = sphi 0, %s318
      %s321 = sphi 0, %s320
      %s335 = sphi 0, %s321
      %s339 = sphi 0, %s339
      %s341 = sphi 0, %s339
      %s342 = sphi 0, %s341
      %s356 = sphi 0, %s342
      %s360 = sphi 0, %s360
      %s362 = sphi 0, %s360
      %s363 = sphi 0, %s362
      %s377 = sphi 0, %s363
      %s381 = sphi 0, %s381
      %s383 = sphi 0, %s381
      %s384 = sphi 0, %s383
      %s398 = sphi 0, %s384
      %s406 = sphi 0, %s408
      %s409 = sphi 0, %s406
      %s410 = sphi 0, %s409
      %s426 = sphi 0, %s410
    $region4: #{_lambda_.1} parent=1 // loop_header_branch
      %37 = sbr.rel (%p35) target = $region8
    $region5: #{_lambda_.1} parent=1 // loop_body
      %s39 = ssub.s32 %s34, 1
      %s40 = ssub.s32 %s34, 2
      %s47 = sadd.s32 1, %s42
      %p48 = scmp.ge.s32.totalorder %s47, 1
      %s49 = scalar_select %p48, 0, %s47
      %s50 = sadd.s32 1, %s41
      %s51 = scalar_select %p48, %s50, %s41
      %p52 = scmp.ge.s32.totalorder %s51, 2
      %s53 = scalar_select %p52, 0, %s51
      %s54 = ssub.s32 %s41, %s53
      %s55 = ssub.s32 %s42, %s49
      %s56 = sor.u32 %s54, %s55
      %p57 = scmp.eq.s32.totalorder %s56, 0
      %s59 = sadd.s32 %s58, 1
      %s60 = scalar_select %p57, %s58, %s59
      %p63 = pneg %p57
      %p64 = scmp.eq.s32.totalorder %s34, 1
      %p65 = por %p63, %p64
      %p66 = scmp.ne.s32.totalorder %s58, %s61
      %p67 = scmp.eq.s32.totalorder %s34, 0
      %p68 = por %p66, %p67
      %p69 = scmp.ne.s32.totalorder %s58, %s61
      %p70 = scmp.eq.s32.totalorder %s39, 1
      %p71 = por %p69, %p70
      %p72 = scmp.ne.s32.totalorder %s61, %s62
      %p73 = scmp.eq.s32.totalorder %s39, 0
      %p74 = por %p72, %p73
      %p75 = scmp.ne.s32.totalorder %s61, %s62
      %p76 = scmp.eq.s32.totalorder %s40, 1
      %p77 = por %p75, %p76
      %p79 = scmp.ne.s32.totalorder %s62, %s78
      %p80 = scmp.eq.s32.totalorder %s40, 0
      %p81 = por %p79, %p80
      %s82 = ssub.s32 %s41, %s53
      %p83 = scmp.eq.s32.totalorder %s82, 0
      %s85 = sadd.s32 %s84, 1
      %s86 = scalar_select %p83, %s84, %s85
      %p89 = pneg %p83
      %p90 = scmp.eq.s32.totalorder %s34, 1
      %p91 = por %p89, %p90
      %p92 = scmp.ne.s32.totalorder %s84, %s87
      %p93 = scmp.eq.s32.totalorder %s34, 0
      %p94 = por %p92, %p93
      %p95 = scmp.ne.s32.totalorder %s84, %s87
      %p96 = scmp.eq.s32.totalorder %s39, 1
      %p97 = por %p95, %p96
      %p98 = scmp.ne.s32.totalorder %s87, %s88
      %p99 = scmp.eq.s32.totalorder %s39, 0
      %p100 = por %p98, %p99
      %p101 = scmp.ne.s32.totalorder %s87, %s88
      %p102 = scmp.eq.s32.totalorder %s40, 1
      %p103 = por %p101, %p102
      %p105 = scmp.ne.s32.totalorder %s88, %s104
      %p106 = scmp.eq.s32.totalorder %s40, 0
      %p107 = por %p105, %p106
      %s109 = sadd.s32 %s108, 1
      %p112 = scmp.eq.s32.totalorder %s34, 1
      %p113 = scmp.ne.s32.totalorder %s108, %s110
      %p114 = scmp.eq.s32.totalorder %s34, 0
      %p115 = por %p113, %p114
      %p116 = scmp.ne.s32.totalorder %s108, %s110
      %p117 = scmp.eq.s32.totalorder %s39, 1
      %p118 = por %p116, %p117
      %p119 = scmp.ne.s32.totalorder %s110, %s111
      %p120 = scmp.eq.s32.totalorder %s39, 0
      %p121 = por %p119, %p120
      %p122 = scmp.ne.s32.totalorder %s110, %s111
      %p123 = scmp.eq.s32.totalorder %s40, 1
      %p124 = por %p122, %p123
      %p126 = scmp.ne.s32.totalorder %s111, %s125
      %p127 = scmp.eq.s32.totalorder %s40, 0
      %p128 = por %p126, %p127
      %s130 = sadd.s32 %s129, 1
      %p133 = scmp.eq.s32.totalorder %s34, 1
      %p134 = scmp.ne.s32.totalorder %s129, %s131
      %p135 = scmp.eq.s32.totalorder %s34, 0
      %p136 = por %p134, %p135
      %p137 = scmp.ne.s32.totalorder %s129, %s131
      %p138 = scmp.eq.s32.totalorder %s39, 1
      %p139 = por %p137, %p138
      %p140 = scmp.ne.s32.totalorder %s131, %s132
      %p141 = scmp.eq.s32.totalorder %s39, 0
      %p142 = por %p140, %p141
      %p143 = scmp.ne.s32.totalorder %s131, %s132
      %p144 = scmp.eq.s32.totalorder %s40, 1
      %p145 = por %p143, %p144
      %p147 = scmp.ne.s32.totalorder %s132, %s146
      %p148 = scmp.eq.s32.totalorder %s40, 0
      %p149 = por %p147, %p148
      %s151 = sadd.s32 %s150, 1
      %p154 = scmp.eq.s32.totalorder %s34, 1
      %p155 = scmp.ne.s32.totalorder %s150, %s152
      %p156 = scmp.eq.s32.totalorder %s34, 0
      %p157 = por %p155, %p156
      %p158 = scmp.ne.s32.totalorder %s150, %s152
      %p159 = scmp.eq.s32.totalorder %s39, 1
      %p160 = por %p158, %p159
      %p161 = scmp.ne.s32.totalorder %s152, %s153
      %p162 = scmp.eq.s32.totalorder %s39, 0
      %p163 = por %p161, %p162
      %p164 = scmp.ne.s32.totalorder %s152, %s153
      %p165 = scmp.eq.s32.totalorder %s40, 1
      %p166 = por %p164, %p165
      %p168 = scmp.ne.s32.totalorder %s153, %s167
      %p169 = scmp.eq.s32.totalorder %s40, 0
      %p170 = por %p168, %p169
      %s172 = sadd.s32 %s171, 1
      %p175 = scmp.eq.s32.totalorder %s34, 1
      %p176 = scmp.ne.s32.totalorder %s171, %s173
      %p177 = scmp.eq.s32.totalorder %s34, 0
      %p178 = por %p176, %p177
      %p179 = scmp.ne.s32.totalorder %s171, %s173
      %p180 = scmp.eq.s32.totalorder %s39, 1
      %p181 = por %p179, %p180
      %p182 = scmp.ne.s32.totalorder %s173, %s174
      %p183 = scmp.eq.s32.totalorder %s39, 0
      %p184 = por %p182, %p183
      %p185 = scmp.ne.s32.totalorder %s173, %s174
      %p186 = scmp.eq.s32.totalorder %s40, 1
      %p187 = por %p185, %p186
      %p189 = scmp.ne.s32.totalorder %s174, %s188
      %p190 = scmp.eq.s32.totalorder %s40, 0
      %p191 = por %p189, %p190
      %s193 = sadd.s32 %s192, 1
      %p196 = scmp.eq.s32.totalorder %s34, 1
      %p197 = scmp.ne.s32.totalorder %s192, %s194
      %p198 = scmp.eq.s32.totalorder %s34, 0
      %p199 = por %p197, %p198
      %p200 = scmp.ne.s32.totalorder %s192, %s194
      %p201 = scmp.eq.s32.totalorder %s39, 1
      %p202 = por %p200, %p201
      %p203 = scmp.ne.s32.totalorder %s194, %s195
      %p204 = scmp.eq.s32.totalorder %s39, 0
      %p205 = por %p203, %p204
      %p206 = scmp.ne.s32.totalorder %s194, %s195
      %p207 = scmp.eq.s32.totalorder %s40, 1
      %p208 = por %p206, %p207
      %p210 = scmp.ne.s32.totalorder %s195, %s209
      %p211 = scmp.eq.s32.totalorder %s40, 0
      %p212 = por %p210, %p211
      %s214 = sadd.s32 %s213, 1
      %p217 = scmp.eq.s32.totalorder %s34, 1
      %p218 = scmp.ne.s32.totalorder %s213, %s215
      %p219 = scmp.eq.s32.totalorder %s34, 0
      %p220 = por %p218, %p219
      %p221 = scmp.ne.s32.totalorder %s213, %s215
      %p222 = scmp.eq.s32.totalorder %s39, 1
      %p223 = por %p221, %p222
      %p224 = scmp.ne.s32.totalorder %s215, %s216
      %p225 = scmp.eq.s32.totalorder %s39, 0
      %p226 = por %p224, %p225
      %p227 = scmp.ne.s32.totalorder %s215, %s216
      %p228 = scmp.eq.s32.totalorder %s40, 1
      %p229 = por %p227, %p228
      %p231 = scmp.ne.s32.totalorder %s216, %s230
      %p232 = scmp.eq.s32.totalorder %s40, 0
      %p233 = por %p231, %p232
      %s235 = sadd.s32 %s234, 1
      %p238 = scmp.eq.s32.totalorder %s34, 1
      %p239 = scmp.ne.s32.totalorder %s234, %s236
      %p240 = scmp.eq.s32.totalorder %s34, 0
      %p241 = por %p239, %p240
      %p242 = scmp.ne.s32.totalorder %s234, %s236
      %p243 = scmp.eq.s32.totalorder %s39, 1
      %p244 = por %p242, %p243
      %p245 = scmp.ne.s32.totalorder %s236, %s237
      %p246 = scmp.eq.s32.totalorder %s39, 0
      %p247 = por %p245, %p246
      %p248 = scmp.ne.s32.totalorder %s236, %s237
      %p249 = scmp.eq.s32.totalorder %s40, 1
      %p250 = por %p248, %p249
      %p252 = scmp.ne.s32.totalorder %s237, %s251
      %p253 = scmp.eq.s32.totalorder %s40, 0
      %p254 = por %p252, %p253
      %s256 = sadd.s32 %s255, 1
      %p259 = scmp.eq.s32.totalorder %s34, 1
      %p260 = scmp.ne.s32.totalorder %s255, %s257
      %p261 = scmp.eq.s32.totalorder %s34, 0
      %p262 = por %p260, %p261
      %p263 = scmp.ne.s32.totalorder %s255, %s257
      %p264 = scmp.eq.s32.totalorder %s39, 1
      %p265 = por %p263, %p264
      %p266 = scmp.ne.s32.totalorder %s257, %s258
      %p267 = scmp.eq.s32.totalorder %s39, 0
      %p268 = por %p266, %p267
      %p269 = scmp.ne.s32.totalorder %s257, %s258
      %p270 = scmp.eq.s32.totalorder %s40, 1
      %p271 = por %p269, %p270
      %p273 = scmp.ne.s32.totalorder %s258, %s272
      %p274 = scmp.eq.s32.totalorder %s40, 0
      %p275 = por %p273, %p274
      %s277 = sadd.s32 %s276, 1
      %p280 = scmp.eq.s32.totalorder %s34, 1
      %p281 = scmp.ne.s32.totalorder %s276, %s278
      %p282 = scmp.eq.s32.totalorder %s34, 0
      %p283 = por %p281, %p282
      %p284 = scmp.ne.s32.totalorder %s276, %s278
      %p285 = scmp.eq.s32.totalorder %s39, 1
      %p286 = por %p284, %p285
      %p287 = scmp.ne.s32.totalorder %s278, %s279
      %p288 = scmp.eq.s32.totalorder %s39, 0
      %p289 = por %p287, %p288
      %p290 = scmp.ne.s32.totalorder %s278, %s279
      %p291 = scmp.eq.s32.totalorder %s40, 1
      %p292 = por %p290, %p291
      %p294 = scmp.ne.s32.totalorder %s279, %s293
      %p295 = scmp.eq.s32.totalorder %s40, 0
      %p296 = por %p294, %p295
      %s298 = sadd.s32 %s297, 1
      %p301 = scmp.eq.s32.totalorder %s34, 1
      %p302 = scmp.ne.s32.totalorder %s297, %s299
      %p303 = scmp.eq.s32.totalorder %s34, 0
      %p304 = por %p302, %p303
      %p305 = scmp.ne.s32.totalorder %s297, %s299
      %p306 = scmp.eq.s32.totalorder %s39, 1
      %p307 = por %p305, %p306
      %p308 = scmp.ne.s32.totalorder %s299, %s300
      %p309 = scmp.eq.s32.totalorder %s39, 0
      %p310 = por %p308, %p309
      %p311 = scmp.ne.s32.totalorder %s299, %s300
      %p312 = scmp.eq.s32.totalorder %s40, 1
      %p313 = por %p311, %p312
      %p315 = scmp.ne.s32.totalorder %s300, %s314
      %p316 = scmp.eq.s32.totalorder %s40, 0
      %p317 = por %p315, %p316
      %s319 = sadd.s32 %s318, 1
      %p322 = scmp.eq.s32.totalorder %s34, 1
      %p323 = scmp.ne.s32.totalorder %s318, %s320
      %p324 = scmp.eq.s32.totalorder %s34, 0
      %p325 = por %p323, %p324
      %p326 = scmp.ne.s32.totalorder %s318, %s320
      %p327 = scmp.eq.s32.totalorder %s39, 1
      %p328 = por %p326, %p327
      %p329 = scmp.ne.s32.totalorder %s320, %s321
      %p330 = scmp.eq.s32.totalorder %s39, 0
      %p331 = por %p329, %p330
      %p332 = scmp.ne.s32.totalorder %s320, %s321
      %p333 = scmp.eq.s32.totalorder %s40, 1
      %p334 = por %p332, %p333
      %p336 = scmp.ne.s32.totalorder %s321, %s335
      %p337 = scmp.eq.s32.totalorder %s40, 0
      %p338 = por %p336, %p337
      %s340 = sadd.s32 %s339, 1
      %p343 = scmp.eq.s32.totalorder %s34, 1
      %p344 = scmp.ne.s32.totalorder %s339, %s341
      %p345 = scmp.eq.s32.totalorder %s34, 0
      %p346 = por %p344, %p345
      %p347 = scmp.ne.s32.totalorder %s339, %s341
      %p348 = scmp.eq.s32.totalorder %s39, 1
      %p349 = por %p347, %p348
      %p350 = scmp.ne.s32.totalorder %s341, %s342
      %p351 = scmp.eq.s32.totalorder %s39, 0
      %p352 = por %p350, %p351
      %p353 = scmp.ne.s32.totalorder %s341, %s342
      %p354 = scmp.eq.s32.totalorder %s40, 1
      %p355 = por %p353, %p354
      %p357 = scmp.ne.s32.totalorder %s342, %s356
      %p358 = scmp.eq.s32.totalorder %s40, 0
      %p359 = por %p357, %p358
      %s361 = sadd.s32 %s360, 1
      %p364 = scmp.eq.s32.totalorder %s34, 1
      %p365 = scmp.ne.s32.totalorder %s360, %s362
      %p366 = scmp.eq.s32.totalorder %s34, 0
      %p367 = por %p365, %p366
      %p368 = scmp.ne.s32.totalorder %s360, %s362
      %p369 = scmp.eq.s32.totalorder %s39, 1
      %p370 = por %p368, %p369
      %p371 = scmp.ne.s32.totalorder %s362, %s363
      %p372 = scmp.eq.s32.totalorder %s39, 0
      %p373 = por %p371, %p372
      %p374 = scmp.ne.s32.totalorder %s362, %s363
      %p375 = scmp.eq.s32.totalorder %s40, 1
      %p376 = por %p374, %p375
      %p378 = scmp.ne.s32.totalorder %s363, %s377
      %p379 = scmp.eq.s32.totalorder %s40, 0
      %p380 = por %p378, %p379
      %s382 = sadd.s32 %s381, 1
      %p385 = scmp.eq.s32.totalorder %s34, 1
      %p386 = scmp.ne.s32.totalorder %s381, %s383
      %p387 = scmp.eq.s32.totalorder %s34, 0
      %p388 = por %p386, %p387
      %p389 = scmp.ne.s32.totalorder %s381, %s383
      %p390 = scmp.eq.s32.totalorder %s39, 1
      %p391 = por %p389, %p390
      %p392 = scmp.ne.s32.totalorder %s383, %s384
      %p393 = scmp.eq.s32.totalorder %s39, 0
      %p394 = por %p392, %p393
      %p395 = scmp.ne.s32.totalorder %s383, %s384
      %p396 = scmp.eq.s32.totalorder %s40, 1
      %p397 = por %p395, %p396
      %p399 = scmp.ne.s32.totalorder %s384, %s398
      %p400 = scmp.eq.s32.totalorder %s40, 0
      %p401 = por %p399, %p400
      %s402 = ssub.s32 %s41, %s53
      %s403 = ssub.s32 %s42, %s49
      %s404 = sor.u32 %s402, %s403
      %p405 = scmp.eq.s32.totalorder %s404, 0
      %s407 = sadd.s32 %s406, 1
      %s408 = scalar_select %p405, %s406, %s407
      %p411 = pneg %p405
      %p412 = scmp.eq.s32.totalorder %s34, 1
      %p413 = por %p411, %p412
      %p414 = scmp.ne.s32.totalorder %s406, %s409
      %p415 = scmp.eq.s32.totalorder %s34, 0
      %p416 = por %p414, %p415
      %p417 = scmp.ne.s32.totalorder %s406, %s409
      %p418 = scmp.eq.s32.totalorder %s39, 1
      %p419 = por %p417, %p418
      %p420 = scmp.ne.s32.totalorder %s409, %s410
      %p421 = scmp.eq.s32.totalorder %s39, 0
      %p422 = por %p420, %p421
      %p423 = scmp.ne.s32.totalorder %s409, %s410
      %p424 = scmp.eq.s32.totalorder %s40, 1
      %p425 = por %p423, %p424
      %p427 = scmp.ne.s32.totalorder %s410, %s426
      %p428 = scmp.eq.s32.totalorder %s40, 0
      %p429 = por %p427, %p428
      %p430 = scmp.le.s32.totalorder 1, %s34
      %p431 = scmp.lt.s32.totalorder %s34, 3
      %p432 = pnand %p430, %p431
      %p433 = pneg %p432
      // Predicated region
      $region9: #{_lambda_.1} parent=5 // pred_check
        _
      $region10: #{_lambda_.1} parent=5 // pred_check_branch
        %435 = sbr.rel (%p432) target = $region12
      $region11: #{_lambda_.1} parent=5 // pred_region
        %s436 = ssub.s32 %s34, 1
        // Predicated region
        $region13: #{_lambda_.1} parent=11 // pred_check
          %p437 = pneg %p121
        $region14: #{_lambda_.1} parent=11 // pred_check_branch
          %439 = sbr.rel (%p437) target = $region16
        $region15: #{_lambda_.1} parent=11 // pred_region
          %s441 = ssub.s32 256, 256
          %442 = vsyncadd [#allocation8], %s441
          %s443 = sshll.u32 [#allocation9], 4
          %s444 = int_to_ptr.vmem [resolvable:$true] %s443
          %449 = dma.hbm_to_vmem [thread:$0]  %s2, 256, %s444, [#allocation8], 64, 64, 4
        $region16: #{_lambda_.1} parent=11 // pred_fallthru
          _
        // Predicated region
        $region17: #{_lambda_.1} parent=11 // pred_check
          %p450 = pneg %p142
        $region18: #{_lambda_.1} parent=11 // pred_check_branch
          %452 = sbr.rel (%p450) target = $region20
        $region19: #{_lambda_.1} parent=11 // pred_region
          %s454 = ssub.s32 16, 16
          %455 = vsyncadd [#allocation11], %s454
          %s457 = sshll.u32 [#allocation10], 4
          %s458 = int_to_ptr.vmem [resolvable:$true] %s457
          %460 = dma.hbm_to_vmem [thread:$0]  %s3, 16, %s458, [#allocation11]
        $region20: #{_lambda_.1} parent=11 // pred_fallthru
          _
        // Predicated region
        $region21: #{_lambda_.1} parent=11 // pred_check
          %p461 = pneg %p163
        $region22: #{_lambda_.1} parent=11 // pred_check_branch
          %463 = sbr.rel (%p461) target = $region24
        $region23: #{_lambda_.1} parent=11 // pred_region
          %s465 = ssub.s32 256, 256
          %466 = vsyncadd [#allocation11], %s465
          %s467 = sshll.u32 [#allocation12], 4
          %s468 = int_to_ptr.vmem [resolvable:$true] %s467
          %473 = dma.hbm_to_vmem [thread:$0]  %s4, 256, %s468, [#allocation11], 64, 64, 4
        $region24: #{_lambda_.1} parent=11 // pred_fallthru
          _
        // Predicated region
        $region25: #{_lambda_.1} parent=11 // pred_check
          %p474 = pneg %p184
        $region26: #{_lambda_.1} parent=11 // pred_check_branch
          %476 = sbr.rel (%p474) target = $region28
        $region27: #{_lambda_.1} parent=11 // pred_region
          %s478 = ssub.s32 16, 16
          %479 = vsyncadd [#allocation14], %s478
          %s481 = sshll.u32 [#allocation13], 4
          %s482 = int_to_ptr.vmem [resolvable:$true] %s481
          %484 = dma.hbm_to_vmem [thread:$0]  %s5, 16, %s482, [#allocation14]
        $region28: #{_lambda_.1} parent=11 // pred_fallthru
          _
        // Predicated region
        $region29: #{_lambda_.1} parent=11 // pred_check
          %p485 = pneg %p205
        $region30: #{_lambda_.1} parent=11 // pred_check_branch
          %487 = sbr.rel (%p485) target = $region32
        $region31: #{_lambda_.1} parent=11 // pred_region
          %s489 = ssub.s32 256, 256
          %490 = vsyncadd [#allocation14], %s489
          %s491 = sshll.u32 [#allocation15], 4
          %s492 = int_to_ptr.vmem [resolvable:$true] %s491
          %497 = dma.hbm_to_vmem [thread:$0]  %s6, 256, %s492, [#allocation14], 64, 64, 4
        $region32: #{_lambda_.1} parent=11 // pred_fallthru
          _
        // Predicated region
        $region33: #{_lambda_.1} parent=11 // pred_check
          %p498 = pneg %p226
        $region34: #{_lambda_.1} parent=11 // pred_check_branch
          %500 = sbr.rel (%p498) target = $region36
        $region35: #{_lambda_.1} parent=11 // pred_region
          _
        $region36: #{_lambda_.1} parent=11 // pred_fallthru
          _
        // Predicated region
        $region37: #{_lambda_.1} parent=11 // pred_check
          %p501 = pneg %p247
        $region38: #{_lambda_.1} parent=11 // pred_check_branch
          %503 = sbr.rel (%p501) target = $region40
        $region39: #{_lambda_.1} parent=11 // pred_region
          _
        $region40: #{_lambda_.1} parent=11 // pred_fallthru
          _
        // Predicated region
        $region41: #{_lambda_.1} parent=11 // pred_check
          %p504 = pneg %p268
        $region42: #{_lambda_.1} parent=11 // pred_check_branch
          %506 = sbr.rel (%p504) target = $region44
        $region43: #{_lambda_.1} parent=11 // pred_region
          _
        $region44: #{_lambda_.1} parent=11 // pred_fallthru
          _
        // Predicated region
        $region45: #{_lambda_.1} parent=11 // pred_check
          %p507 = pneg %p289
        $region46: #{_lambda_.1} parent=11 // pred_check_branch
          %509 = sbr.rel (%p507) target = $region48
        $region47: #{_lambda_.1} parent=11 // pred_region
          _
        $region48: #{_lambda_.1} parent=11 // pred_fallthru
          _
        // Predicated region
        $region49: #{_lambda_.1} parent=11 // pred_check
          %p510 = pneg %p310
        $region50: #{_lambda_.1} parent=11 // pred_check_branch
          %512 = sbr.rel (%p510) target = $region52
        $region51: #{_lambda_.1} parent=11 // pred_region
          _
        $region52: #{_lambda_.1} parent=11 // pred_fallthru
          _
        // Predicated region
        $region53: #{_lambda_.1} parent=11 // pred_check
          %p513 = pneg %p331
        $region54: #{_lambda_.1} parent=11 // pred_check_branch
          %515 = sbr.rel (%p513) target = $region56
        $region55: #{_lambda_.1} parent=11 // pred_region
          %s517 = ssub.s32 256, 256
          %518 = vsyncadd [#allocation17], %s517
          %s519 = sshll.u32 [#allocation16], 4
          %s520 = int_to_ptr.vmem [resolvable:$true] %s519
          %525 = dma.hbm_to_vmem [thread:$0]  %s12, 256, %s520, [#allocation17], 64, 64, 4
        $region56: #{_lambda_.1} parent=11 // pred_fallthru
          _
        // Predicated region
        $region57: #{_lambda_.1} parent=11 // pred_check
          %p526 = pneg %p352
        $region58: #{_lambda_.1} parent=11 // pred_check_branch
          %528 = sbr.rel (%p526) target = $region60
        $region59: #{_lambda_.1} parent=11 // pred_region
          _
        $region60: #{_lambda_.1} parent=11 // pred_fallthru
          _
        // Predicated region
        $region61: #{_lambda_.1} parent=11 // pred_check
          %p529 = pneg %p373
        $region62: #{_lambda_.1} parent=11 // pred_check_branch
          %531 = sbr.rel (%p529) target = $region64
        $region63: #{_lambda_.1} parent=11 // pred_region
          _
        $region64: #{_lambda_.1} parent=11 // pred_fallthru
          _
        // Predicated region
        $region65: #{_lambda_.1} parent=11 // pred_check
          %p532 = pneg %p394
        $region66: #{_lambda_.1} parent=11 // pred_check_branch
          %534 = sbr.rel (%p532) target = $region68
        $region67: #{_lambda_.1} parent=11 // pred_region
          _
        $region68: #{_lambda_.1} parent=11 // pred_fallthru
          _
      $region12: #{_lambda_.1} parent=5 // pred_fallthru
        _
      %p535 = scmp.lt.s32.totalorder %s34, 2
      // Predicated region
      $region69: #{_lambda_.1} parent=5 // pred_check
        %p536 = pneg %p535
      $region70: #{_lambda_.1} parent=5 // pred_check_branch
        %538 = sbr.rel (%p536) target = $region72
      $region71: #{_lambda_.1} parent=5 // pred_region
        // Predicated region
        $region73: #{_lambda_.1} parent=71 // pred_check
          %p539 = pneg %p68
        $region74: #{_lambda_.1} parent=71 // pred_check_branch
          %541 = sbr.rel (%p539) target = $region76
        $region75: #{_lambda_.1} parent=71 // pred_region
          %s542 = sand.u32 %s58, 1
          %s543 = scalar_lea.sflag [#allocation5], %s542
          %s544 = sand.u32 %s58, 1
          %s545 = smul.addr %s544, 8
          %s546 = scalar_lea.vmem [#allocation4], %s545
          %s548 = ssub.s32 128, 128
          %549 = vsyncadd %s543, %s548
          %s550 = sadd.s32 %s42, %s41
          %s551 = smul.addr %s550, 128
          %s552 = scalar_lea.hbm %s0, %s551
          %s554 = sshll.u32 %s546, 4
          %s555 = int_to_ptr.vmem [resolvable:$true] %s554
          %557 = dma.hbm_to_vmem [thread:$0]  %s552, 128, %s555, %s543
        $region76: #{_lambda_.1} parent=71 // pred_fallthru
          _
        // Predicated region
        $region77: #{_lambda_.1} parent=71 // pred_check
          %p558 = pneg %p94
        $region78: #{_lambda_.1} parent=71 // pred_check_branch
          %560 = sbr.rel (%p558) target = $region80
        $region79: #{_lambda_.1} parent=71 // pred_region
          %s561 = sand.u32 %s34, 1
          %s562 = scalar_lea.sflag [#allocation8], %s561
          %s563 = sand.u32 %s84, 1
          %s564 = smul.addr %s563, 8
          %s565 = scalar_lea.vmem [#allocation7], %s564
          %s567 = ssub.s32 128, 128
          %568 = vsyncadd %s562, %s567
          %s569 = smul.addr %s41, 128
          %s570 = scalar_lea.hbm %s1, %s569
          %s572 = sshll.u32 %s565, 4
          %s573 = int_to_ptr.vmem [resolvable:$true] %s572
          %575 = dma.hbm_to_vmem [thread:$0]  %s570, 128, %s573, %s562
        $region80: #{_lambda_.1} parent=71 // pred_fallthru
          _
      $region72: #{_lambda_.1} parent=5 // pred_fallthru
        _
      %p576 = scmp.le.s32.totalorder 1, %s34
      %p577 = scmp.lt.s32.totalorder %s34, 3
      %p578 = pnand %p576, %p577
      %p579 = pneg %p578
      // Predicated region
      $region81: #{_lambda_.1} parent=5 // pred_check
        _
      $region82: #{_lambda_.1} parent=5 // pred_check_branch
        %581 = sbr.rel (%p578) target = $region84
      $region83: #{_lambda_.1} parent=5 // pred_region
        %s582 = ssub.s32 %s34, 1
        %s583 = sand.u32 %s61, 1
        %s584 = scalar_lea.sflag [#allocation5], %s583
        %s585 = sand.u32 %s61, 1
        %s586 = smul.addr %s585, 8
        %s587 = scalar_lea.vmem [#allocation4], %s586
        // Predicated region
        $region85: #{_lambda_.1} parent=83 // pred_check
          %p588 = pneg %p74
        $region86: #{_lambda_.1} parent=83 // pred_check_branch
          %590 = sbr.rel (%p588) target = $region88
        $region87: #{_lambda_.1} parent=83 // pred_region
          %591 = dma.done %s584, 128
        $region88: #{_lambda_.1} parent=83 // pred_fallthru
          _
        %s592 = sand.u32 %s39, 1
        %s593 = scalar_lea.sflag [#allocation8], %s592
        %s594 = sand.u32 %s87, 1
        %s595 = smul.addr %s594, 8
        %s596 = scalar_lea.vmem [#allocation7], %s595
        // Predicated region
        $region89: #{_lambda_.1} parent=83 // pred_check
          %p597 = pneg %p100
        $region90: #{_lambda_.1} parent=83 // pred_check_branch
          %599 = sbr.rel (%p597) target = $region92
        $region91: #{_lambda_.1} parent=83 // pred_region
          %600 = dma.done %s593, 128
        $region92: #{_lambda_.1} parent=83 // pred_fallthru
          _
        // Predicated region
        $region93: #{_lambda_.1} parent=83 // pred_check
          %p601 = pneg %p121
        $region94: #{_lambda_.1} parent=83 // pred_check_branch
          %603 = sbr.rel (%p601) target = $region96
        $region95: #{_lambda_.1} parent=83 // pred_region
          %604 = dma.done [#allocation8], 256
        $region96: #{_lambda_.1} parent=83 // pred_fallthru
          _
        // Predicated region
        $region97: #{_lambda_.1} parent=83 // pred_check
          %p605 = pneg %p142
        $region98: #{_lambda_.1} parent=83 // pred_check_branch
          %607 = sbr.rel (%p605) target = $region100
        $region99: #{_lambda_.1} parent=83 // pred_region
          %608 = dma.done [#allocation11], 16
        $region100: #{_lambda_.1} parent=83 // pred_fallthru
          _
        // Predicated region
        $region101: #{_lambda_.1} parent=83 // pred_check
          %p609 = pneg %p163
        $region102: #{_lambda_.1} parent=83 // pred_check_branch
          %611 = sbr.rel (%p609) target = $region104
        $region103: #{_lambda_.1} parent=83 // pred_region
          %612 = dma.done [#allocation11], 256
        $region104: #{_lambda_.1} parent=83 // pred_fallthru
          _
        // Predicated region
        $region105: #{_lambda_.1} parent=83 // pred_check
          %p613 = pneg %p184
        $region106: #{_lambda_.1} parent=83 // pred_check_branch
          %615 = sbr.rel (%p613) target = $region108
        $region107: #{_lambda_.1} parent=83 // pred_region
          %616 = dma.done [#allocation14], 16
        $region108: #{_lambda_.1} parent=83 // pred_fallthru
          _
        // Predicated region
        $region109: #{_lambda_.1} parent=83 // pred_check
          %p617 = pneg %p205
        $region110: #{_lambda_.1} parent=83 // pred_check_branch
          %619 = sbr.rel (%p617) target = $region112
        $region111: #{_lambda_.1} parent=83 // pred_region
          %620 = dma.done [#allocation14], 256
        $region112: #{_lambda_.1} parent=83 // pred_fallthru
          _
        // Predicated region
        $region113: #{_lambda_.1} parent=83 // pred_check
          %p621 = pneg %p331
        $region114: #{_lambda_.1} parent=83 // pred_check_branch
          %623 = sbr.rel (%p621) target = $region116
        $region115: #{_lambda_.1} parent=83 // pred_region
          %624 = dma.done [#allocation17], 256
        $region116: #{_lambda_.1} parent=83 // pred_fallthru
          _
        %s625 = sand.u32 %s61, 1
        %s626 = scalar_lea.sflag [#allocation5], %s625
        %s627 = sand.u32 %s61, 1
        %s628 = smul.addr %s627, 8
        %s629 = scalar_lea.vmem [#allocation4], %s628
        %p630 = pneg %p74
        %p631 = pneg %p71
        %s632 = sand.u32 %s39, 1
        %s633 = scalar_lea.sflag [#allocation8], %s632
        %s634 = sand.u32 %s87, 1
        %s635 = smul.addr %s634, 8
        %s636 = scalar_lea.vmem [#allocation7], %s635
        %p637 = pneg %p100
        %p638 = pneg %p97
        %p639 = pneg %p121
        %p640 = pneg %p118
        %p641 = pneg %p142
        %p642 = pneg %p139
        %p643 = pneg %p163
        %p644 = pneg %p160
        %p645 = pneg %p184
        %p646 = pneg %p181
        %p647 = pneg %p205
        %p648 = pneg %p202
        %p649 = pneg %p226
        %p650 = pneg %p223
        %p651 = pneg %p247
        %p652 = pneg %p244
        %p653 = pneg %p268
        %p654 = pneg %p265
        %p655 = pneg %p289
        %p656 = pneg %p286
        %p657 = pneg %p310
        %p658 = pneg %p307
        %p659 = pneg %p331
        %p660 = pneg %p328
        %p661 = pneg %p352
        %p662 = pneg %p349
        %p663 = pneg %p373
        %p664 = pneg %p370
        %p665 = pneg %p394
        %p666 = pneg %p391
        %p667 = pneg %p422
        %p668 = pneg %p419
        %s669 = sand.u32 %s409, 1
        %s670 = scalar_lea.sflag [#allocation6], %s669
        %s671 = sand.u32 %s409, 1
        %s672 = smul.addr %s671, 8
        %s673 = scalar_lea.vmem [#allocation18], %s672
        %v675 = vld [vmem:[%s587] sm:$0xff]
        %v676 = vld [vmem:[%s8] sm:$0x1]
        %v677 = vld [vmem:[%s9] sm:$0x1]
        %p678 = scmp.eq.s32.totalorder %s44, 0
        // Predicated region
        $region117: #{_lambda_.1} parent=83 // pred_check
          %p679 = pneg %p678
        $region118: #{_lambda_.1} parent=83 // pred_check_branch
          %681 = sbr.rel (%p679) target = $region120
        $region119: #{_lambda_.1} parent=83 // pred_region
          %v682 = vld [vmem:[%s596] sm:$0xff]
          %vm683 = vcmask 261120
          %v684 = vsel %vm683, %v682, 0.0
          %685 = vadd.xlane.f32.xlu0 %v684
          %v686 = vpop.xlane.xlu0 %685
          %v687 = vrcp.pop 32.0
          %v688 = vmul.f32 %v686, %v687
          %v689 = vsub.f32 %v682, %v688
          %v690 = vmul.f32 %v689, %v689
          %v691 = vsel %vm683, %v690, 0.0
          %692 = vadd.xlane.f32.xlu0 %v691
          %v693 = vpop.xlane.xlu0 %692
          %v694 = vmul.f32 %v693, %v687
          %v695 = vadd.f32 %v694, 1e-05
          %v696 = vrsqrt.pop %v695
          %v697 = vmul.f32 %v689, %v696
          %v699 = vlaneseq
          %v700 = vshrl.u32 %v699, 7
          %v701 = vsub.s32 0, %v700
          %v702 = vrot.slane %v676, %v701
          %v704 = vmul.f32 %v697, %v702
          %v706 = vlaneseq
          %v707 = vshrl.u32 %v706, 7
          %v708 = vsub.s32 0, %v707
          %v709 = vrot.slane %v677, %v708
          %v711 = vadd.f32 %v704, %v709
          %v712 = vpack.c.bf16 %v711, %v711
          %v713 = vld [vmem:[#allocation12] sm:$0xf]
          %v714 = vld [vmem:[#allocation12 + $0x4] sm:$0xf]
          %v715 = vld [vmem:[#allocation12 + $0x8] sm:$0xf]
          %v716 = vld [vmem:[#allocation12 + $0xc] sm:$0xf]
          %v717 = vld [vmem:[#allocation13] sm:$0x1]
          %v719 = vlaneseq
          %v720 = vshrl.u32 %v719, 7
          %v721 = vsub.s32 0, %v720
          %v722 = vrot.slane %v717, %v721
          %v728 = vunpack.c.l.b16 %v713
          %v729 = vunpack.c.l.b16 %v714
          %v730 = vunpack.c.l.b16 %v715
          %v731 = vunpack.c.l.b16 %v716
          %v732 = vpack.c.b16 %v729, %v728
          %v733 = vpack.c.b16 %v731, %v730
          %v737 = vsel %vm683, %v712, 0
          %739 = vmatprep.subr.bf16.mxu0 0
          %740 = vmatpush1.bf16.msra.mxu0 %v732
          %741 = vmatprep.subr.bf16.mxu0 0
          %742 = vmatpush1.bf16.msra.mxu0 %v733
          %743 = vmatprep.subr.bf16.mxu0 0
          %744 = vmatpush1.bf16.msra.mxu0 0
          %745 = vmatprep.subr.bf16.mxu0 0
          %746 = vmatpush1.bf16.msra.mxu0 0
          %747 = vmatprep.subr.bf16.mxu0 0
          %748 = vmatpush1.bf16.msra.mxu0 0
          %749 = vmatprep.subr.bf16.mxu0 0
          %750 = vmatpush1.bf16.msra.mxu0 0
          %751 = vmatprep.subr.bf16.mxu0 0
          %752 = vmatpush1.bf16.msra.mxu0 0
          %753 = vmatprep.subr.bf16.mxu0 0
          %754 = vmatpush1.bf16.msra.mxu0 0
          %755 = vmatprep.subr.bf16.mxu0 0
          %756 = vmatpush1.bf16.msra.mxu0 0
          %757 = vmatprep.subr.bf16.mxu0 0
          %758 = vmatpush1.bf16.msra.mxu0 0
          %759 = vmatprep.subr.bf16.mxu0 0
          %760 = vmatpush1.bf16.msra.mxu0 0
          %761 = vmatprep.subr.bf16.mxu0 0
          %762 = vmatpush1.bf16.msra.mxu0 0
          %763 = vmatprep.subr.bf16.mxu0 0
          %764 = vmatpush1.bf16.msra.mxu0 0
          %765 = vmatprep.subr.bf16.mxu0 0
          %766 = vmatpush1.bf16.msra.mxu0 0
          %767 = vmatprep.subr.bf16.mxu0 0
          %768 = vmatpush1.bf16.msra.mxu0 0
          %769 = vmatprep.subr.bf16.mxu0 0
          %770 = vmatpush1.bf16.msra.mxu0 0
          %771 = vmatprep.mubr.bf16.mxu0 0
          %772 = vmatmul.mubr.bf16.gmra.mrb[0].mxu0 %v737
          %v773 = vpop.f32.mrb[0].mxu0
          %v774 = vadd.f32 %v722, %v773
          %v775 = vpop.f32.mrb[0].mxu0
          %v776 = vpop.f32.mrb[0].mxu0
          %v777 = vpop.f32.mrb[0].mxu0
          %778 = vdwg.mxu0
          %780 = vrot.lane.b32.xlu0 %v774, 120
          %v781 = vpop.permute.xlu0 %780
          %783 = vrot.lane.b32.xlu0 %v774, 112
          %v784 = vpop.permute.xlu0 %783
          %786 = vrot.lane.b32.xlu0 %v774, 104
          %v787 = vpop.permute.xlu0 %786
          %v789 = vcombine.low %v774, %v784
          %v790 = vcombine.high %v774, %v784
          %v792 = vunpack.c.l.s4 1983009808
          %v793 = vunpack.c.0.s8 %v792
          %v794 = vlaneseq
          %v795 = vshrl.u32 %v794, 7
          %v796 = vsub.s32 %v793, %v795
          %v797 = vrot.slane %v789, %v796
          %v799 = vunpack.c.l.s4 1983009808
          %v800 = vunpack.c.0.s8 %v799
          %v801 = vlaneseq
          %v802 = vshrl.u32 %v801, 7
          %v803 = vsub.s32 %v800, %v802
          %v804 = vrot.slane %v790, %v803
          %v805 = vcombine.low %v781, %v787
          %v806 = vcombine.high %v781, %v787
          %v808 = vunpack.c.l.s4 1983009808
          %v809 = vunpack.c.0.s8 %v808
          %v810 = vlaneseq
          %v811 = vshrl.u32 %v810, 7
          %v812 = vsub.s32 %v809, %v811
          %v813 = vrot.slane %v805, %v812
          %v815 = vunpack.c.l.s4 1983009808
          %v816 = vunpack.c.0.s8 %v815
          %v817 = vlaneseq
          %v818 = vshrl.u32 %v817, 7
          %v819 = vsub.s32 %v816, %v818
          %v820 = vrot.slane %v806, %v819
          %v821 = vcombine.low %v797, %v813
          %v822 = vcombine.high %v797, %v813
          %v824 = vunpack.c.l.s4 1934713408
          %v825 = vunpack.c.0.s8 %v824
          %v826 = vlaneseq
          %v827 = vshrl.u32 %v826, 7
          %v828 = vsub.s32 %v825, %v827
          %v829 = vrot.slane %v821, %v828
          %v831 = vunpack.c.l.s4 1934713408
          %v832 = vunpack.c.0.s8 %v831
          %v833 = vlaneseq
          %v834 = vshrl.u32 %v833, 7
          %v835 = vsub.s32 %v832, %v834
          %v836 = vrot.slane %v822, %v835
          %v837 = vcombine.low %v804, %v820
          %v838 = vcombine.high %v804, %v820
          %v840 = vunpack.c.l.s4 1934713408
          %v841 = vunpack.c.0.s8 %v840
          %v842 = vlaneseq
          %v843 = vshrl.u32 %v842, 7
          %v844 = vsub.s32 %v841, %v843
          %v845 = vrot.slane %v837, %v844
          %v847 = vunpack.c.l.s4 1934713408
          %v848 = vunpack.c.0.s8 %v847
          %v849 = vlaneseq
          %v850 = vshrl.u32 %v849, 7
          %v851 = vsub.s32 %v848, %v850
          %v852 = vrot.slane %v838, %v851
          %v853 = vcombine.high %v829, 0.0
          %v854 = vcombine.high %v836, 0.0
          %v855 = vcombine.high %v845, 0.0
          %v856 = vcombine.high %v852, 0.0
          %v857 = vcombine.low %v829, %v836
          %v859 = vunpack.c.l.s4 1983009808
          %v860 = vunpack.c.0.s8 %v859
          %v861 = vlaneseq
          %v862 = vshrl.u32 %v861, 7
          %v863 = vsub.s32 %v860, %v862
          %v864 = vrot.slane %v857, %v863
          %v865 = vcombine.low %v853, %v854
          %v867 = vunpack.c.l.s4 1983009808
          %v868 = vunpack.c.0.s8 %v867
          %v869 = vlaneseq
          %v870 = vshrl.u32 %v869, 7
          %v871 = vsub.s32 %v868, %v870
          %v872 = vrot.slane %v865, %v871
          %v873 = vcombine.low %v845, %v852
          %v875 = vunpack.c.l.s4 1983009808
          %v876 = vunpack.c.0.s8 %v875
          %v877 = vlaneseq
          %v878 = vshrl.u32 %v877, 7
          %v879 = vsub.s32 %v876, %v878
          %v880 = vrot.slane %v873, %v879
          %v881 = vcombine.low %v855, %v856
          %v883 = vunpack.c.l.s4 1983009808
          %v884 = vunpack.c.0.s8 %v883
          %v885 = vlaneseq
          %v886 = vshrl.u32 %v885, 7
          %v887 = vsub.s32 %v884, %v886
          %v888 = vrot.slane %v881, %v887
          %v889 = vcombine.low %v864, %v872
          %v890 = vcombine.high %v864, %v872
          %v892 = vunpack.c.l.s4 1934713408
          %v893 = vunpack.c.0.s8 %v892
          %v894 = vlaneseq
          %v895 = vshrl.u32 %v894, 7
          %v896 = vsub.s32 %v893, %v895
          %v897 = vrot.slane %v889, %v896
          %v899 = vunpack.c.l.s4 1934713408
          %v900 = vunpack.c.0.s8 %v899
          %v901 = vlaneseq
          %v902 = vshrl.u32 %v901, 7
          %v903 = vsub.s32 %v900, %v902
          %v904 = vrot.slane %v890, %v903
          %v905 = vcombine.low %v880, %v888
          %v906 = vcombine.high %v880, %v888
          %v908 = vunpack.c.l.s4 1934713408
          %v909 = vunpack.c.0.s8 %v908
          %v910 = vlaneseq
          %v911 = vshrl.u32 %v910, 7
          %v912 = vsub.s32 %v909, %v911
          %v913 = vrot.slane %v905, %v912
          %v915 = vunpack.c.l.s4 1934713408
          %v916 = vunpack.c.0.s8 %v915
          %v917 = vlaneseq
          %v918 = vshrl.u32 %v917, 7
          %v919 = vsub.s32 %v916, %v918
          %v920 = vrot.slane %v906, %v919
          %v921 = vcombine.low %v897, %v913
          %v922 = vcombine.high %v897, %v913
          %v923 = vcombine.low %v904, %v920
          %v924 = vcombine.high %v904, %v920
          %925 = vrot.lane.b32.xlu0 %v774, 96
          %v926 = vpop.permute.xlu0 %925
          %927 = vrot.lane.b32.xlu0 %v781, 96
          %v928 = vpop.permute.xlu0 %927
          %929 = vrot.lane.b32.xlu0 %v784, 96
          %v930 = vpop.permute.xlu0 %929
          %931 = vrot.lane.b32.xlu0 %v787, 96
          %v932 = vpop.permute.xlu0 %931
          %v937 = vcombine.low %v926, %v930
          %v938 = vcombine.high %v926, %v930
          %v940 = vunpack.c.l.s4 1983009808
          %v941 = vunpack.c.0.s8 %v940
          %v942 = vlaneseq
          %v943 = vshrl.u32 %v942, 7
          %v944 = vsub.s32 %v941, %v943
          %v945 = vrot.slane %v937, %v944
          %v947 = vunpack.c.l.s4 1983009808
          %v948 = vunpack.c.0.s8 %v947
          %v949 = vlaneseq
          %v950 = vshrl.u32 %v949, 7
          %v951 = vsub.s32 %v948, %v950
          %v952 = vrot.slane %v938, %v951
          %v953 = vcombine.low %v928, %v932
          %v954 = vcombine.high %v928, %v932
          %v956 = vunpack.c.l.s4 1983009808
          %v957 = vunpack.c.0.s8 %v956
          %v958 = vlaneseq
          %v959 = vshrl.u32 %v958, 7
          %v960 = vsub.s32 %v957, %v959
          %v961 = vrot.slane %v953, %v960
          %v963 = vunpack.c.l.s4 1983009808
          %v964 = vunpack.c.0.s8 %v963
          %v965 = vlaneseq
          %v966 = vshrl.u32 %v965, 7
          %v967 = vsub.s32 %v964, %v966
          %v968 = vrot.slane %v954, %v967
          %v969 = vcombine.low %v945, %v961
          %v970 = vcombine.high %v945, %v961
          %v972 = vunpack.c.l.s4 1934713408
          %v973 = vunpack.c.0.s8 %v972
          %v974 = vlaneseq
          %v975 = vshrl.u32 %v974, 7
          %v976 = vsub.s32 %v973, %v975
          %v977 = vrot.slane %v969, %v976
          %v979 = vunpack.c.l.s4 1934713408
          %v980 = vunpack.c.0.s8 %v979
          %v981 = vlaneseq
          %v982 = vshrl.u32 %v981, 7
          %v983 = vsub.s32 %v980, %v982
          %v984 = vrot.slane %v970, %v983
          %v985 = vcombine.low %v952, %v968
          %v986 = vcombine.high %v952, %v968
          %v988 = vunpack.c.l.s4 1934713408
          %v989 = vunpack.c.0.s8 %v988
          %v990 = vlaneseq
          %v991 = vshrl.u32 %v990, 7
          %v992 = vsub.s32 %v989, %v991
          %v993 = vrot.slane %v985, %v992
          %v995 = vunpack.c.l.s4 1934713408
          %v996 = vunpack.c.0.s8 %v995
          %v997 = vlaneseq
          %v998 = vshrl.u32 %v997, 7
          %v999 = vsub.s32 %v996, %v998
          %v1000 = vrot.slane %v986, %v999
          %v1001 = vcombine.high %v977, 0.0
          %v1002 = vcombine.high %v984, 0.0
          %v1003 = vcombine.high %v993, 0.0
          %v1004 = vcombine.high %v1000, 0.0
          %v1005 = vcombine.low %v977, %v984
          %v1007 = vunpack.c.l.s4 1983009808
          %v1008 = vunpack.c.0.s8 %v1007
          %v1009 = vlaneseq
          %v1010 = vshrl.u32 %v1009, 7
          %v1011 = vsub.s32 %v1008, %v1010
          %v1012 = vrot.slane %v1005, %v1011
          %v1013 = vcombine.low %v1001, %v1002
          %v1015 = vunpack.c.l.s4 1983009808
          %v1016 = vunpack.c.0.s8 %v1015
          %v1017 = vlaneseq
          %v1018 = vshrl.u32 %v1017, 7
          %v1019 = vsub.s32 %v1016, %v1018
          %v1020 = vrot.slane %v1013, %v1019
          %v1021 = vcombine.low %v993, %v1000
          %v1023 = vunpack.c.l.s4 1983009808
          %v1024 = vunpack.c.0.s8 %v1023
          %v1025 = vlaneseq
          %v1026 = vshrl.u32 %v1025, 7
          %v1027 = vsub.s32 %v1024, %v1026
          %v1028 = vrot.slane %v1021, %v1027
          %v1029 = vcombine.low %v1003, %v1004
          %v1031 = vunpack.c.l.s4 1983009808
          %v1032 = vunpack.c.0.s8 %v1031
          %v1033 = vlaneseq
          %v1034 = vshrl.u32 %v1033, 7
          %v1035 = vsub.s32 %v1032, %v1034
          %v1036 = vrot.slane %v1029, %v1035
          %v1037 = vcombine.low %v1012, %v1020
          %v1038 = vcombine.high %v1012, %v1020
          %v1040 = vunpack.c.l.s4 1934713408
          %v1041 = vunpack.c.0.s8 %v1040
          %v1042 = vlaneseq
          %v1043 = vshrl.u32 %v1042, 7
          %v1044 = vsub.s32 %v1041, %v1043
          %v1045 = vrot.slane %v1037, %v1044
          %v1047 = vunpack.c.l.s4 1934713408
          %v1048 = vunpack.c.0.s8 %v1047
          %v1049 = vlaneseq
          %v1050 = vshrl.u32 %v1049, 7
          %v1051 = vsub.s32 %v1048, %v1050
          %v1052 = vrot.slane %v1038, %v1051
          %v1053 = vcombine.low %v1028, %v1036
          %v1054 = vcombine.high %v1028, %v1036
          %v1056 = vunpack.c.l.s4 1934713408
          %v1057 = vunpack.c.0.s8 %v1056
          %v1058 = vlaneseq
          %v1059 = vshrl.u32 %v1058, 7
          %v1060 = vsub.s32 %v1057, %v1059
          %v1061 = vrot.slane %v1053, %v1060
          %v1063 = vunpack.c.l.s4 1934713408
          %v1064 = vunpack.c.0.s8 %v1063
          %v1065 = vlaneseq
          %v1066 = vshrl.u32 %v1065, 7
          %v1067 = vsub.s32 %v1064, %v1066
          %v1068 = vrot.slane %v1054, %v1067
          %v1069 = vcombine.low %v1045, %v1061
          %v1070 = vcombine.high %v1045, %v1061
          %v1071 = vcombine.low %v1052, %v1068
          %v1072 = vcombine.high %v1052, %v1068
          %v1073 = vpack.c.bf16 %v921, %v921
          %v1074 = vpack.c.bf16 %v922, %v922
          %v1075 = vpack.c.bf16 %v923, %v923
          %v1076 = vpack.c.bf16 %v924, %v924
          %vm1077 = vcmask 60416
          %1078 = vst.msk [vmem:[#allocation2] sm:$0xf] %vm1077, %v1073
          %1079 = vst.msk [vmem:[#allocation2 + $0x4] sm:$0xf] %vm1077, %v1074
          %1080 = vst.msk [vmem:[#allocation2 + $0x8] sm:$0xf] %vm1077, %v1075
          %1081 = vst.msk [vmem:[#allocation2 + $0xc] sm:$0xf] %vm1077, %v1076
          %v1082 = vpack.c.bf16 %v1069, %v1069
          %v1083 = vpack.c.bf16 %v1070, %v1070
          %v1084 = vpack.c.bf16 %v1071, %v1071
          %v1085 = vpack.c.bf16 %v1072, %v1072
          %1086 = vst.msk [vmem:[#allocation3] sm:$0xf] %vm1077, %v1082
          %1087 = vst.msk [vmem:[#allocation3 + $0x4] sm:$0xf] %vm1077, %v1083
          %1088 = vst.msk [vmem:[#allocation3 + $0x8] sm:$0xf] %vm1077, %v1084
          %1089 = vst.msk [vmem:[#allocation3 + $0xc] sm:$0xf] %vm1077, %v1085
        $region120: #{_lambda_.1} parent=83 // pred_fallthru
          _
        %vm1090 = vcmask 261120
        %v1091 = vsel %vm1090, %v675, 0.0
        %1092 = vadd.xlane.f32.xlu0 %v1091
        %v1093 = vpop.xlane.xlu0 %1092
        %v1094 = vrcp.pop 32.0
        %v1095 = vmul.f32 %v1093, %v1094
        %v1096 = vsub.f32 %v675, %v1095
        %v1097 = vmul.f32 %v1096, %v1096
        %v1098 = vsel %vm1090, %v1097, 0.0
        %1099 = vadd.xlane.f32.xlu0 %v1098
        %v1100 = vpop.xlane.xlu0 %1099
        %v1101 = vmul.f32 %v1100, %v1094
        %v1102 = vadd.f32 %v1101, 1e-05
        %v1103 = vrsqrt.pop %v1102
        %v1104 = vmul.f32 %v1096, %v1103
        %v1106 = vlaneseq
        %v1107 = vshrl.u32 %v1106, 7
        %v1108 = vsub.s32 0, %v1107
        %v1109 = vrot.slane %v676, %v1108
        %v1111 = vmul.f32 %v1104, %v1109
        %v1113 = vlaneseq
        %v1114 = vshrl.u32 %v1113, 7
        %v1115 = vsub.s32 0, %v1114
        %v1116 = vrot.slane %v677, %v1115
        %v1118 = vadd.f32 %v1111, %v1116
        %v1119 = vpack.c.bf16 %v1118, %v1118
        %v1120 = vld [vmem:[#allocation9] sm:$0xf]
        %v1121 = vld [vmem:[#allocation9 + $0x4] sm:$0xf]
        %v1122 = vld [vmem:[#allocation9 + $0x8] sm:$0xf]
        %v1123 = vld [vmem:[#allocation9 + $0xc] sm:$0xf]
        %v1124 = vld [vmem:[#allocation10] sm:$0x1]
        %v1126 = vlaneseq
        %v1127 = vshrl.u32 %v1126, 7
        %v1128 = vsub.s32 0, %v1127
        %v1129 = vrot.slane %v1124, %v1128
        %v1135 = vunpack.c.l.b16 %v1120
        %v1136 = vunpack.c.l.b16 %v1121
        %v1137 = vunpack.c.l.b16 %v1122
        %v1138 = vunpack.c.l.b16 %v1123
        %v1139 = vpack.c.b16 %v1136, %v1135
        %v1140 = vpack.c.b16 %v1138, %v1137
        %v1144 = vsel %vm1090, %v1119, 0
        %1146 = vmatprep.subr.bf16.mxu0 0
        %1147 = vmatpush1.bf16.msra.mxu0 %v1139
        %1148 = vmatprep.subr.bf16.mxu0 0
        %1149 = vmatpush1.bf16.msra.mxu0 %v1140
        %1150 = vmatprep.subr.bf16.mxu0 0
        %1151 = vmatpush1.bf16.msra.mxu0 0
        %1152 = vmatprep.subr.bf16.mxu0 0
        %1153 = vmatpush1.bf16.msra.mxu0 0
        %1154 = vmatprep.subr.bf16.mxu0 0
        %1155 = vmatpush1.bf16.msra.mxu0 0
        %1156 = vmatprep.subr.bf16.mxu0 0
        %1157 = vmatpush1.bf16.msra.mxu0 0
        %1158 = vmatprep.subr.bf16.mxu0 0
        %1159 = vmatpush1.bf16.msra.mxu0 0
        %1160 = vmatprep.subr.bf16.mxu0 0
        %1161 = vmatpush1.bf16.msra.mxu0 0
        %1162 = vmatprep.subr.bf16.mxu0 0
        %1163 = vmatpush1.bf16.msra.mxu0 0
        %1164 = vmatprep.subr.bf16.mxu0 0
        %1165 = vmatpush1.bf16.msra.mxu0 0
        %1166 = vmatprep.subr.bf16.mxu0 0
        %1167 = vmatpush1.bf16.msra.mxu0 0
        %1168 = vmatprep.subr.bf16.mxu0 0
        %1169 = vmatpush1.bf16.msra.mxu0 0
        %1170 = vmatprep.subr.bf16.mxu0 0
        %1171 = vmatpush1.bf16.msra.mxu0 0
        %1172 = vmatprep.subr.bf16.mxu0 0
        %1173 = vmatpush1.bf16.msra.mxu0 0
        %1174 = vmatprep.subr.bf16.mxu0 0
        %1175 = vmatpush1.bf16.msra.mxu0 0
        %1176 = vmatprep.subr.bf16.mxu0 0
        %1177 = vmatpush1.bf16.msra.mxu0 0
        %1178 = vmatprep.mubr.bf16.mxu0 0
        %1179 = vmatmul.mubr.bf16.gmra.mrb[0].mxu0 %v1144
        %v1180 = vpop.f32.mrb[0].mxu0
        %v1181 = vadd.f32 %v1129, %v1180
        %v1182 = vpop.f32.mrb[0].mxu0
        %v1183 = vpop.f32.mrb[0].mxu0
        %v1184 = vpop.f32.mrb[0].mxu0
        %1185 = vdwg.mxu0
        %1187 = vrot.lane.b32.xlu0 %v1181, 120
        %v1188 = vpop.permute.xlu0 %1187
        %1190 = vrot.lane.b32.xlu0 %v1181, 112
        %v1191 = vpop.permute.xlu0 %1190
        %1193 = vrot.lane.b32.xlu0 %v1181, 104
        %v1194 = vpop.permute.xlu0 %1193
        %v1196 = vcombine.low %v1181, %v1191
        %v1197 = vcombine.high %v1181, %v1191
        %v1199 = vunpack.c.l.s4 1983009808
        %v1200 = vunpack.c.0.s8 %v1199
        %v1201 = vlaneseq
        %v1202 = vshrl.u32 %v1201, 7
        %v1203 = vsub.s32 %v1200, %v1202
        %v1204 = vrot.slane %v1196, %v1203
        %v1206 = vunpack.c.l.s4 1983009808
        %v1207 = vunpack.c.0.s8 %v1206
        %v1208 = vlaneseq
        %v1209 = vshrl.u32 %v1208, 7
        %v1210 = vsub.s32 %v1207, %v1209
        %v1211 = vrot.slane %v1197, %v1210
        %v1212 = vcombine.low %v1188, %v1194
        %v1213 = vcombine.high %v1188, %v1194
        %v1215 = vunpack.c.l.s4 1983009808
        %v1216 = vunpack.c.0.s8 %v1215
        %v1217 = vlaneseq
        %v1218 = vshrl.u32 %v1217, 7
        %v1219 = vsub.s32 %v1216, %v1218
        %v1220 = vrot.slane %v1212, %v1219
        %v1222 = vunpack.c.l.s4 1983009808
        %v1223 = vunpack.c.0.s8 %v1222
        %v1224 = vlaneseq
        %v1225 = vshrl.u32 %v1224, 7
        %v1226 = vsub.s32 %v1223, %v1225
        %v1227 = vrot.slane %v1213, %v1226
        %v1228 = vcombine.low %v1204, %v1220
        %v1229 = vcombine.high %v1204, %v1220
        %v1231 = vunpack.c.l.s4 1934713408
        %v1232 = vunpack.c.0.s8 %v1231
        %v1233 = vlaneseq
        %v1234 = vshrl.u32 %v1233, 7
        %v1235 = vsub.s32 %v1232, %v1234
        %v1236 = vrot.slane %v1228, %v1235
        %v1238 = vunpack.c.l.s4 1934713408
        %v1239 = vunpack.c.0.s8 %v1238
        %v1240 = vlaneseq
        %v1241 = vshrl.u32 %v1240, 7
        %v1242 = vsub.s32 %v1239, %v1241
        %v1243 = vrot.slane %v1229, %v1242
        %v1244 = vcombine.low %v1211, %v1227
        %v1245 = vcombine.high %v1211, %v1227
        %v1247 = vunpack.c.l.s4 1934713408
        %v1248 = vunpack.c.0.s8 %v1247
        %v1249 = vlaneseq
        %v1250 = vshrl.u32 %v1249, 7
        %v1251 = vsub.s32 %v1248, %v1250
        %v1252 = vrot.slane %v1244, %v1251
        %v1254 = vunpack.c.l.s4 1934713408
        %v1255 = vunpack.c.0.s8 %v1254
        %v1256 = vlaneseq
        %v1257 = vshrl.u32 %v1256, 7
        %v1258 = vsub.s32 %v1255, %v1257
        %v1259 = vrot.slane %v1245, %v1258
        %v1260 = vcombine.high %v1236, 0.0
        %v1261 = vcombine.high %v1243, 0.0
        %v1262 = vcombine.high %v1252, 0.0
        %v1263 = vcombine.high %v1259, 0.0
        %v1264 = vcombine.low %v1236, %v1243
        %v1266 = vunpack.c.l.s4 1983009808
        %v1267 = vunpack.c.0.s8 %v1266
        %v1268 = vlaneseq
        %v1269 = vshrl.u32 %v1268, 7
        %v1270 = vsub.s32 %v1267, %v1269
        %v1271 = vrot.slane %v1264, %v1270
        %v1272 = vcombine.low %v1260, %v1261
        %v1274 = vunpack.c.l.s4 1983009808
        %v1275 = vunpack.c.0.s8 %v1274
        %v1276 = vlaneseq
        %v1277 = vshrl.u32 %v1276, 7
        %v1278 = vsub.s32 %v1275, %v1277
        %v1279 = vrot.slane %v1272, %v1278
        %v1280 = vcombine.low %v1252, %v1259
        %v1282 = vunpack.c.l.s4 1983009808
        %v1283 = vunpack.c.0.s8 %v1282
        %v1284 = vlaneseq
        %v1285 = vshrl.u32 %v1284, 7
        %v1286 = vsub.s32 %v1283, %v1285
        %v1287 = vrot.slane %v1280, %v1286
        %v1288 = vcombine.low %v1262, %v1263
        %v1290 = vunpack.c.l.s4 1983009808
        %v1291 = vunpack.c.0.s8 %v1290
        %v1292 = vlaneseq
        %v1293 = vshrl.u32 %v1292, 7
        %v1294 = vsub.s32 %v1291, %v1293
        %v1295 = vrot.slane %v1288, %v1294
        %v1296 = vcombine.low %v1271, %v1279
        %v1297 = vcombine.high %v1271, %v1279
        %v1299 = vunpack.c.l.s4 1934713408
        %v1300 = vunpack.c.0.s8 %v1299
        %v1301 = vlaneseq
        %v1302 = vshrl.u32 %v1301, 7
        %v1303 = vsub.s32 %v1300, %v1302
        %v1304 = vrot.slane %v1296, %v1303
        %v1306 = vunpack.c.l.s4 1934713408
        %v1307 = vunpack.c.0.s8 %v1306
        %v1308 = vlaneseq
        %v1309 = vshrl.u32 %v1308, 7
        %v1310 = vsub.s32 %v1307, %v1309
        %v1311 = vrot.slane %v1297, %v1310
        %v1312 = vcombine.low %v1287, %v1295
        %v1313 = vcombine.high %v1287, %v1295
        %v1315 = vunpack.c.l.s4 1934713408
        %v1316 = vunpack.c.0.s8 %v1315
        %v1317 = vlaneseq
        %v1318 = vshrl.u32 %v1317, 7
        %v1319 = vsub.s32 %v1316, %v1318
        %v1320 = vrot.slane %v1312, %v1319
        %v1322 = vunpack.c.l.s4 1934713408
        %v1323 = vunpack.c.0.s8 %v1322
        %v1324 = vlaneseq
        %v1325 = vshrl.u32 %v1324, 7
        %v1326 = vsub.s32 %v1323, %v1325
        %v1327 = vrot.slane %v1313, %v1326
        %v1328 = vcombine.low %v1304, %v1320
        %v1329 = vcombine.high %v1304, %v1320
        %v1330 = vcombine.low %v1311, %v1327
        %v1331 = vcombine.high %v1311, %v1327
        %v1332 = vpack.c.bf16 %v1328, %v1328
        %v1333 = vpack.c.bf16 %v1329, %v1329
        %v1334 = vpack.c.bf16 %v1330, %v1330
        %v1335 = vpack.c.bf16 %v1331, %v1331
        %v1336 = vld [vmem:[#allocation2] sm:$0xf]
        %v1337 = vld [vmem:[#allocation2 + $0x4] sm:$0xf]
        %v1338 = vld [vmem:[#allocation2 + $0x8] sm:$0xf]
        %v1339 = vld [vmem:[#allocation2 + $0xc] sm:$0xf]
        %vm1340 = vcmask 64512
        %v1342 = vsel %vm1340, %v1332, 0
        %v1345 = vsel %vm1340, %v1336, 0
        %1347 = vmatprep.subr.bf16.mxu0 0
        %1348 = vmatpush1.bf16.xpose.msra.mxu0 %v1345
        %1349 = vmatprep.subr.bf16.mxu0 0
        %1350 = vmatpush1.bf16.xpose.msra.mxu0 0
        %1351 = vmatprep.subr.bf16.mxu0 0
        %1352 = vmatpush1.bf16.xpose.msra.mxu0 0
        %1353 = vmatprep.subr.bf16.mxu0 0
        %1354 = vmatpush1.bf16.xpose.msra.mxu0 0
        %1355 = vmatprep.subr.bf16.mxu0 0
        %1356 = vmatpush1.bf16.xpose.msra.mxu0 0
        %1357 = vmatprep.subr.bf16.mxu0 0
        %1358 = vmatpush1.bf16.xpose.msra.mxu0 0
        %1359 = vmatprep.subr.bf16.mxu0 0
        %1360 = vmatpush1.bf16.xpose.msra.mxu0 0
        %1361 = vmatprep.subr.bf16.mxu0 0
        %1362 = vmatpush1.bf16.xpose.msra.mxu0 0
        %1363 = vmatprep.subr.bf16.mxu0 0
        %1364 = vmatpush1.bf16.xpose.msra.mxu0 0
        %1365 = vmatprep.subr.bf16.mxu0 0
        %1366 = vmatpush1.bf16.xpose.msra.mxu0 0
        %1367 = vmatprep.subr.bf16.mxu0 0
        %1368 = vmatpush1.bf16.xpose.msra.mxu0 0
        %1369 = vmatprep.subr.bf16.mxu0 0
        %1370 = vmatpush1.bf16.xpose.msra.mxu0 0
        %1371 = vmatprep.subr.bf16.mxu0 0
        %1372 = vmatpush1.bf16.xpose.msra.mxu0 0
        %1373 = vmatprep.subr.bf16.mxu0 0
        %1374 = vmatpush1.bf16.xpose.msra.mxu0 0
        %1375 = vmatprep.subr.bf16.mxu0 0
        %1376 = vmatpush1.bf16.xpose.msra.mxu0 0
        %1377 = vmatprep.subr.bf16.mxu0 0
        %1378 = vmatpush1.bf16.xpose.msra.mxu0 0
        %1379 = vmatprep.mubr.bf16.mxu0 0
        %1380 = vmatmul.mubr.bf16.gmra.mrb[0].mxu0 %v1342
        %v1381 = vpop.f32.mrb[0].mxu0
        %v1382 = vadd.f32 0.0, %v1381
        %v1383 = vpop.f32.mrb[0].mxu0
        %v1384 = vpop.f32.mrb[0].mxu0
        %v1385 = vpop.f32.mrb[0].mxu0
        %1386 = vdwg.mxu0
        %v1388 = vsel %vm1340, %v1333, 0
        %v1391 = vsel %vm1340, %v1337, 0
        %1393 = vmatprep.subr.bf16.mxu0 0
        %1394 = vmatpush1.bf16.xpose.msra.mxu0 %v1391
        %1395 = vmatprep.subr.bf16.mxu0 0
        %1396 = vmatpush1.bf16.xpose.msra.mxu0 0
        %1397 = vmatprep.subr.bf16.mxu0 0
        %1398 = vmatpush1.bf16.xpose.msra.mxu0 0
        %1399 = vmatprep.subr.bf16.mxu0 0
        %1400 = vmatpush1.bf16.xpose.msra.mxu0 0
        %1401 = vmatprep.subr.bf16.mxu0 0
        %1402 = vmatpush1.bf16.xpose.msra.mxu0 0
        %1403 = vmatprep.subr.bf16.mxu0 0
        %1404 = vmatpush1.bf16.xpose.msra.mxu0 0
        %1405 = vmatprep.subr.bf16.mxu0 0
        %1406 = vmatpush1.bf16.xpose.msra.mxu0 0
        %1407 = vmatprep.subr.bf16.mxu0 0
        %1408 = vmatpush1.bf16.xpose.msra.mxu0 0
        %1409 = vmatprep.subr.bf16.mxu0 0
        %1410 = vmatpush1.bf16.xpose.msra.mxu0 0
        %1411 = vmatprep.subr.bf16.mxu0 0
        %1412 = vmatpush1.bf16.xpose.msra.mxu0 0
        %1413 = vmatprep.subr.bf16.mxu0 0
        %1414 = vmatpush1.bf16.xpose.msra.mxu0 0
        %1415 = vmatprep.subr.bf16.mxu0 0
        %1416 = vmatpush1.bf16.xpose.msra.mxu0 0
        %1417 = vmatprep.subr.bf16.mxu0 0
        %1418 = vmatpush1.bf16.xpose.msra.mxu0 0
        %1419 = vmatprep.subr.bf16.mxu0 0
        %1420 = vmatpush1.bf16.xpose.msra.mxu0 0
        %1421 = vmatprep.subr.bf16.mxu0 0
        %1422 = vmatpush1.bf16.xpose.msra.mxu0 0
        %1423 = vmatprep.subr.bf16.mxu0 0
        %1424 = vmatpush1.bf16.xpose.msra.mxu0 0
        %1425 = vmatprep.mubr.bf16.mxu0 0
        %1426 = vmatmul.mubr.bf16.gmra.mrb[0].mxu0 %v1388
        %v1427 = vpop.f32.mrb[0].mxu0
        %v1428 = vadd.f32 0.0, %v1427
        %v1429 = vpop.f32.mrb[0].mxu0
        %v1430 = vpop.f32.mrb[0].mxu0
        %v1431 = vpop.f32.mrb[0].mxu0
        %1432 = vdwg.mxu0
        %v1434 = vsel %vm1340, %v1334, 0
        %v1437 = vsel %vm1340, %v1338, 0
        %1439 = vmatprep.subr.bf16.mxu0 0
        %1440 = vmatpush1.bf16.xpose.msra.mxu0 %v1437
        %1441 = vmatprep.subr.bf16.mxu0 0
        %1442 = vmatpush1.bf16.xpose.msra.mxu0 0
        %1443 = vmatprep.subr.bf16.mxu0 0
        %1444 = vmatpush1.bf16.xpose.msra.mxu0 0
        %1445 = vmatprep.subr.bf16.mxu0 0
        %1446 = vmatpush1.bf16.xpose.msra.mxu0 0
        %1447 = vmatprep.subr.bf16.mxu0 0
        %1448 = vmatpush1.bf16.xpose.msra.mxu0 0
        %1449 = vmatprep.subr.bf16.mxu0 0
        %1450 = vmatpush1.bf16.xpose.msra.mxu0 0
        %1451 = vmatprep.subr.bf16.mxu0 0
        %1452 = vmatpush1.bf16.xpose.msra.mxu0 0
        %1453 = vmatprep.subr.bf16.mxu0 0
        %1454 = vmatpush1.bf16.xpose.msra.mxu0 0
        %1455 = vmatprep.subr.bf16.mxu0 0
        %1456 = vmatpush1.bf16.xpose.msra.mxu0 0
        %1457 = vmatprep.subr.bf16.mxu0 0
        %1458 = vmatpush1.bf16.xpose.msra.mxu0 0
        %1459 = vmatprep.subr.bf16.mxu0 0
        %1460 = vmatpush1.bf16.xpose.msra.mxu0 0
        %1461 = vmatprep.subr.bf16.mxu0 0
        %1462 = vmatpush1.bf16.xpose.msra.mxu0 0
        %1463 = vmatprep.subr.bf16.mxu0 0
        %1464 = vmatpush1.bf16.xpose.msra.mxu0 0
        %1465 = vmatprep.subr.bf16.mxu0 0
        %1466 = vmatpush1.bf16.xpose.msra.mxu0 0
        %1467 = vmatprep.subr.bf16.mxu0 0
        %1468 = vmatpush1.bf16.xpose.msra.mxu0 0
        %1469 = vmatprep.subr.bf16.mxu0 0
        %1470 = vmatpush1.bf16.xpose.msra.mxu0 0
        %1471 = vmatprep.mubr.bf16.mxu0 0
        %1472 = vmatmul.mubr.bf16.gmra.mrb[0].mxu0 %v1434
        %v1473 = vpop.f32.mrb[0].mxu0
        %v1474 = vadd.f32 0.0, %v1473
        %v1475 = vpop.f32.mrb[0].mxu0
        %v1476 = vpop.f32.mrb[0].mxu0
        %v1477 = vpop.f32.mrb[0].mxu0
        %1478 = vdwg.mxu0
        %v1480 = vsel %vm1340, %v1335, 0
        %v1483 = vsel %vm1340, %v1339, 0
        %1485 = vmatprep.subr.bf16.mxu0 0
        %1486 = vmatpush1.bf16.xpose.msra.mxu0 %v1483
        %1487 = vmatprep.subr.bf16.mxu0 0
        %1488 = vmatpush1.bf16.xpose.msra.mxu0 0
        %1489 = vmatprep.subr.bf16.mxu0 0
        %1490 = vmatpush1.bf16.xpose.msra.mxu0 0
        %1491 = vmatprep.subr.bf16.mxu0 0
        %1492 = vmatpush1.bf16.xpose.msra.mxu0 0
        %1493 = vmatprep.subr.bf16.mxu0 0
        %1494 = vmatpush1.bf16.xpose.msra.mxu0 0
        %1495 = vmatprep.subr.bf16.mxu0 0
        %1496 = vmatpush1.bf16.xpose.msra.mxu0 0
        %1497 = vmatprep.subr.bf16.mxu0 0
        %1498 = vmatpush1.bf16.xpose.msra.mxu0 0
        %1499 = vmatprep.subr.bf16.mxu0 0
        %1500 = vmatpush1.bf16.xpose.msra.mxu0 0
        %1501 = vmatprep.subr.bf16.mxu0 0
        %1502 = vmatpush1.bf16.xpose.msra.mxu0 0
        %1503 = vmatprep.subr.bf16.mxu0 0
        %1504 = vmatpush1.bf16.xpose.msra.mxu0 0
        %1505 = vmatprep.subr.bf16.mxu0 0
        %1506 = vmatpush1.bf16.xpose.msra.mxu0 0
        %1507 = vmatprep.subr.bf16.mxu0 0
        %1508 = vmatpush1.bf16.xpose.msra.mxu0 0
        %1509 = vmatprep.subr.bf16.mxu0 0
        %1510 = vmatpush1.bf16.xpose.msra.mxu0 0
        %1511 = vmatprep.subr.bf16.mxu0 0
        %1512 = vmatpush1.bf16.xpose.msra.mxu0 0
        %1513 = vmatprep.subr.bf16.mxu0 0
        %1514 = vmatpush1.bf16.xpose.msra.mxu0 0
        %1515 = vmatprep.subr.bf16.mxu0 0
        %1516 = vmatpush1.bf16.xpose.msra.mxu0 0
        %1517 = vmatprep.mubr.bf16.mxu0 0
        %1518 = vmatmul.mubr.bf16.gmra.mrb[0].mxu0 %v1480
        %v1519 = vpop.f32.mrb[0].mxu0
        %v1520 = vadd.f32 0.0, %v1519
        %v1521 = vpop.f32.mrb[0].mxu0
        %v1522 = vpop.f32.mrb[0].mxu0
        %v1523 = vpop.f32.mrb[0].mxu0
        %1524 = vdwg.mxu0
        %v1525 = vsel %vm1340, %v1382, -inf
        %1526 = vmax.xlane.f32.xlu0 %v1525
        %v1527 = vpop.xlane.xlu0 %1526
        %v1528 = vsel %vm1340, %v1428, -inf
        %1529 = vmax.xlane.f32.xlu0 %v1528
        %v1530 = vpop.xlane.xlu0 %1529
        %v1531 = vsel %vm1340, %v1474, -inf
        %1532 = vmax.xlane.f32.xlu0 %v1531
        %v1533 = vpop.xlane.xlu0 %1532
        %v1534 = vsel %vm1340, %v1520, -inf
        %1535 = vmax.xlane.f32.xlu0 %v1534
        %v1536 = vpop.xlane.xlu0 %1535
        %v1537 = vsub.f32 %v1382, %v1527
        %v1538 = vsub.f32 %v1428, %v1530
        %v1539 = vsub.f32 %v1474, %v1533
        %v1540 = vsub.f32 %v1520, %v1536
        %v1541 = vmul.f32 %v1537, 1.442695
        %v1542 = vpow.pop %v1541
        %v1543 = vmul.f32 %v1538, 1.442695
        %v1544 = vpow.pop %v1543
        %v1545 = vmul.f32 %v1539, 1.442695
        %v1546 = vpow.pop %v1545
        %v1547 = vmul.f32 %v1540, 1.442695
        %v1548 = vpow.pop %v1547
        %v1549 = vsel %vm1340, %v1542, 0.0
        %1550 = vadd.xlane.f32.xlu0 %v1549
        %v1551 = vpop.xlane.xlu0 %1550
        %v1552 = vsel %vm1340, %v1544, 0.0
        %1553 = vadd.xlane.f32.xlu0 %v1552
        %v1554 = vpop.xlane.xlu0 %1553
        %v1555 = vsel %vm1340, %v1546, 0.0
        %1556 = vadd.xlane.f32.xlu0 %v1555
        %v1557 = vpop.xlane.xlu0 %1556
        %v1558 = vsel %vm1340, %v1548, 0.0
        %1559 = vadd.xlane.f32.xlu0 %v1558
        %v1560 = vpop.xlane.xlu0 %1559
        %v1561 = vpack.c.bf16 %v1542, %v1542
        %v1562 = vpack.c.bf16 %v1544, %v1544
        %v1563 = vpack.c.bf16 %v1546, %v1546
        %v1564 = vpack.c.bf16 %v1548, %v1548
        %v1565 = vld [vmem:[#allocation3] sm:$0xf]
        %v1566 = vld [vmem:[#allocation3 + $0x4] sm:$0xf]
        %v1567 = vld [vmem:[#allocation3 + $0x8] sm:$0xf]
        %v1568 = vld [vmem:[#allocation3 + $0xc] sm:$0xf]
        %v1570 = vsel %vm1340, %v1561, 0
        %vm1572 = vcmask 1043456
        %v1574 = vsel %vm1572, %v1565, 0
        %1576 = vmatprep.subr.bf16.mxu0 0
        %1577 = vmatpush1.bf16.msra.mxu0 %v1574
        %1578 = vmatprep.subr.bf16.mxu0 0
        %1579 = vmatpush1.bf16.msra.mxu0 0
        %1580 = vmatprep.subr.bf16.mxu0 0
        %1581 = vmatpush1.bf16.msra.mxu0 0
        %1582 = vmatprep.subr.bf16.mxu0 0
        %1583 = vmatpush1.bf16.msra.mxu0 0
        %1584 = vmatprep.subr.bf16.mxu0 0
        %1585 = vmatpush1.bf16.msra.mxu0 0
        %1586 = vmatprep.subr.bf16.mxu0 0
        %1587 = vmatpush1.bf16.msra.mxu0 0
        %1588 = vmatprep.subr.bf16.mxu0 0
        %1589 = vmatpush1.bf16.msra.mxu0 0
        %1590 = vmatprep.subr.bf16.mxu0 0
        %1591 = vmatpush1.bf16.msra.mxu0 0
        %1592 = vmatprep.subr.bf16.mxu0 0
        %1593 = vmatpush1.bf16.msra.mxu0 0
        %1594 = vmatprep.subr.bf16.mxu0 0
        %1595 = vmatpush1.bf16.msra.mxu0 0
        %1596 = vmatprep.subr.bf16.mxu0 0
        %1597 = vmatpush1.bf16.msra.mxu0 0
        %1598 = vmatprep.subr.bf16.mxu0 0
        %1599 = vmatpush1.bf16.msra.mxu0 0
        %1600 = vmatprep.subr.bf16.mxu0 0
        %1601 = vmatpush1.bf16.msra.mxu0 0
        %1602 = vmatprep.subr.bf16.mxu0 0
        %1603 = vmatpush1.bf16.msra.mxu0 0
        %1604 = vmatprep.subr.bf16.mxu0 0
        %1605 = vmatpush1.bf16.msra.mxu0 0
        %1606 = vmatprep.subr.bf16.mxu0 0
        %1607 = vmatpush1.bf16.msra.mxu0 0
        %1608 = vmatprep.mubr.bf16.mxu0 0
        %1609 = vmatmul.mubr.bf16.gmra.mrb[0].mxu0 %v1570
        %v1610 = vpop.f32.mrb[0].mxu0
        %v1611 = vadd.f32 0.0, %v1610
        %v1612 = vpop.f32.mrb[0].mxu0
        %v1613 = vpop.f32.mrb[0].mxu0
        %v1614 = vpop.f32.mrb[0].mxu0
        %1615 = vdwg.mxu0
        %v1617 = vsel %vm1340, %v1562, 0
        %v1620 = vsel %vm1572, %v1566, 0
        %1622 = vmatprep.subr.bf16.mxu0 0
        %1623 = vmatpush1.bf16.msra.mxu0 %v1620
        %1624 = vmatprep.subr.bf16.mxu0 0
        %1625 = vmatpush1.bf16.msra.mxu0 0
        %1626 = vmatprep.subr.bf16.mxu0 0
        %1627 = vmatpush1.bf16.msra.mxu0 0
        %1628 = vmatprep.subr.bf16.mxu0 0
        %1629 = vmatpush1.bf16.msra.mxu0 0
        %1630 = vmatprep.subr.bf16.mxu0 0
        %1631 = vmatpush1.bf16.msra.mxu0 0
        %1632 = vmatprep.subr.bf16.mxu0 0
        %1633 = vmatpush1.bf16.msra.mxu0 0
        %1634 = vmatprep.subr.bf16.mxu0 0
        %1635 = vmatpush1.bf16.msra.mxu0 0
        %1636 = vmatprep.subr.bf16.mxu0 0
        %1637 = vmatpush1.bf16.msra.mxu0 0
        %1638 = vmatprep.subr.bf16.mxu0 0
        %1639 = vmatpush1.bf16.msra.mxu0 0
        %1640 = vmatprep.subr.bf16.mxu0 0
        %1641 = vmatpush1.bf16.msra.mxu0 0
        %1642 = vmatprep.subr.bf16.mxu0 0
        %1643 = vmatpush1.bf16.msra.mxu0 0
        %1644 = vmatprep.subr.bf16.mxu0 0
        %1645 = vmatpush1.bf16.msra.mxu0 0
        %1646 = vmatprep.subr.bf16.mxu0 0
        %1647 = vmatpush1.bf16.msra.mxu0 0
        %1648 = vmatprep.subr.bf16.mxu0 0
        %1649 = vmatpush1.bf16.msra.mxu0 0
        %1650 = vmatprep.subr.bf16.mxu0 0
        %1651 = vmatpush1.bf16.msra.mxu0 0
        %1652 = vmatprep.subr.bf16.mxu0 0
        %1653 = vmatpush1.bf16.msra.mxu0 0
        %1654 = vmatprep.mubr.bf16.mxu0 0
        %1655 = vmatmul.mubr.bf16.gmra.mrb[0].mxu0 %v1617
        %v1656 = vpop.f32.mrb[0].mxu0
        %v1657 = vadd.f32 0.0, %v1656
        %v1658 = vpop.f32.mrb[0].mxu0
        %v1659 = vpop.f32.mrb[0].mxu0
        %v1660 = vpop.f32.mrb[0].mxu0
        %1661 = vdwg.mxu0
        %v1663 = vsel %vm1340, %v1563, 0
        %v1666 = vsel %vm1572, %v1567, 0
        %1668 = vmatprep.subr.bf16.mxu0 0
        %1669 = vmatpush1.bf16.msra.mxu0 %v1666
        %1670 = vmatprep.subr.bf16.mxu0 0
        %1671 = vmatpush1.bf16.msra.mxu0 0
        %1672 = vmatprep.subr.bf16.mxu0 0
        %1673 = vmatpush1.bf16.msra.mxu0 0
        %1674 = vmatprep.subr.bf16.mxu0 0
        %1675 = vmatpush1.bf16.msra.mxu0 0
        %1676 = vmatprep.subr.bf16.mxu0 0
        %1677 = vmatpush1.bf16.msra.mxu0 0
        %1678 = vmatprep.subr.bf16.mxu0 0
        %1679 = vmatpush1.bf16.msra.mxu0 0
        %1680 = vmatprep.subr.bf16.mxu0 0
        %1681 = vmatpush1.bf16.msra.mxu0 0
        %1682 = vmatprep.subr.bf16.mxu0 0
        %1683 = vmatpush1.bf16.msra.mxu0 0
        %1684 = vmatprep.subr.bf16.mxu0 0
        %1685 = vmatpush1.bf16.msra.mxu0 0
        %1686 = vmatprep.subr.bf16.mxu0 0
        %1687 = vmatpush1.bf16.msra.mxu0 0
        %1688 = vmatprep.subr.bf16.mxu0 0
        %1689 = vmatpush1.bf16.msra.mxu0 0
        %1690 = vmatprep.subr.bf16.mxu0 0
        %1691 = vmatpush1.bf16.msra.mxu0 0
        %1692 = vmatprep.subr.bf16.mxu0 0
        %1693 = vmatpush1.bf16.msra.mxu0 0
        %1694 = vmatprep.subr.bf16.mxu0 0
        %1695 = vmatpush1.bf16.msra.mxu0 0
        %1696 = vmatprep.subr.bf16.mxu0 0
        %1697 = vmatpush1.bf16.msra.mxu0 0
        %1698 = vmatprep.subr.bf16.mxu0 0
        %1699 = vmatpush1.bf16.msra.mxu0 0
        %1700 = vmatprep.mubr.bf16.mxu0 0
        %1701 = vmatmul.mubr.bf16.gmra.mrb[0].mxu0 %v1663
        %v1702 = vpop.f32.mrb[0].mxu0
        %v1703 = vadd.f32 0.0, %v1702
        %v1704 = vpop.f32.mrb[0].mxu0
        %v1705 = vpop.f32.mrb[0].mxu0
        %v1706 = vpop.f32.mrb[0].mxu0
        %1707 = vdwg.mxu0
        %v1709 = vsel %vm1340, %v1564, 0
        %v1712 = vsel %vm1572, %v1568, 0
        %1714 = vmatprep.subr.bf16.mxu0 0
        %1715 = vmatpush1.bf16.msra.mxu0 %v1712
        %1716 = vmatprep.subr.bf16.mxu0 0
        %1717 = vmatpush1.bf16.msra.mxu0 0
        %1718 = vmatprep.subr.bf16.mxu0 0
        %1719 = vmatpush1.bf16.msra.mxu0 0
        %1720 = vmatprep.subr.bf16.mxu0 0
        %1721 = vmatpush1.bf16.msra.mxu0 0
        %1722 = vmatprep.subr.bf16.mxu0 0
        %1723 = vmatpush1.bf16.msra.mxu0 0
        %1724 = vmatprep.subr.bf16.mxu0 0
        %1725 = vmatpush1.bf16.msra.mxu0 0
        %1726 = vmatprep.subr.bf16.mxu0 0
        %1727 = vmatpush1.bf16.msra.mxu0 0
        %1728 = vmatprep.subr.bf16.mxu0 0
        %1729 = vmatpush1.bf16.msra.mxu0 0
        %1730 = vmatprep.subr.bf16.mxu0 0
        %1731 = vmatpush1.bf16.msra.mxu0 0
        %1732 = vmatprep.subr.bf16.mxu0 0
        %1733 = vmatpush1.bf16.msra.mxu0 0
        %1734 = vmatprep.subr.bf16.mxu0 0
        %1735 = vmatpush1.bf16.msra.mxu0 0
        %1736 = vmatprep.subr.bf16.mxu0 0
        %1737 = vmatpush1.bf16.msra.mxu0 0
        %1738 = vmatprep.subr.bf16.mxu0 0
        %1739 = vmatpush1.bf16.msra.mxu0 0
        %1740 = vmatprep.subr.bf16.mxu0 0
        %1741 = vmatpush1.bf16.msra.mxu0 0
        %1742 = vmatprep.subr.bf16.mxu0 0
        %1743 = vmatpush1.bf16.msra.mxu0 0
        %1744 = vmatprep.subr.bf16.mxu0 0
        %1745 = vmatpush1.bf16.msra.mxu0 0
        %1746 = vmatprep.mubr.bf16.mxu0 0
        %1747 = vmatmul.mubr.bf16.gmra.mrb[0].mxu0 %v1709
        %v1748 = vpop.f32.mrb[0].mxu0
        %v1749 = vadd.f32 0.0, %v1748
        %v1750 = vpop.f32.mrb[0].mxu0
        %v1751 = vpop.f32.mrb[0].mxu0
        %v1752 = vpop.f32.mrb[0].mxu0
        %1753 = vdwg.mxu0
        %v1754 = vrcp.pop %v1551
        %v1755 = vrcp.pop %v1554
        %v1756 = vrcp.pop %v1557
        %v1757 = vrcp.pop %v1560
        %v1758 = vmul.f32 %v1611, %v1754
        %v1759 = vmul.f32 %v1657, %v1755
        %v1760 = vmul.f32 %v1703, %v1756
        %v1761 = vmul.f32 %v1749, %v1757
        %v1762 = vcombine.low %v1758, %v1760
        %v1763 = vcombine.high %v1758, %v1760
        %v1765 = vunpack.c.l.s4 1983009808
        %v1766 = vunpack.c.0.s8 %v1765
        %v1767 = vlaneseq
        %v1768 = vshrl.u32 %v1767, 7
        %v1769 = vsub.s32 %v1766, %v1768
        %v1770 = vrot.slane %v1762, %v1769
        %v1772 = vunpack.c.l.s4 1983009808
        %v1773 = vunpack.c.0.s8 %v1772
        %v1774 = vlaneseq
        %v1775 = vshrl.u32 %v1774, 7
        %v1776 = vsub.s32 %v1773, %v1775
        %v1777 = vrot.slane %v1763, %v1776
        %v1778 = vcombine.low %v1759, %v1761
        %v1779 = vcombine.high %v1759, %v1761
        %v1781 = vunpack.c.l.s4 1983009808
        %v1782 = vunpack.c.0.s8 %v1781
        %v1783 = vlaneseq
        %v1784 = vshrl.u32 %v1783, 7
        %v1785 = vsub.s32 %v1782, %v1784
        %v1786 = vrot.slane %v1778, %v1785
        %v1788 = vunpack.c.l.s4 1983009808
        %v1789 = vunpack.c.0.s8 %v1788
        %v1790 = vlaneseq
        %v1791 = vshrl.u32 %v1790, 7
        %v1792 = vsub.s32 %v1789, %v1791
        %v1793 = vrot.slane %v1779, %v1792
        %v1794 = vcombine.low %v1770, %v1786
        %v1795 = vcombine.high %v1770, %v1786
        %v1797 = vunpack.c.l.s4 1934713408
        %v1798 = vunpack.c.0.s8 %v1797
        %v1799 = vlaneseq
        %v1800 = vshrl.u32 %v1799, 7
        %v1801 = vsub.s32 %v1798, %v1800
        %v1802 = vrot.slane %v1794, %v1801
        %v1804 = vunpack.c.l.s4 1934713408
        %v1805 = vunpack.c.0.s8 %v1804
        %v1806 = vlaneseq
        %v1807 = vshrl.u32 %v1806, 7
        %v1808 = vsub.s32 %v1805, %v1807
        %v1809 = vrot.slane %v1795, %v1808
        %v1810 = vcombine.low %v1777, %v1793
        %v1811 = vcombine.high %v1777, %v1793
        %v1813 = vunpack.c.l.s4 1934713408
        %v1814 = vunpack.c.0.s8 %v1813
        %v1815 = vlaneseq
        %v1816 = vshrl.u32 %v1815, 7
        %v1817 = vsub.s32 %v1814, %v1816
        %v1818 = vrot.slane %v1810, %v1817
        %v1820 = vunpack.c.l.s4 1934713408
        %v1821 = vunpack.c.0.s8 %v1820
        %v1822 = vlaneseq
        %v1823 = vshrl.u32 %v1822, 7
        %v1824 = vsub.s32 %v1821, %v1823
        %v1825 = vrot.slane %v1811, %v1824
        %v1826 = vcombine.high %v1802, 0.0
        %v1827 = vcombine.high %v1809, 0.0
        %v1828 = vcombine.high %v1818, 0.0
        %v1829 = vcombine.high %v1825, 0.0
        %v1830 = vcombine.low %v1802, %v1809
        %v1832 = vunpack.c.l.s4 1983009808
        %v1833 = vunpack.c.0.s8 %v1832
        %v1834 = vlaneseq
        %v1835 = vshrl.u32 %v1834, 7
        %v1836 = vsub.s32 %v1833, %v1835
        %v1837 = vrot.slane %v1830, %v1836
        %v1838 = vcombine.low %v1826, %v1827
        %v1840 = vunpack.c.l.s4 1983009808
        %v1841 = vunpack.c.0.s8 %v1840
        %v1842 = vlaneseq
        %v1843 = vshrl.u32 %v1842, 7
        %v1844 = vsub.s32 %v1841, %v1843
        %v1845 = vrot.slane %v1838, %v1844
        %v1846 = vcombine.low %v1818, %v1825
        %v1848 = vunpack.c.l.s4 1983009808
        %v1849 = vunpack.c.0.s8 %v1848
        %v1850 = vlaneseq
        %v1851 = vshrl.u32 %v1850, 7
        %v1852 = vsub.s32 %v1849, %v1851
        %v1853 = vrot.slane %v1846, %v1852
        %v1854 = vcombine.low %v1828, %v1829
        %v1856 = vunpack.c.l.s4 1983009808
        %v1857 = vunpack.c.0.s8 %v1856
        %v1858 = vlaneseq
        %v1859 = vshrl.u32 %v1858, 7
        %v1860 = vsub.s32 %v1857, %v1859
        %v1861 = vrot.slane %v1854, %v1860
        %v1862 = vcombine.low %v1837, %v1845
        %v1863 = vcombine.high %v1837, %v1845
        %v1865 = vunpack.c.l.s4 1934713408
        %v1866 = vunpack.c.0.s8 %v1865
        %v1867 = vlaneseq
        %v1868 = vshrl.u32 %v1867, 7
        %v1869 = vsub.s32 %v1866, %v1868
        %v1870 = vrot.slane %v1862, %v1869
        %v1872 = vunpack.c.l.s4 1934713408
        %v1873 = vunpack.c.0.s8 %v1872
        %v1874 = vlaneseq
        %v1875 = vshrl.u32 %v1874, 7
        %v1876 = vsub.s32 %v1873, %v1875
        %v1877 = vrot.slane %v1863, %v1876
        %v1878 = vcombine.low %v1853, %v1861
        %v1879 = vcombine.high %v1853, %v1861
        %v1881 = vunpack.c.l.s4 1934713408
        %v1882 = vunpack.c.0.s8 %v1881
        %v1883 = vlaneseq
        %v1884 = vshrl.u32 %v1883, 7
        %v1885 = vsub.s32 %v1882, %v1884
        %v1886 = vrot.slane %v1878, %v1885
        %v1888 = vunpack.c.l.s4 1934713408
        %v1889 = vunpack.c.0.s8 %v1888
        %v1890 = vlaneseq
        %v1891 = vshrl.u32 %v1890, 7
        %v1892 = vsub.s32 %v1889, %v1891
        %v1893 = vrot.slane %v1879, %v1892
        %v1894 = vcombine.low %v1870, %v1886
        %v1895 = vcombine.high %v1870, %v1886
        %v1896 = vcombine.low %v1877, %v1893
        %v1897 = vcombine.high %v1877, %v1893
        %1899 = vrot.lane.b32.xlu0 %v1895, 8
        %v1900 = vpop.permute.xlu0 %1899
        %1903 = vrot.lane.b32.xlu0 %v1896, 16
        %v1904 = vpop.permute.xlu0 %1903
        %1907 = vrot.lane.b32.xlu0 %v1897, 24
        %v1908 = vpop.permute.xlu0 %1907
        %v1910 = vsel %vm1340, %v1894, %v1900
        %vm1911 = vcmask 130048
        %v1912 = vsel %vm1911, %v1910, %v1904
        %vm1913 = vcmask 195584
        %v1914 = vsel %vm1913, %v1912, %v1908
        %v1915 = vpack.c.bf16 %v1914, %v1914
        %v1916 = vld [vmem:[#allocation15] sm:$0xf]
        %v1917 = vld [vmem:[#allocation15 + $0x4] sm:$0xf]
        %v1918 = vld [vmem:[#allocation15 + $0x8] sm:$0xf]
        %v1919 = vld [vmem:[#allocation15 + $0xc] sm:$0xf]
        %v1920 = vld [vmem:[%s7] sm:$0x1]
        %v1922 = vlaneseq
        %v1923 = vshrl.u32 %v1922, 7
        %v1924 = vsub.s32 0, %v1923
        %v1925 = vrot.slane %v1920, %v1924
        %v1931 = vunpack.c.l.b16 %v1916
        %v1932 = vunpack.c.l.b16 %v1917
        %v1933 = vunpack.c.l.b16 %v1918
        %v1934 = vunpack.c.l.b16 %v1919
        %v1935 = vpack.c.b16 %v1932, %v1931
        %v1936 = vpack.c.b16 %v1934, %v1933
        %v1940 = vsel %vm1090, %v1915, 0
        %1942 = vmatprep.subr.bf16.mxu0 0
        %1943 = vmatpush1.bf16.msra.mxu0 %v1935
        %1944 = vmatprep.subr.bf16.mxu0 0
        %1945 = vmatpush1.bf16.msra.mxu0 %v1936
        %1946 = vmatprep.subr.bf16.mxu0 0
        %1947 = vmatpush1.bf16.msra.mxu0 0
        %1948 = vmatprep.subr.bf16.mxu0 0
        %1949 = vmatpush1.bf16.msra.mxu0 0
        %1950 = vmatprep.subr.bf16.mxu0 0
        %1951 = vmatpush1.bf16.msra.mxu0 0
        %1952 = vmatprep.subr.bf16.mxu0 0
        %1953 = vmatpush1.bf16.msra.mxu0 0
        %1954 = vmatprep.subr.bf16.mxu0 0
        %1955 = vmatpush1.bf16.msra.mxu0 0
        %1956 = vmatprep.subr.bf16.mxu0 0
        %1957 = vmatpush1.bf16.msra.mxu0 0
        %1958 = vmatprep.subr.bf16.mxu0 0
        %1959 = vmatpush1.bf16.msra.mxu0 0
        %1960 = vmatprep.subr.bf16.mxu0 0
        %1961 = vmatpush1.bf16.msra.mxu0 0
        %1962 = vmatprep.subr.bf16.mxu0 0
        %1963 = vmatpush1.bf16.msra.mxu0 0
        %1964 = vmatprep.subr.bf16.mxu0 0
        %1965 = vmatpush1.bf16.msra.mxu0 0
        %1966 = vmatprep.subr.bf16.mxu0 0
        %1967 = vmatpush1.bf16.msra.mxu0 0
        %1968 = vmatprep.subr.bf16.mxu0 0
        %1969 = vmatpush1.bf16.msra.mxu0 0
        %1970 = vmatprep.subr.bf16.mxu0 0
        %1971 = vmatpush1.bf16.msra.mxu0 0
        %1972 = vmatprep.subr.bf16.mxu0 0
        %1973 = vmatpush1.bf16.msra.mxu0 0
        %1974 = vmatprep.mubr.bf16.mxu0 0
        %1975 = vmatmul.mubr.bf16.gmra.mrb[0].mxu0 %v1940
        %v1976 = vpop.f32.mrb[0].mxu0
        %v1977 = vadd.f32 %v1925, %v1976
        %v1978 = vpop.f32.mrb[0].mxu0
        %v1979 = vpop.f32.mrb[0].mxu0
        %v1980 = vpop.f32.mrb[0].mxu0
        %1981 = vdwg.mxu0
        %v1982 = vadd.f32 %v1118, %v1977
        %v1983 = vld [vmem:[%s10] sm:$0x1]
        %v1984 = vld [vmem:[%s11] sm:$0x1]
        %v1985 = vsel %vm1090, %v1982, 0.0
        %1986 = vadd.xlane.f32.xlu0 %v1985
        %v1987 = vpop.xlane.xlu0 %1986
        %v1988 = vmul.f32 %v1987, %v1094
        %v1989 = vsub.f32 %v1982, %v1988
        %v1990 = vmul.f32 %v1989, %v1989
        %v1991 = vsel %vm1090, %v1990, 0.0
        %1992 = vadd.xlane.f32.xlu0 %v1991
        %v1993 = vpop.xlane.xlu0 %1992
        %v1994 = vmul.f32 %v1993, %v1094
        %v1995 = vadd.f32 %v1994, 1e-05
        %v1996 = vrsqrt.pop %v1995
        %v1997 = vmul.f32 %v1989, %v1996
        %v1999 = vlaneseq
        %v2000 = vshrl.u32 %v1999, 7
        %v2001 = vsub.s32 0, %v2000
        %v2002 = vrot.slane %v1983, %v2001
        %v2004 = vmul.f32 %v1997, %v2002
        %v2006 = vlaneseq
        %v2007 = vshrl.u32 %v2006, 7
        %v2008 = vsub.s32 0, %v2007
        %v2009 = vrot.slane %v1984, %v2008
        %v2011 = vadd.f32 %v2004, %v2009
        %v2012 = vpack.c.bf16 %v2011, %v2011
        %v2013 = vld [vmem:[#allocation16] sm:$0xf]
        %v2014 = vld [vmem:[#allocation16 + $0x4] sm:$0xf]
        %v2015 = vld [vmem:[#allocation16 + $0x8] sm:$0xf]
        %v2016 = vld [vmem:[#allocation16 + $0xc] sm:$0xf]
        %v2017 = vld [vmem:[%s13] sm:$0x1]
        %v2019 = vlaneseq
        %v2020 = vshrl.u32 %v2019, 7
        %v2021 = vsub.s32 0, %v2020
        %v2022 = vrot.slane %v2017, %v2021
        %v2028 = vunpack.c.l.b16 %v2013
        %v2029 = vunpack.c.l.b16 %v2014
        %v2030 = vunpack.c.l.b16 %v2015
        %v2031 = vunpack.c.l.b16 %v2016
        %v2032 = vpack.c.b16 %v2029, %v2028
        %v2033 = vpack.c.b16 %v2031, %v2030
        %v2037 = vsel %vm1090, %v2012, 0
        %2039 = vmatprep.subr.bf16.mxu0 0
        %2040 = vmatpush1.bf16.msra.mxu0 %v2032
        %2041 = vmatprep.subr.bf16.mxu0 0
        %2042 = vmatpush1.bf16.msra.mxu0 %v2033
        %2043 = vmatprep.subr.bf16.mxu0 0
        %2044 = vmatpush1.bf16.msra.mxu0 0
        %2045 = vmatprep.subr.bf16.mxu0 0
        %2046 = vmatpush1.bf16.msra.mxu0 0
        %2047 = vmatprep.subr.bf16.mxu0 0
        %2048 = vmatpush1.bf16.msra.mxu0 0
        %2049 = vmatprep.subr.bf16.mxu0 0
        %2050 = vmatpush1.bf16.msra.mxu0 0
        %2051 = vmatprep.subr.bf16.mxu0 0
        %2052 = vmatpush1.bf16.msra.mxu0 0
        %2053 = vmatprep.subr.bf16.mxu0 0
        %2054 = vmatpush1.bf16.msra.mxu0 0
        %2055 = vmatprep.subr.bf16.mxu0 0
        %2056 = vmatpush1.bf16.msra.mxu0 0
        %2057 = vmatprep.subr.bf16.mxu0 0
        %2058 = vmatpush1.bf16.msra.mxu0 0
        %2059 = vmatprep.subr.bf16.mxu0 0
        %2060 = vmatpush1.bf16.msra.mxu0 0
        %2061 = vmatprep.subr.bf16.mxu0 0
        %2062 = vmatpush1.bf16.msra.mxu0 0
        %2063 = vmatprep.subr.bf16.mxu0 0
        %2064 = vmatpush1.bf16.msra.mxu0 0
        %2065 = vmatprep.subr.bf16.mxu0 0
        %2066 = vmatpush1.bf16.msra.mxu0 0
        %2067 = vmatprep.subr.bf16.mxu0 0
        %2068 = vmatpush1.bf16.msra.mxu0 0
        %2069 = vmatprep.subr.bf16.mxu0 0
        %2070 = vmatpush1.bf16.msra.mxu0 0
        %2071 = vmatprep.mubr.bf16.mxu0 0
        %2072 = vmatmul.mubr.bf16.gmra.mrb[0].mxu0 %v2037
        %v2073 = vpop.f32.mrb[0].mxu0
        %v2074 = vadd.f32 %v2022, %v2073
        %v2075 = vpop.f32.mrb[0].mxu0
        %v2076 = vpop.f32.mrb[0].mxu0
        %v2077 = vpop.f32.mrb[0].mxu0
        %2078 = vdwg.mxu0
        %v2079 = vmul.f32 %v2074, 0.5
        %v2080 = vmul.f32 %v2074, 0.70710677
        %v2081 = verf.f32.pop %v2080
        %v2082 = vadd.f32 %v2081, 1.0
        %v2083 = vmul.f32 %v2079, %v2082
        %v2084 = vpack.c.bf16 %v2083, %v2083
        %v2085 = vld [vmem:[%s14] sm:$0xf]
        %v2086 = vld [vmem:[%s14 + $0x4] sm:$0xf]
        %v2087 = vld [vmem:[%s14 + $0x8] sm:$0xf]
        %v2088 = vld [vmem:[%s14 + $0xc] sm:$0xf]
        %v2089 = vld [vmem:[%s14 + $0x10] sm:$0xf]
        %v2090 = vld [vmem:[%s14 + $0x14] sm:$0xf]
        %v2091 = vld [vmem:[%s14 + $0x18] sm:$0xf]
        %v2092 = vld [vmem:[%s14 + $0x1c] sm:$0xf]
        %v2093 = vld [vmem:[%s14 + $0x20] sm:$0xf]
        %v2094 = vld [vmem:[%s14 + $0x24] sm:$0xf]
        %v2095 = vld [vmem:[%s14 + $0x28] sm:$0xf]
        %v2096 = vld [vmem:[%s14 + $0x2c] sm:$0xf]
        %v2097 = vld [vmem:[%s14 + $0x30] sm:$0xf]
        %v2098 = vld [vmem:[%s14 + $0x34] sm:$0xf]
        %v2099 = vld [vmem:[%s14 + $0x38] sm:$0xf]
        %v2100 = vld [vmem:[%s14 + $0x3c] sm:$0xf]
        %v2101 = vld [vmem:[%s15] sm:$0x1]
        %v2103 = vlaneseq
        %v2104 = vshrl.u32 %v2103, 7
        %v2105 = vsub.s32 0, %v2104
        %v2106 = vrot.slane %v2101, %v2105
        %v2124 = vunpack.c.l.b16 %v2085
        %v2125 = vunpack.c.l.b16 %v2086
        %v2126 = vunpack.c.l.b16 %v2087
        %v2127 = vunpack.c.l.b16 %v2088
        %v2128 = vunpack.c.l.b16 %v2089
        %v2129 = vunpack.c.l.b16 %v2090
        %v2130 = vunpack.c.l.b16 %v2091
        %v2131 = vunpack.c.l.b16 %v2092
        %v2132 = vunpack.c.l.b16 %v2093
        %v2133 = vunpack.c.l.b16 %v2094
        %v2134 = vunpack.c.l.b16 %v2095
        %v2135 = vunpack.c.l.b16 %v2096
        %v2136 = vunpack.c.l.b16 %v2097
        %v2137 = vunpack.c.l.b16 %v2098
        %v2138 = vunpack.c.l.b16 %v2099
        %v2139 = vunpack.c.l.b16 %v2100
        %v2140 = vpack.c.b16 %v2125, %v2124
        %v2141 = vpack.c.b16 %v2127, %v2126
        %v2142 = vpack.c.b16 %v2129, %v2128
        %v2143 = vpack.c.b16 %v2131, %v2130
        %v2144 = vpack.c.b16 %v2133, %v2132
        %v2145 = vpack.c.b16 %v2135, %v2134
        %v2146 = vpack.c.b16 %v2137, %v2136
        %v2147 = vpack.c.b16 %v2139, %v2138
        %2156 = vmatprep.subr.bf16.mxu0 0
        %2157 = vmatpush1.bf16.msra.mxu0 %v2140
        %2158 = vmatprep.subr.bf16.mxu0 0
        %2159 = vmatpush1.bf16.msra.mxu0 %v2141
        %2160 = vmatprep.subr.bf16.mxu0 0
        %2161 = vmatpush1.bf16.msra.mxu0 %v2142
        %2162 = vmatprep.subr.bf16.mxu0 0
        %2163 = vmatpush1.bf16.msra.mxu0 %v2143
        %2164 = vmatprep.subr.bf16.mxu0 0
        %2165 = vmatpush1.bf16.msra.mxu0 %v2144
        %2166 = vmatprep.subr.bf16.mxu0 0
        %2167 = vmatpush1.bf16.msra.mxu0 %v2145
        %2168 = vmatprep.subr.bf16.mxu0 0
        %2169 = vmatpush1.bf16.msra.mxu0 %v2146
        %2170 = vmatprep.subr.bf16.mxu0 0
        %2171 = vmatpush1.bf16.msra.mxu0 %v2147
        %2172 = vmatprep.subr.bf16.mxu0 0
        %2173 = vmatpush1.bf16.msra.mxu0 0
        %2174 = vmatprep.subr.bf16.mxu0 0
        %2175 = vmatpush1.bf16.msra.mxu0 0
        %2176 = vmatprep.subr.bf16.mxu0 0
        %2177 = vmatpush1.bf16.msra.mxu0 0
        %2178 = vmatprep.subr.bf16.mxu0 0
        %2179 = vmatpush1.bf16.msra.mxu0 0
        %2180 = vmatprep.subr.bf16.mxu0 0
        %2181 = vmatpush1.bf16.msra.mxu0 0
        %2182 = vmatprep.subr.bf16.mxu0 0
        %2183 = vmatpush1.bf16.msra.mxu0 0
        %2184 = vmatprep.subr.bf16.mxu0 0
        %2185 = vmatpush1.bf16.msra.mxu0 0
        %2186 = vmatprep.subr.bf16.mxu0 0
        %2187 = vmatpush1.bf16.msra.mxu0 0
        %2188 = vmatprep.mubr.bf16.mxu0 0
        %2189 = vmatmul.mubr.bf16.gmra.mrb[0].mxu0 %v2084
        %v2190 = vpop.f32.mrb[0].mxu0
        %v2191 = vadd.f32 %v2106, %v2190
        %v2192 = vpop.f32.mrb[0].mxu0
        %v2193 = vpop.f32.mrb[0].mxu0
        %v2194 = vpop.f32.mrb[0].mxu0
        %2195 = vdwg.mxu0
        %v2196 = vadd.f32 %v1982, %v2191
        %2197 = vst.msk [vmem:[%s673] sm:$0xff] %vm1090, %v2196
        %s2198 = sand.u32 %s409, 1
        %s2199 = scalar_lea.sflag [#allocation6], %s2198
        %s2200 = sand.u32 %s409, 1
        %s2201 = smul.addr %s2200, 8
        %s2202 = scalar_lea.vmem [#allocation18], %s2201
        // Predicated region
        $region121: #{_lambda_.1} parent=83 // pred_check
          %p2203 = pneg %p419
        $region122: #{_lambda_.1} parent=83 // pred_check_branch
          %2205 = sbr.rel (%p2203) target = $region124
        $region123: #{_lambda_.1} parent=83 // pred_region
          %s2207 = ssub.s32 128, 128
          %2208 = vsyncadd %s2199, %s2207
          %s2209 = sadd.s32 %s44, %s43
          %s2210 = smul.addr %s2209, 128
          %s2211 = scalar_lea.hbm %s16, %s2210
          %s2213 = sshll.u32 %s2202, 4
          %s2214 = int_to_ptr.vmem [resolvable:$true] %s2213
          %2216 = dma.vmem_to_hbm [thread:$0]  %s2214, 128, %s2211, %s2199
        $region124: #{_lambda_.1} parent=83 // pred_fallthru
          _
      $region84: #{_lambda_.1} parent=5 // pred_fallthru
        _
      %p2217 = scmp.le.s32.totalorder 2, %s34
      // Predicated region
      $region125: #{_lambda_.1} parent=5 // pred_check
        %p2218 = pneg %p2217
      $region126: #{_lambda_.1} parent=5 // pred_check_branch
        %2220 = sbr.rel (%p2218) target = $region128
      $region127: #{_lambda_.1} parent=5 // pred_region
        %s2221 = ssub.s32 %s34, 2
        // Predicated region
        $region129: #{_lambda_.1} parent=127 // pred_check
          %p2222 = pneg %p425
        $region130: #{_lambda_.1} parent=127 // pred_check_branch
          %2224 = sbr.rel (%p2222) target = $region132
        $region131: #{_lambda_.1} parent=127 // pred_region
          %s2225 = sand.u32 %s410, 1
          %s2226 = scalar_lea.sflag [#allocation6], %s2225
          %s2227 = sand.u32 %s410, 1
          %s2228 = smul.addr %s2227, 8
          %s2229 = scalar_lea.vmem [#allocation18], %s2228
          %2230 = dma.done %s2226, 128
        $region132: #{_lambda_.1} parent=127 // pred_fallthru
          _
      $region128: #{_lambda_.1} parent=5 // pred_fallthru
        _
    $region6: #{_lambda_.1} parent=1 // loop_footer
      %s38 = sadd.s32 1, %s34
    $region7: #{_lambda_.1} parent=1 // loop_footer_branch
      %33 = sbr.rel target = $region3
    $region8: #{_lambda_.1} parent=1 // loop_exit
      _
    %2231 = vsyncpa [#allocation5], 1
    %s2232 = scalar_lea.sflag [#allocation5], 1
    %2233 = vsyncpa %s2232, 1
    %2234 = vsyncpa [#allocation8], 1
    %s2235 = scalar_lea.sflag [#allocation8], 1
    %2236 = vsyncpa %s2235, 1
    %2237 = vsyncpa [#allocation11], 1
    %2238 = vsyncpa [#allocation14], 1
    %2239 = vsyncpa [#allocation17], 1
    %2240 = vsyncpa [#allocation6], 1
    %s2241 = scalar_lea.sflag [#allocation6], 1
    %2242 = vsyncpa %s2241, 1

</llo_original>
